<compile_context>
chip_gen: v5e
topology: v5e:2x2
jax: 0.10.0
libtpu: 0.0.40
codegen_flags: <defaults>
</compile_context>

<pallas_src>
import functools

import jax
import jax.numpy as jnp
from jax import lax
from jax.experimental import pallas as pl
from jax.experimental.pallas import tpu as pltpu

_EPS = 1e-5


# ------------------------------ Pallas kernels -------------------------------

def _conv_in_relu_kernel(w_ref, p_ref, o_ref):
    # o = relu(InstanceNorm(W @ patches))           (per batch sample)
    y = jnp.dot(w_ref[...], p_ref[...], preferred_element_type=jnp.float32)
    mean = jnp.mean(y, axis=1, keepdims=True)
    d = y - mean
    var = jnp.mean(d * d, axis=1, keepdims=True)
    o_ref[...] = jnp.maximum(d * lax.rsqrt(var + _EPS), 0.0)


def _conv_in_relu_res_kernel(w_ref, p_ref, x_ref, o_ref):
    # o = x + relu(InstanceNorm(W @ patches))       (resnet block tail, fused)
    y = jnp.dot(w_ref[...], p_ref[...], preferred_element_type=jnp.float32)
    mean = jnp.mean(y, axis=1, keepdims=True)
    d = y - mean
    var = jnp.mean(d * d, axis=1, keepdims=True)
    o_ref[...] = x_ref[...] + jnp.maximum(d * lax.rsqrt(var + _EPS), 0.0)


def _deconv_in_relu_kernel(w_ref, p_ref, o_ref, *, cout):
    # Sub-pixel ConvTranspose2d (k=3,s=2,p=1,op=1) + InstanceNorm + ReLU.
    # Output rows are ordered (phase, cout); the IN statistics are taken over
    # all 4 phases x H*W, i.e. the full up-sampled spatial extent.
    y = jnp.dot(w_ref[...], p_ref[...], preferred_element_type=jnp.float32)
    ys = [y[i * cout:(i + 1) * cout, :] for i in range(4)]
    mean = jnp.mean(ys[0] + ys[1] + ys[2] + ys[3], axis=1, keepdims=True) * 0.25
    var = sum(jnp.mean(jnp.square(yp - mean), axis=1, keepdims=True)
              for yp in ys) * 0.25
    inv = lax.rsqrt(var + _EPS)
    for i in range(4):
        o_ref[i * cout:(i + 1) * cout, :] = jnp.maximum((ys[i] - mean) * inv, 0.0)


def _head_combine_kernel(wc_ref, bc_ref, wa_ref, ba_ref, pc_ref, xa_ref, inp_ref,
                         o_ref, outs_ref, att_ref, img_ref):
    # content 7x7 conv -> tanh; attention 1x1 conv -> softmax over channels;
    # emits o, the 10 weighted outputs, the repeated attention maps and image.
    img = jnp.tanh(
        jnp.dot(wc_ref[...], pc_ref[...], preferred_element_type=jnp.float32)
        + bc_ref[...])                                            # [27, HW]
    a = (jnp.dot(wa_ref[...], xa_ref[...], preferred_element_type=jnp.float32)
         + ba_ref[...])                                           # [10, HW]
    a = a - jnp.max(a, axis=0, keepdims=True)
    e = jnp.exp(a)
    attn = e / jnp.sum(e, axis=0, keepdims=True)                  # softmax
    hw = attn.shape[-1]

    o_acc = inp_ref[...] * attn[9:10, :]                          # output10
    outs_ref[9] = o_acc
    att_ref[9] = jnp.broadcast_to(attn[9:10, :], (3, hw))
    for i in range(9):
        a_i = attn[i:i + 1, :]
        prod = img[3 * i:3 * i + 3, :] * a_i
        outs_ref[i] = prod
        att_ref[i] = jnp.broadcast_to(a_i, (3, hw))
        o_acc = o_acc + prod
    o_ref[...] = o_acc
    img_ref[...] = img


# ------------------------------ layer wrappers --------------------------------

def _im2col(xp, kh, kw, stride):
    # xp: [N, Cin, Hp, Wp] (already padded) -> [N, Cin*kh*kw, OH*OW]
    n, c, hp, wp = xp.shape
    oh = (hp - kh) // stride + 1
    ow = (wp - kw) // stride + 1
    cols = [xp[:, :, i:i + stride * oh:stride, j:j + stride * ow:stride]
            for i in range(kh) for j in range(kw)]
    p = jnp.stack(cols, axis=2)                        # [N, Cin, kh*kw, OH, OW]
    return p.reshape(n, c * kh * kw, oh * ow), oh, ow


def _parallel_params():
    return pltpu.CompilerParams(dimension_semantics=("parallel",))


def conv_in_relu(x, w2d, kh, kw, *, stride=1, pad=0, reflect=False, residual=None):
    """Fused Conv2d + InstanceNorm + ReLU (+ residual) on NCHW input.

    w2d: [Cout, Cin*kh*kw] bf16.  Conv bias is dropped: it is exactly cancelled
    by the affine-free InstanceNorm that follows.
    """
    n = x.shape[0]
    cout, K = w2d.shape
    if pad:
        x = jnp.pad(x, ((0, 0), (0, 0), (pad, pad), (pad, pad)),
                    mode="reflect" if reflect else "constant")
    p, oh, ow = _im2col(x.astype(jnp.bfloat16), kh, kw, stride)
    M = oh * ow

    in_specs = [pl.BlockSpec((cout, K), lambda b: (0, 0)),
                pl.BlockSpec((None, K, M), lambda b: (b, 0, 0))]
    args = [w2d, p]
    if residual is None:
        kernel = _conv_in_relu_kernel
    else:
        kernel = _conv_in_relu_res_kernel
        in_specs.append(pl.BlockSpec((None, cout, M), lambda b: (b, 0, 0)))
        args.append(residual.reshape(n, cout, M))

    y = pl.pallas_call(
        kernel,
        grid=(n,),
        out_shape=jax.ShapeDtypeStruct((n, cout, M), jnp.float32),
        in_specs=in_specs,
        out_specs=pl.BlockSpec((None, cout, M), lambda b: (b, 0, 0)),
        compiler_params=_parallel_params(),
    )(*args)
    return y.reshape(n, cout, oh, ow)


def deconv_in_relu(x, w_sub):
    """Fused ConvTranspose2d(k=3,s=2,p=1,op=1) + InstanceNorm + ReLU
    in sub-pixel form.  w_sub: [4*Cout, 4*Cin], rows=(phase,cout), cols=(tap,cin).
    """
    n, cin, h, w = x.shape
    cout = w_sub.shape[0] // 4
    hw = h * w
    xp = jnp.pad(x.astype(jnp.bfloat16), ((0, 0), (0, 0), (0, 1), (0, 1)))
    taps = jnp.stack([xp[:, :, 0:h, 0:w], xp[:, :, 0:h, 1:w + 1],
                      xp[:, :, 1:h + 1, 0:w], xp[:, :, 1:h + 1, 1:w + 1]],
                     axis=1)                                 # [N, 4, Cin, H, W]
    p = taps.reshape(n, 4 * cin, hw)

    y = pl.pallas_call(
        functools.partial(_deconv_in_relu_kernel, cout=cout),
        grid=(n,),
        out_shape=jax.ShapeDtypeStruct((n, 4 * cout, hw), jnp.float32),
        in_specs=[pl.BlockSpec((4 * cout, 4 * cin), lambda b: (0, 0)),
                  pl.BlockSpec((None, 4 * cin, hw), lambda b: (b, 0, 0))],
        out_specs=pl.BlockSpec((None, 4 * cout, hw), lambda b: (b, 0, 0)),
        compiler_params=_parallel_params(),
    )(w_sub, p)

    # de-interleave the 4 sub-pixel phases: [N, 4*Cout, H*W] -> [N, Cout, 2H, 2W]
    y = y.reshape(n, 2, 2, cout, h, w).transpose(0, 3, 4, 1, 5, 2)
    return y.reshape(n, cout, 2 * h, 2 * w)


def head_combine(xc, xa, wc, bc, wa, ba, inp):
    """Fused content head (7x7 conv + tanh) + attention head (1x1 conv +
    softmax) + attention-weighted combination; returns the full output tuple."""
    n, ca, H, W = xa.shape
    hw = H * W
    xcp = jnp.pad(xc, ((0, 0), (0, 0), (3, 3), (3, 3)), mode="reflect")
    pc, _, _ = _im2col(xcp.astype(jnp.bfloat16), 7, 7, 1)    # [N, Cc*49, HW]
    Kc = pc.shape[1]
    xaf = xa.reshape(n, ca, hw).astype(jnp.bfloat16)
    inpf = inp.reshape(n, 3, hw)

    o, outs, att3, img = pl.pallas_call(
        _head_combine_kernel,
        grid=(n,),
        out_shape=(jax.ShapeDtypeStruct((n, 3, hw), jnp.float32),
                   jax.ShapeDtypeStruct((n, 10, 3, hw), jnp.float32),
                   jax.ShapeDtypeStruct((n, 10, 3, hw), jnp.float32),
                   jax.ShapeDtypeStruct((n, 27, hw), jnp.float32)),
        in_specs=[pl.BlockSpec((27, Kc), lambda b: (0, 0)),
                  pl.BlockSpec((27, 1), lambda b: (0, 0)),
                  pl.BlockSpec((10, ca), lambda b: (0, 0)),
                  pl.BlockSpec((10, 1), lambda b: (0, 0)),
                  pl.BlockSpec((None, Kc, hw), lambda b: (b, 0, 0)),
                  pl.BlockSpec((None, ca, hw), lambda b: (b, 0, 0)),
                  pl.BlockSpec((None, 3, hw), lambda b: (b, 0, 0))],
        out_specs=(pl.BlockSpec((None, 3, hw), lambda b: (b, 0, 0)),
                   pl.BlockSpec((None, 10, 3, hw), lambda b: (b, 0, 0, 0)),
                   pl.BlockSpec((None, 10, 3, hw), lambda b: (b, 0, 0, 0)),
                   pl.BlockSpec((None, 27, hw), lambda b: (b, 0, 0))),
        compiler_params=_parallel_params(),
    )(wc, bc, wa, ba, pc, xaf, inpf)

    o = o.reshape(n, 3, H, W)
    outs = outs.reshape(n, 10, 3, H, W)
    att3 = att3.reshape(n, 10, 3, H, W)
    img = img.reshape(n, 27, H, W)
    outputs = [outs[:, i] for i in range(10)]                # output1..output10
    attns = [att3[:, i] for i in range(10)]                  # attention1..10 (x3)
    images = [img[:, 3 * i:3 * i + 3] for i in range(9)]     # image1..image9
    return tuple([o] + outputs + attns + images)


# ------------------------------ parameters ------------------------------------

def init_params(key, input_nc=3, ngf=8, n_blocks=2):
    keys = iter(jax.random.split(key, 32))

    def conv_p(cout, cin, k):
        w = 0.02 * jax.random.normal(next(keys), (cout, cin, k, k), jnp.float32)
        return w, jnp.zeros((cout,), jnp.float32)

    def deconv_p(cin, cout, k):
        w = 0.02 * jax.random.normal(next(keys), (cin, cout, k, k), jnp.float32)
        return w, jnp.zeros((cout,), jnp.float32)

    return {
        "conv1": conv_p(ngf, input_nc, 7),
        "conv2": conv_p(ngf * 2, ngf, 3),
        "conv3": conv_p(ngf * 4, ngf * 2, 3),
        "resnet": [{"conv1": conv_p(ngf * 4, ngf * 4, 3),
                    "conv2": conv_p(ngf * 4, ngf * 4, 3)}
                   for _ in range(n_blocks)],
        "deconv1_content": deconv_p(ngf * 4, ngf * 2, 3),
        "deconv2_content": deconv_p(ngf * 2, ngf, 3),
        "deconv3_content": conv_p(27, ngf, 7),
        "deconv1_attention": deconv_p(ngf * 4, ngf * 2, 3),
        "deconv2_attention": deconv_p(ngf * 2, ngf, 3),
        "deconv3_attention": conv_p(10, ngf, 1),
    }


def _subpixel_weight(w_t):
    """ConvTranspose2d(k=3,s=2,p=1,op=1) weight [Cin, Cout, 3, 3] -> sub-pixel
    tap matrix [4(phase), Cout, 4(tap), Cin].

    taps:   0=x[m,n]  1=x[m,n+1]  2=x[m+1,n]  3=x[m+1,n+1]
    phases: 0=(even,even) 1=(even,odd) 2=(odd,even) 3=(odd,odd) output pixels.
    """
    wt = jnp.transpose(w_t, (1, 0, 2, 3))              # [Cout, Cin, ky, kx]
    cout, cin = wt.shape[0], wt.shape[1]
    S = jnp.zeros((4, cout, 4, cin), jnp.float32)
    S = S.at[0, :, 0, :].set(wt[:, :, 1, 1])
    S = S.at[1, :, 0, :].set(wt[:, :, 1, 2])
    S = S.at[1, :, 1, :].set(wt[:, :, 1, 0])
    S = S.at[2, :, 0, :].set(wt[:, :, 2, 1])
    S = S.at[2, :, 2, :].set(wt[:, :, 0, 1])
    S = S.at[3, :, 0, :].set(wt[:, :, 2, 2])
    S = S.at[3, :, 1, :].set(wt[:, :, 2, 0])
    S = S.at[3, :, 2, :].set(wt[:, :, 0, 2])
    S = S.at[3, :, 3, :].set(wt[:, :, 0, 0])
    return S


def prepare_params(params):
    """One-time weight prep: flatten convs to [Cout, K] bf16, build merged
    sub-pixel deconv matrices, keep only the head biases (all other biases feed
    an affine-free InstanceNorm and are exactly cancelled)."""
    bf = jnp.bfloat16
    flat = lambda w: w.reshape(w.shape[0], -1).astype(bf)

    # deconv1: both branches consume the same input -> concatenate over Cout.
    s1 = jnp.concatenate([_subpixel_weight(params["deconv1_content"][0]),
                          _subpixel_weight(params["deconv1_attention"][0])],
                         axis=1)                                   # [4, 2C, 4, Cin]
    w_deconv1 = s1.reshape(s1.shape[0] * s1.shape[1], -1).astype(bf)

    # deconv2: different inputs -> block-diagonal merge over (cout, cin).
    s2c = _subpixel_weight(params["deconv2_content"][0])
    s2a = _subpixel_weight(params["deconv2_attention"][0])
    co, ci = s2c.shape[1], s2c.shape[3]
    s2 = jnp.zeros((4, 2 * co, 4, 2 * ci), jnp.float32)
    s2 = s2.at[:, :co, :, :ci].set(s2c)
    s2 = s2.at[:, co:, :, ci:].set(s2a)
    w_deconv2 = s2.reshape(4 * 2 * co, -1).astype(bf)

    return {
        "conv1": flat(params["conv1"][0]),
        "conv2": flat(params["conv2"][0]),
        "conv3": flat(params["conv3"][0]),
        "resnet": [(flat(b["conv1"][0]), flat(b["conv2"][0]))
                   for b in params["resnet"]],
        "deconv1": w_deconv1,
        "deconv2": w_deconv2,
        "head_wc": flat(params["deconv3_content"][0]),
        "head_bc": params["deconv3_content"][1].reshape(-1, 1),
        "head_wa": flat(params["deconv3_attention"][0]),
        "head_ba": params["deconv3_attention"][1].reshape(-1, 1),
    }


# ------------------------------ forward ----------------------------------------

def forward(prepped, inp):
    # encoder
    x = conv_in_relu(inp, prepped["conv1"], 7, 7, stride=1, pad=3, reflect=True)
    x = conv_in_relu(x, prepped["conv2"], 3, 3, stride=2, pad=1)
    x = conv_in_relu(x, prepped["conv3"], 3, 3, stride=2, pad=1)

    # resnet blocks: x = x + relu(IN(conv2(relu(IN(conv1(reflect_pad(x)))))))
    for w1, w2 in prepped["resnet"]:
        h = conv_in_relu(x, w1, 3, 3, stride=1, pad=1, reflect=True)
        x = conv_in_relu(h, w2, 3, 3, stride=1, pad=1, reflect=True, residual=x)

    # merged content+attention decoders (sub-pixel transpose convs)
    y = deconv_in_relu(x, prepped["deconv1"])      # [N, 2*ngf*2, 2H, 2W]  (content | attention)
    y = deconv_in_relu(y, prepped["deconv2"])      # [N, 2*ngf,   4H, 4W]  (content | attention)
    c_half = y.shape[1] // 2

    return head_combine(y[:, :c_half], y[:, c_half:],
                        prepped["head_wc"], prepped["head_bc"],
                        prepped["head_wa"], prepped["head_ba"], inp)


# ------------------------------ main --------------------------------------------

if __name__ == "__main__":
    key = jax.random.PRNGKey(0)
    pkey, xkey = jax.random.split(key)

    input_nc, ngf, n_blocks = 3, 8, 2
    params = init_params(pkey, input_nc=input_nc, ngf=ngf, n_blocks=n_blocks)
    prepped = prepare_params(params)

    x = jax.random.normal(xkey, (2, input_nc, 16, 16), jnp.float32)

    fwd = jax.jit(forward)
    outs = jax.block_until_ready(fwd(prepped, x))

    assert len(outs) == 30
    assert outs[0].shape == (2, 3, 16, 16)                  # o
    assert outs[10].shape == (2, 3, 16, 16)                 # output10
    assert outs[11].shape == (2, 3, 16, 16)                 # attention1 (repeated x3)
    assert outs[21].shape == (2, 3, 16, 16)                 # image1
    # the 10 attention maps are a softmax over channels -> must sum to 1
    att_sum = sum(outs[11 + i][:, 0:1] for i in range(10))
    assert jnp.allclose(att_sum, jnp.ones_like(att_sum), atol=1e-4)
    # o must equal the sum of the 10 weighted outputs
    o_sum = sum(outs[1 + i] for i in range(10))
    assert jnp.allclose(outs[0], o_sum, atol=1e-4)

    print("KERNEL_OK")
</pallas_src>

<mosaic_0001>
module attributes {stable_mosaic.version = 11 : i64} {
  func.func @_conv_in_relu_kernel(%arg0: i32, %arg1: memref<8x147xbf16, #tpu.memory_space<vmem>>, %arg2: memref<1x147x256xbf16, #tpu.memory_space<vmem>>, %arg3: memref<1x8x256xf32, #tpu.memory_space<vmem>>) attributes {dimension_semantics = [#tpu.dimension_semantics<parallel>], iteration_bounds = array<i64: 2>, scalar_prefetch = 0 : i64, scratch_operands = 0 : i64, tpu.core_type = #tpu.core_type<tc>, window_params = [{pipeline_mode = #tpu.pipeline_mode<synchronous>, transform_indices = @transform_0, window_bounds = array<i64: 8, 147>}, {transform_indices = @transform_1, window_bounds = array<i64: 1, 147, 256>}, {transform_indices = @transform_2, window_bounds = array<i64: 1, 8, 256>}]} {
    %c0 = arith.constant 0 : index
    %c0_0 = arith.constant 0 : index
    %0 = vector.load %arg1[%c0, %c0_0] : memref<8x147xbf16, #tpu.memory_space<vmem>>, vector<8x147xbf16>
    %c0_1 = arith.constant 0 : index
    %c0_2 = arith.constant 0 : index
    %c0_3 = arith.constant 0 : index
    %1 = vector.load %arg2[%c0_1, %c0_2, %c0_3] : memref<1x147x256xbf16, #tpu.memory_space<vmem>>, vector<1x147x256xbf16>
    %2 = vector.shape_cast %1 : vector<1x147x256xbf16> to vector<147x256xbf16>
    %cst = arith.constant dense<0.000000e+00> : vector<8x256xf32>
    %3 = tpu.matmul %0, %2, %cst {dimension_numbers = #tpu.dot_dimension_numbers<[1], [0], [0], [1], [0, 0, 1, 1], [], []>} : vector<8x147xbf16>, vector<147x256xbf16>, vector<8x256xf32> -> vector<8x256xf32>
    %cst_4 = arith.constant dense<0.000000e+00> : vector<8xf32>
    %4 = vector.multi_reduction <add>, %3, %cst_4 [1] : vector<8x256xf32> to vector<8xf32>
    %5 = vector.shape_cast %4 : vector<8xf32> to vector<8x1xf32>
    %cst_5 = arith.constant 2.560000e+02 : f32
    %6 = vector.broadcast %cst_5 : f32 to vector<8x1xf32>
    %7 = arith.divf %5, %6 : vector<8x1xf32>
    %8 = vector.broadcast %7 : vector<8x1xf32> to vector<8x256xf32>
    %9 = arith.subf %3, %8 : vector<8x256xf32>
    %10 = arith.mulf %9, %9 : vector<8x256xf32>
    %cst_6 = arith.constant dense<0.000000e+00> : vector<8xf32>
    %11 = vector.multi_reduction <add>, %10, %cst_6 [1] : vector<8x256xf32> to vector<8xf32>
    %12 = vector.shape_cast %11 : vector<8xf32> to vector<8x1xf32>
    %cst_7 = arith.constant 2.560000e+02 : f32
    %13 = vector.broadcast %cst_7 : f32 to vector<8x1xf32>
    %14 = arith.divf %12, %13 : vector<8x1xf32>
    %cst_8 = arith.constant 9.99999974E-6 : f32
    %15 = vector.broadcast %cst_8 : f32 to vector<8x1xf32>
    %16 = arith.addf %14, %15 : vector<8x1xf32>
    %17 = math.rsqrt %16 : vector<8x1xf32>
    %18 = vector.broadcast %17 : vector<8x1xf32> to vector<8x256xf32>
    %19 = arith.mulf %9, %18 : vector<8x256xf32>
    %cst_9 = arith.constant 0.000000e+00 : f32
    %20 = vector.broadcast %cst_9 : f32 to vector<8x256xf32>
    %21 = arith.maximumf %19, %20 : vector<8x256xf32>
    %c0_10 = arith.constant 0 : index
    %c0_11 = arith.constant 0 : index
    %c0_12 = arith.constant 0 : index
    %22 = vector.load %arg3[%c0_10, %c0_11, %c0_12] : memref<1x8x256xf32, #tpu.memory_space<vmem>>, vector<1x8x256xf32>
    %23 = vector.shape_cast %22 : vector<1x8x256xf32> to vector<8x256xf32>
    %24 = vector.shape_cast %21 : vector<8x256xf32> to vector<1x8x256xf32>
    tpu.vector_store %arg3[%c0_10, %c0_11, %c0_12], %24 {strides = array<i32>} : memref<1x8x256xf32, #tpu.memory_space<vmem>>, vector<1x8x256xf32>,
    return
  }
  func.func @transform_0(%arg0: i32) -> (i32, i32) {
    %c0_i32 = arith.constant 0 : i32
    %c0_i32_0 = arith.constant 0 : i32
    %c0_i32_1 = arith.constant 0 : i32
    return %c0_i32, %c0_i32_0 : i32, i32
  }
  func.func @transform_1(%arg0: i32) -> (i32, i32, i32) {
    %c0_i32 = arith.constant 0 : i32
    %c0_i32_0 = arith.constant 0 : i32
    %c0_i32_1 = arith.constant 0 : i32
    return %arg0, %c0_i32, %c0_i32_0 : i32, i32, i32
  }
  func.func @transform_2(%arg0: i32) -> (i32, i32, i32) {
    %c0_i32 = arith.constant 0 : i32
    %c0_i32_0 = arith.constant 0 : i32
    %c0_i32_1 = arith.constant 0 : i32
    return %arg0, %c0_i32, %c0_i32_0 : i32, i32, i32
  }
}

module attributes {stable_mosaic.version = 11 : i64} {
  func.func @_conv_in_relu_kernel(%arg0: i32, %arg1: memref<16x72xbf16, #tpu.memory_space<vmem>>, %arg2: memref<1x72x64xbf16, #tpu.memory_space<vmem>>, %arg3: memref<1x16x64xf32, #tpu.memory_space<vmem>>) attributes {dimension_semantics = [#tpu.dimension_semantics<parallel>], iteration_bounds = array<i64: 2>, scalar_prefetch = 0 : i64, scratch_operands = 0 : i64, tpu.core_type = #tpu.core_type<tc>, window_params = [{pipeline_mode = #tpu.pipeline_mode<synchronous>, transform_indices = @transform_0, window_bounds = array<i64: 16, 72>}, {transform_indices = @transform_1, window_bounds = array<i64: 1, 72, 64>}, {transform_indices = @transform_2, window_bounds = array<i64: 1, 16, 64>}]} {
    %c0 = arith.constant 0 : index
    %c0_0 = arith.constant 0 : index
    %0 = vector.load %arg1[%c0, %c0_0] : memref<16x72xbf16, #tpu.memory_space<vmem>>, vector<16x72xbf16>
    %c0_1 = arith.constant 0 : index
    %c0_2 = arith.constant 0 : index
    %c0_3 = arith.constant 0 : index
    %1 = vector.load %arg2[%c0_1, %c0_2, %c0_3] : memref<1x72x64xbf16, #tpu.memory_space<vmem>>, vector<1x72x64xbf16>
    %2 = vector.shape_cast %1 : vector<1x72x64xbf16> to vector<72x64xbf16>
    %cst = arith.constant dense<0.000000e+00> : vector<16x64xf32>
    %3 = tpu.matmul %0, %2, %cst {dimension_numbers = #tpu.dot_dimension_numbers<[1], [0], [0], [1], [0, 0, 1, 1], [], []>} : vector<16x72xbf16>, vector<72x64xbf16>, vector<16x64xf32> -> vector<16x64xf32>
    %cst_4 = arith.constant dense<0.000000e+00> : vector<16xf32>
    %4 = vector.multi_reduction <add>, %3, %cst_4 [1] : vector<16x64xf32> to vector<16xf32>
    %5 = vector.shape_cast %4 : vector<16xf32> to vector<16x1xf32>
    %cst_5 = arith.constant 6.400000e+01 : f32
    %6 = vector.broadcast %cst_5 : f32 to vector<16x1xf32>
    %7 = arith.divf %5, %6 : vector<16x1xf32>
    %8 = vector.broadcast %7 : vector<16x1xf32> to vector<16x64xf32>
    %9 = arith.subf %3, %8 : vector<16x64xf32>
    %10 = arith.mulf %9, %9 : vector<16x64xf32>
    %cst_6 = arith.constant dense<0.000000e+00> : vector<16xf32>
    %11 = vector.multi_reduction <add>, %10, %cst_6 [1] : vector<16x64xf32> to vector<16xf32>
    %12 = vector.shape_cast %11 : vector<16xf32> to vector<16x1xf32>
    %cst_7 = arith.constant 6.400000e+01 : f32
    %13 = vector.broadcast %cst_7 : f32 to vector<16x1xf32>
    %14 = arith.divf %12, %13 : vector<16x1xf32>
    %cst_8 = arith.constant 9.99999974E-6 : f32
    %15 = vector.broadcast %cst_8 : f32 to vector<16x1xf32>
    %16 = arith.addf %14, %15 : vector<16x1xf32>
    %17 = math.rsqrt %16 : vector<16x1xf32>
    %18 = vector.broadcast %17 : vector<16x1xf32> to vector<16x64xf32>
    %19 = arith.mulf %9, %18 : vector<16x64xf32>
    %cst_9 = arith.constant 0.000000e+00 : f32
    %20 = vector.broadcast %cst_9 : f32 to vector<16x64xf32>
    %21 = arith.maximumf %19, %20 : vector<16x64xf32>
    %c0_10 = arith.constant 0 : index
    %c0_11 = arith.constant 0 : index
    %c0_12 = arith.constant 0 : index
    %22 = vector.load %arg3[%c0_10, %c0_11, %c0_12] : memref<1x16x64xf32, #tpu.memory_space<vmem>>, vector<1x16x64xf32>
    %23 = vector.shape_cast %22 : vector<1x16x64xf32> to vector<16x64xf32>
    %24 = vector.shape_cast %21 : vector<16x64xf32> to vector<1x16x64xf32>
    tpu.vector_store %arg3[%c0_10, %c0_11, %c0_12], %24 {strides = array<i32>} : memref<1x16x64xf32, #tpu.memory_space<vmem>>, vector<1x16x64xf32>,
    return
  }
  func.func @transform_0(%arg0: i32) -> (i32, i32) {
    %c0_i32 = arith.constant 0 : i32
    %c0_i32_0 = arith.constant 0 : i32
    %c0_i32_1 = arith.constant 0 : i32
    return %c0_i32, %c0_i32_0 : i32, i32
  }
  func.func @transform_1(%arg0: i32) -> (i32, i32, i32) {
    %c0_i32 = arith.constant 0 : i32
    %c0_i32_0 = arith.constant 0 : i32
    %c0_i32_1 = arith.constant 0 : i32
    return %arg0, %c0_i32, %c0_i32_0 : i32, i32, i32
  }
  func.func @transform_2(%arg0: i32) -> (i32, i32, i32) {
    %c0_i32 = arith.constant 0 : i32
    %c0_i32_0 = arith.constant 0 : i32
    %c0_i32_1 = arith.constant 0 : i32
    return %arg0, %c0_i32, %c0_i32_0 : i32, i32, i32
  }
}

module attributes {stable_mosaic.version = 11 : i64} {
  func.func @_conv_in_relu_kernel(%arg0: i32, %arg1: memref<32x144xbf16, #tpu.memory_space<vmem>>, %arg2: memref<1x144x16xbf16, #tpu.memory_space<vmem>>, %arg3: memref<1x32x16xf32, #tpu.memory_space<vmem>>) attributes {dimension_semantics = [#tpu.dimension_semantics<parallel>], iteration_bounds = array<i64: 2>, scalar_prefetch = 0 : i64, scratch_operands = 0 : i64, tpu.core_type = #tpu.core_type<tc>, window_params = [{pipeline_mode = #tpu.pipeline_mode<synchronous>, transform_indices = @transform_0, window_bounds = array<i64: 32, 144>}, {transform_indices = @transform_1, window_bounds = array<i64: 1, 144, 16>}, {transform_indices = @transform_2, window_bounds = array<i64: 1, 32, 16>}]} {
    %c0 = arith.constant 0 : index
    %c0_0 = arith.constant 0 : index
    %0 = vector.load %arg1[%c0, %c0_0] : memref<32x144xbf16, #tpu.memory_space<vmem>>, vector<32x144xbf16>
    %c0_1 = arith.constant 0 : index
    %c0_2 = arith.constant 0 : index
    %c0_3 = arith.constant 0 : index
    %1 = vector.load %arg2[%c0_1, %c0_2, %c0_3] : memref<1x144x16xbf16, #tpu.memory_space<vmem>>, vector<1x144x16xbf16>
    %2 = vector.shape_cast %1 : vector<1x144x16xbf16> to vector<144x16xbf16>
    %cst = arith.constant dense<0.000000e+00> : vector<32x16xf32>
    %3 = tpu.matmul %0, %2, %cst {dimension_numbers = #tpu.dot_dimension_numbers<[1], [0], [0], [1], [0, 0, 1, 1], [], []>} : vector<32x144xbf16>, vector<144x16xbf16>, vector<32x16xf32> -> vector<32x16xf32>
    %cst_4 = arith.constant dense<0.000000e+00> : vector<32xf32>
    %4 = vector.multi_reduction <add>, %3, %cst_4 [1] : vector<32x16xf32> to vector<32xf32>
    %5 = vector.shape_cast %4 : vector<32xf32> to vector<32x1xf32>
    %cst_5 = arith.constant 1.600000e+01 : f32
    %6 = vector.broadcast %cst_5 : f32 to vector<32x1xf32>
    %7 = arith.divf %5, %6 : vector<32x1xf32>
    %8 = vector.broadcast %7 : vector<32x1xf32> to vector<32x16xf32>
    %9 = arith.subf %3, %8 : vector<32x16xf32>
    %10 = arith.mulf %9, %9 : vector<32x16xf32>
    %cst_6 = arith.constant dense<0.000000e+00> : vector<32xf32>
    %11 = vector.multi_reduction <add>, %10, %cst_6 [1] : vector<32x16xf32> to vector<32xf32>
    %12 = vector.shape_cast %11 : vector<32xf32> to vector<32x1xf32>
    %cst_7 = arith.constant 1.600000e+01 : f32
    %13 = vector.broadcast %cst_7 : f32 to vector<32x1xf32>
    %14 = arith.divf %12, %13 : vector<32x1xf32>
    %cst_8 = arith.constant 9.99999974E-6 : f32
    %15 = vector.broadcast %cst_8 : f32 to vector<32x1xf32>
    %16 = arith.addf %14, %15 : vector<32x1xf32>
    %17 = math.rsqrt %16 : vector<32x1xf32>
    %18 = vector.broadcast %17 : vector<32x1xf32> to vector<32x16xf32>
    %19 = arith.mulf %9, %18 : vector<32x16xf32>
    %cst_9 = arith.constant 0.000000e+00 : f32
    %20 = vector.broadcast %cst_9 : f32 to vector<32x16xf32>
    %21 = arith.maximumf %19, %20 : vector<32x16xf32>
    %c0_10 = arith.constant 0 : index
    %c0_11 = arith.constant 0 : index
    %c0_12 = arith.constant 0 : index
    %22 = vector.load %arg3[%c0_10, %c0_11, %c0_12] : memref<1x32x16xf32, #tpu.memory_space<vmem>>, vector<1x32x16xf32>
    %23 = vector.shape_cast %22 : vector<1x32x16xf32> to vector<32x16xf32>
    %24 = vector.shape_cast %21 : vector<32x16xf32> to vector<1x32x16xf32>
    tpu.vector_store %arg3[%c0_10, %c0_11, %c0_12], %24 {strides = array<i32>} : memref<1x32x16xf32, #tpu.memory_space<vmem>>, vector<1x32x16xf32>,
    return
  }
  func.func @transform_0(%arg0: i32) -> (i32, i32) {
    %c0_i32 = arith.constant 0 : i32
    %c0_i32_0 = arith.constant 0 : i32
    %c0_i32_1 = arith.constant 0 : i32
    return %c0_i32, %c0_i32_0 : i32, i32
  }
  func.func @transform_1(%arg0: i32) -> (i32, i32, i32) {
    %c0_i32 = arith.constant 0 : i32
    %c0_i32_0 = arith.constant 0 : i32
    %c0_i32_1 = arith.constant 0 : i32
    return %arg0, %c0_i32, %c0_i32_0 : i32, i32, i32
  }
  func.func @transform_2(%arg0: i32) -> (i32, i32, i32) {
    %c0_i32 = arith.constant 0 : i32
    %c0_i32_0 = arith.constant 0 : i32
    %c0_i32_1 = arith.constant 0 : i32
    return %arg0, %c0_i32, %c0_i32_0 : i32, i32, i32
  }
}

module attributes {stable_mosaic.version = 11 : i64} {
  func.func @_conv_in_relu_kernel(%arg0: i32, %arg1: memref<32x288xbf16, #tpu.memory_space<vmem>>, %arg2: memref<1x288x16xbf16, #tpu.memory_space<vmem>>, %arg3: memref<1x32x16xf32, #tpu.memory_space<vmem>>) attributes {dimension_semantics = [#tpu.dimension_semantics<parallel>], iteration_bounds = array<i64: 2>, scalar_prefetch = 0 : i64, scratch_operands = 0 : i64, tpu.core_type = #tpu.core_type<tc>, window_params = [{pipeline_mode = #tpu.pipeline_mode<synchronous>, transform_indices = @transform_0, window_bounds = array<i64: 32, 288>}, {transform_indices = @transform_1, window_bounds = array<i64: 1, 288, 16>}, {transform_indices = @transform_2, window_bounds = array<i64: 1, 32, 16>}]} {
    %c0 = arith.constant 0 : index
    %c0_0 = arith.constant 0 : index
    %0 = vector.load %arg1[%c0, %c0_0] : memref<32x288xbf16, #tpu.memory_space<vmem>>, vector<32x288xbf16>
    %c0_1 = arith.constant 0 : index
    %c0_2 = arith.constant 0 : index
    %c0_3 = arith.constant 0 : index
    %1 = vector.load %arg2[%c0_1, %c0_2, %c0_3] : memref<1x288x16xbf16, #tpu.memory_space<vmem>>, vector<1x288x16xbf16>
    %2 = vector.shape_cast %1 : vector<1x288x16xbf16> to vector<288x16xbf16>
    %cst = arith.constant dense<0.000000e+00> : vector<32x16xf32>
    %3 = tpu.matmul %0, %2, %cst {dimension_numbers = #tpu.dot_dimension_numbers<[1], [0], [0], [1], [0, 0, 1, 1], [], []>} : vector<32x288xbf16>, vector<288x16xbf16>, vector<32x16xf32> -> vector<32x16xf32>
    %cst_4 = arith.constant dense<0.000000e+00> : vector<32xf32>
    %4 = vector.multi_reduction <add>, %3, %cst_4 [1] : vector<32x16xf32> to vector<32xf32>
    %5 = vector.shape_cast %4 : vector<32xf32> to vector<32x1xf32>
    %cst_5 = arith.constant 1.600000e+01 : f32
    %6 = vector.broadcast %cst_5 : f32 to vector<32x1xf32>
    %7 = arith.divf %5, %6 : vector<32x1xf32>
    %8 = vector.broadcast %7 : vector<32x1xf32> to vector<32x16xf32>
    %9 = arith.subf %3, %8 : vector<32x16xf32>
    %10 = arith.mulf %9, %9 : vector<32x16xf32>
    %cst_6 = arith.constant dense<0.000000e+00> : vector<32xf32>
    %11 = vector.multi_reduction <add>, %10, %cst_6 [1] : vector<32x16xf32> to vector<32xf32>
    %12 = vector.shape_cast %11 : vector<32xf32> to vector<32x1xf32>
    %cst_7 = arith.constant 1.600000e+01 : f32
    %13 = vector.broadcast %cst_7 : f32 to vector<32x1xf32>
    %14 = arith.divf %12, %13 : vector<32x1xf32>
    %cst_8 = arith.constant 9.99999974E-6 : f32
    %15 = vector.broadcast %cst_8 : f32 to vector<32x1xf32>
    %16 = arith.addf %14, %15 : vector<32x1xf32>
    %17 = math.rsqrt %16 : vector<32x1xf32>
    %18 = vector.broadcast %17 : vector<32x1xf32> to vector<32x16xf32>
    %19 = arith.mulf %9, %18 : vector<32x16xf32>
    %cst_9 = arith.constant 0.000000e+00 : f32
    %20 = vector.broadcast %cst_9 : f32 to vector<32x16xf32>
    %21 = arith.maximumf %19, %20 : vector<32x16xf32>
    %c0_10 = arith.constant 0 : index
    %c0_11 = arith.constant 0 : index
    %c0_12 = arith.constant 0 : index
    %22 = vector.load %arg3[%c0_10, %c0_11, %c0_12] : memref<1x32x16xf32, #tpu.memory_space<vmem>>, vector<1x32x16xf32>
    %23 = vector.shape_cast %22 : vector<1x32x16xf32> to vector<32x16xf32>
    %24 = vector.shape_cast %21 : vector<32x16xf32> to vector<1x32x16xf32>
    tpu.vector_store %arg3[%c0_10, %c0_11, %c0_12], %24 {strides = array<i32>} : memref<1x32x16xf32, #tpu.memory_space<vmem>>, vector<1x32x16xf32>,
    return
  }
  func.func @transform_0(%arg0: i32) -> (i32, i32) {
    %c0_i32 = arith.constant 0 : i32
    %c0_i32_0 = arith.constant 0 : i32
    %c0_i32_1 = arith.constant 0 : i32
    return %c0_i32, %c0_i32_0 : i32, i32
  }
  func.func @transform_1(%arg0: i32) -> (i32, i32, i32) {
    %c0_i32 = arith.constant 0 : i32
    %c0_i32_0 = arith.constant 0 : i32
    %c0_i32_1 = arith.constant 0 : i32
    return %arg0, %c0_i32, %c0_i32_0 : i32, i32, i32
  }
  func.func @transform_2(%arg0: i32) -> (i32, i32, i32) {
    %c0_i32 = arith.constant 0 : i32
    %c0_i32_0 = arith.constant 0 : i32
    %c0_i32_1 = arith.constant 0 : i32
    return %arg0, %c0_i32, %c0_i32_0 : i32, i32, i32
  }
}

module attributes {stable_mosaic.version = 11 : i64} {
  func.func @_conv_in_relu_res_kernel(%arg0: i32, %arg1: memref<32x288xbf16, #tpu.memory_space<vmem>>, %arg2: memref<1x288x16xbf16, #tpu.memory_space<vmem>>, %arg3: memref<1x32x16xf32, #tpu.memory_space<vmem>>, %arg4: memref<1x32x16xf32, #tpu.memory_space<vmem>>) attributes {dimension_semantics = [#tpu.dimension_semantics<parallel>], iteration_bounds = array<i64: 2>, scalar_prefetch = 0 : i64, scratch_operands = 0 : i64, tpu.core_type = #tpu.core_type<tc>, window_params = [{pipeline_mode = #tpu.pipeline_mode<synchronous>, transform_indices = @transform_0, window_bounds = array<i64: 32, 288>}, {transform_indices = @transform_1, window_bounds = array<i64: 1, 288, 16>}, {transform_indices = @transform_2, window_bounds = array<i64: 1, 32, 16>}, {transform_indices = @transform_3, window_bounds = array<i64: 1, 32, 16>}]} {
    %c0 = arith.constant 0 : index
    %c0_0 = arith.constant 0 : index
    %0 = vector.load %arg1[%c0, %c0_0] : memref<32x288xbf16, #tpu.memory_space<vmem>>, vector<32x288xbf16>
    %c0_1 = arith.constant 0 : index
    %c0_2 = arith.constant 0 : index
    %c0_3 = arith.constant 0 : index
    %1 = vector.load %arg2[%c0_1, %c0_2, %c0_3] : memref<1x288x16xbf16, #tpu.memory_space<vmem>>, vector<1x288x16xbf16>
    %2 = vector.shape_cast %1 : vector<1x288x16xbf16> to vector<288x16xbf16>
    %cst = arith.constant dense<0.000000e+00> : vector<32x16xf32>
    %3 = tpu.matmul %0, %2, %cst {dimension_numbers = #tpu.dot_dimension_numbers<[1], [0], [0], [1], [0, 0, 1, 1], [], []>} : vector<32x288xbf16>, vector<288x16xbf16>, vector<32x16xf32> -> vector<32x16xf32>
    %cst_4 = arith.constant dense<0.000000e+00> : vector<32xf32>
    %4 = vector.multi_reduction <add>, %3, %cst_4 [1] : vector<32x16xf32> to vector<32xf32>
    %5 = vector.shape_cast %4 : vector<32xf32> to vector<32x1xf32>
    %cst_5 = arith.constant 1.600000e+01 : f32
    %6 = vector.broadcast %cst_5 : f32 to vector<32x1xf32>
    %7 = arith.divf %5, %6 : vector<32x1xf32>
    %8 = vector.broadcast %7 : vector<32x1xf32> to vector<32x16xf32>
    %9 = arith.subf %3, %8 : vector<32x16xf32>
    %10 = arith.mulf %9, %9 : vector<32x16xf32>
    %cst_6 = arith.constant dense<0.000000e+00> : vector<32xf32>
    %11 = vector.multi_reduction <add>, %10, %cst_6 [1] : vector<32x16xf32> to vector<32xf32>
    %12 = vector.shape_cast %11 : vector<32xf32> to vector<32x1xf32>
    %cst_7 = arith.constant 1.600000e+01 : f32
    %13 = vector.broadcast %cst_7 : f32 to vector<32x1xf32>
    %14 = arith.divf %12, %13 : vector<32x1xf32>
    %c0_8 = arith.constant 0 : index
    %c0_9 = arith.constant 0 : index
    %c0_10 = arith.constant 0 : index
    %15 = vector.load %arg3[%c0_8, %c0_9, %c0_10] : memref<1x32x16xf32, #tpu.memory_space<vmem>>, vector<1x32x16xf32>
    %16 = vector.shape_cast %15 : vector<1x32x16xf32> to vector<32x16xf32>
    %cst_11 = arith.constant 9.99999974E-6 : f32
    %17 = vector.broadcast %cst_11 : f32 to vector<32x1xf32>
    %18 = arith.addf %14, %17 : vector<32x1xf32>
    %19 = math.rsqrt %18 : vector<32x1xf32>
    %20 = vector.broadcast %19 : vector<32x1xf32> to vector<32x16xf32>
    %21 = arith.mulf %9, %20 : vector<32x16xf32>
    %cst_12 = arith.constant 0.000000e+00 : f32
    %22 = vector.broadcast %cst_12 : f32 to vector<32x16xf32>
    %23 = arith.maximumf %21, %22 : vector<32x16xf32>
    %24 = arith.addf %16, %23 : vector<32x16xf32>
    %c0_13 = arith.constant 0 : index
    %c0_14 = arith.constant 0 : index
    %c0_15 = arith.constant 0 : index
    %25 = vector.load %arg4[%c0_13, %c0_14, %c0_15] : memref<1x32x16xf32, #tpu.memory_space<vmem>>, vector<1x32x16xf32>
    %26 = vector.shape_cast %25 : vector<1x32x16xf32> to vector<32x16xf32>
    %27 = vector.shape_cast %24 : vector<32x16xf32> to vector<1x32x16xf32>
    tpu.vector_store %arg4[%c0_13, %c0_14, %c0_15], %27 {strides = array<i32>} : memref<1x32x16xf32, #tpu.memory_space<vmem>>, vector<1x32x16xf32>,
    return
  }
  func.func @transform_0(%arg0: i32) -> (i32, i32) {
    %c0_i32 = arith.constant 0 : i32
    %c0_i32_0 = arith.constant 0 : i32
    %c0_i32_1 = arith.constant 0 : i32
    return %c0_i32, %c0_i32_0 : i32, i32
  }
  func.func @transform_1(%arg0: i32) -> (i32, i32, i32) {
    %c0_i32 = arith.constant 0 : i32
    %c0_i32_0 = arith.constant 0 : i32
    %c0_i32_1 = arith.constant 0 : i32
    return %arg0, %c0_i32, %c0_i32_0 : i32, i32, i32
  }
  func.func @transform_2(%arg0: i32) -> (i32, i32, i32) {
    %c0_i32 = arith.constant 0 : i32
    %c0_i32_0 = arith.constant 0 : i32
    %c0_i32_1 = arith.constant 0 : i32
    return %arg0, %c0_i32, %c0_i32_0 : i32, i32, i32
  }
  func.func @transform_3(%arg0: i32) -> (i32, i32, i32) {
    %c0_i32 = arith.constant 0 : i32
    %c0_i32_0 = arith.constant 0 : i32
    %c0_i32_1 = arith.constant 0 : i32
    return %arg0, %c0_i32, %c0_i32_0 : i32, i32, i32
  }
}

module attributes {stable_mosaic.version = 11 : i64} {
  func.func @_deconv_in_relu_kernel(%arg0: i32, %arg1: memref<128x128xbf16, #tpu.memory_space<vmem>>, %arg2: memref<1x128x16xbf16, #tpu.memory_space<vmem>>, %arg3: memref<1x128x16xf32, #tpu.memory_space<vmem>>) attributes {dimension_semantics = [#tpu.dimension_semantics<parallel>], iteration_bounds = array<i64: 2>, scalar_prefetch = 0 : i64, scratch_operands = 0 : i64, tpu.core_type = #tpu.core_type<tc>, window_params = [{pipeline_mode = #tpu.pipeline_mode<synchronous>, transform_indices = @transform_0, window_bounds = array<i64: 128, 128>}, {transform_indices = @transform_1, window_bounds = array<i64: 1, 128, 16>}, {transform_indices = @transform_2, window_bounds = array<i64: 1, 128, 16>}]} {
    %c0 = arith.constant 0 : index
    %c0_0 = arith.constant 0 : index
    %0 = vector.load %arg1[%c0, %c0_0] : memref<128x128xbf16, #tpu.memory_space<vmem>>, vector<128x128xbf16>
    %c0_1 = arith.constant 0 : index
    %c0_2 = arith.constant 0 : index
    %c0_3 = arith.constant 0 : index
    %1 = vector.load %arg2[%c0_1, %c0_2, %c0_3] : memref<1x128x16xbf16, #tpu.memory_space<vmem>>, vector<1x128x16xbf16>
    %2 = vector.shape_cast %1 : vector<1x128x16xbf16> to vector<128x16xbf16>
    %cst = arith.constant dense<0.000000e+00> : vector<128x16xf32>
    %3 = tpu.matmul %0, %2, %cst {dimension_numbers = #tpu.dot_dimension_numbers<[1], [0], [0], [1], [0, 0, 1, 1], [], []>} : vector<128x128xbf16>, vector<128x16xbf16>, vector<128x16xf32> -> vector<128x16xf32>
    %4 = vector.extract_strided_slice %3 {offsets = [0, 0], sizes = [32, 16], strides = [1, 1]} : vector<128x16xf32> to vector<32x16xf32>
    %5 = vector.extract_strided_slice %3 {offsets = [32, 0], sizes = [32, 16], strides = [1, 1]} : vector<128x16xf32> to vector<32x16xf32>
    %6 = vector.extract_strided_slice %3 {offsets = [64, 0], sizes = [32, 16], strides = [1, 1]} : vector<128x16xf32> to vector<32x16xf32>
    %7 = vector.extract_strided_slice %3 {offsets = [96, 0], sizes = [32, 16], strides = [1, 1]} : vector<128x16xf32> to vector<32x16xf32>
    %8 = arith.addf %4, %5 : vector<32x16xf32>
    %9 = arith.addf %8, %6 : vector<32x16xf32>
    %10 = arith.addf %9, %7 : vector<32x16xf32>
    %cst_4 = arith.constant dense<0.000000e+00> : vector<32xf32>
    %11 = vector.multi_reduction <add>, %10, %cst_4 [1] : vector<32x16xf32> to vector<32xf32>
    %12 = vector.shape_cast %11 : vector<32xf32> to vector<32x1xf32>
    %cst_5 = arith.constant 1.600000e+01 : f32
    %13 = vector.broadcast %cst_5 : f32 to vector<32x1xf32>
    %14 = arith.divf %12, %13 : vector<32x1xf32>
    %cst_6 = arith.constant 2.500000e-01 : f32
    %15 = vector.broadcast %cst_6 : f32 to vector<32x1xf32>
    %16 = arith.mulf %14, %15 : vector<32x1xf32>
    %17 = vector.broadcast %16 : vector<32x1xf32> to vector<32x16xf32>
    %18 = arith.subf %4, %17 : vector<32x16xf32>
    %19 = arith.mulf %18, %18 : vector<32x16xf32>
    %cst_7 = arith.constant dense<0.000000e+00> : vector<32xf32>
    %20 = vector.multi_reduction <add>, %19, %cst_7 [1] : vector<32x16xf32> to vector<32xf32>
    %21 = vector.shape_cast %20 : vector<32xf32> to vector<32x1xf32>
    %cst_8 = arith.constant 1.600000e+01 : f32
    %22 = vector.broadcast %cst_8 : f32 to vector<32x1xf32>
    %23 = arith.divf %21, %22 : vector<32x1xf32>
    %cst_9 = arith.constant 0.000000e+00 : f32
    %24 = vector.broadcast %cst_9 : f32 to vector<32x1xf32>
    %25 = arith.addf %24, %23 : vector<32x1xf32>
    %26 = vector.broadcast %16 : vector<32x1xf32> to vector<32x16xf32>
    %27 = arith.subf %5, %26 : vector<32x16xf32>
    %28 = arith.mulf %27, %27 : vector<32x16xf32>
    %cst_10 = arith.constant dense<0.000000e+00> : vector<32xf32>
    %29 = vector.multi_reduction <add>, %28, %cst_10 [1] : vector<32x16xf32> to vector<32xf32>
    %30 = vector.shape_cast %29 : vector<32xf32> to vector<32x1xf32>
    %cst_11 = arith.constant 1.600000e+01 : f32
    %31 = vector.broadcast %cst_11 : f32 to vector<32x1xf32>
    %32 = arith.divf %30, %31 : vector<32x1xf32>
    %33 = arith.addf %25, %32 : vector<32x1xf32>
    %34 = vector.broadcast %16 : vector<32x1xf32> to vector<32x16xf32>
    %35 = arith.subf %6, %34 : vector<32x16xf32>
    %36 = arith.mulf %35, %35 : vector<32x16xf32>
    %cst_12 = arith.constant dense<0.000000e+00> : vector<32xf32>
    %37 = vector.multi_reduction <add>, %36, %cst_12 [1] : vector<32x16xf32> to vector<32xf32>
    %38 = vector.shape_cast %37 : vector<32xf32> to vector<32x1xf32>
    %cst_13 = arith.constant 1.600000e+01 : f32
    %39 = vector.broadcast %cst_13 : f32 to vector<32x1xf32>
    %40 = arith.divf %38, %39 : vector<32x1xf32>
    %41 = arith.addf %33, %40 : vector<32x1xf32>
    %42 = vector.broadcast %16 : vector<32x1xf32> to vector<32x16xf32>
    %43 = arith.subf %7, %42 : vector<32x16xf32>
    %44 = arith.mulf %43, %43 : vector<32x16xf32>
    %cst_14 = arith.constant dense<0.000000e+00> : vector<32xf32>
    %45 = vector.multi_reduction <add>, %44, %cst_14 [1] : vector<32x16xf32> to vector<32xf32>
    %46 = vector.shape_cast %45 : vector<32xf32> to vector<32x1xf32>
    %cst_15 = arith.constant 1.600000e+01 : f32
    %47 = vector.broadcast %cst_15 : f32 to vector<32x1xf32>
    %48 = arith.divf %46, %47 : vector<32x1xf32>
    %49 = arith.addf %41, %48 : vector<32x1xf32>
    %cst_16 = arith.constant 2.500000e-01 : f32
    %50 = vector.broadcast %cst_16 : f32 to vector<32x1xf32>
    %51 = arith.mulf %49, %50 : vector<32x1xf32>
    %cst_17 = arith.constant 9.99999974E-6 : f32
    %52 = vector.broadcast %cst_17 : f32 to vector<32x1xf32>
    %53 = arith.addf %51, %52 : vector<32x1xf32>
    %54 = math.rsqrt %53 : vector<32x1xf32>
    %55 = vector.broadcast %16 : vector<32x1xf32> to vector<32x16xf32>
    %56 = arith.subf %4, %55 : vector<32x16xf32>
    %57 = vector.broadcast %54 : vector<32x1xf32> to vector<32x16xf32>
    %58 = arith.mulf %56, %57 : vector<32x16xf32>
    %cst_18 = arith.constant 0.000000e+00 : f32
    %59 = vector.broadcast %cst_18 : f32 to vector<32x16xf32>
    %60 = arith.maximumf %58, %59 : vector<32x16xf32>
    %c0_19 = arith.constant 0 : index
    %c0_20 = arith.constant 0 : index
    %c0_21 = arith.constant 0 : index
    %61 = vector.load %arg3[%c0_19, %c0_20, %c0_21] : memref<1x128x16xf32, #tpu.memory_space<vmem>>, vector<1x32x16xf32>
    %62 = vector.shape_cast %61 : vector<1x32x16xf32> to vector<32x16xf32>
    %63 = vector.shape_cast %60 : vector<32x16xf32> to vector<1x32x16xf32>
    tpu.vector_store %arg3[%c0_19, %c0_20, %c0_21], %63 {strides = array<i32>} : memref<1x128x16xf32, #tpu.memory_space<vmem>>, vector<1x32x16xf32>,
    %64 = vector.broadcast %16 : vector<32x1xf32> to vector<32x16xf32>
    %65 = arith.subf %5, %64 : vector<32x16xf32>
    %66 = vector.broadcast %54 : vector<32x1xf32> to vector<32x16xf32>
    %67 = arith.mulf %65, %66 : vector<32x16xf32>
    %cst_22 = arith.constant 0.000000e+00 : f32
    %68 = vector.broadcast %cst_22 : f32 to vector<32x16xf32>
    %69 = arith.maximumf %67, %68 : vector<32x16xf32>
    %c0_23 = arith.constant 0 : index
    %c32 = arith.constant 32 : index
    %c0_24 = arith.constant 0 : index
    %70 = vector.load %arg3[%c0_23, %c32, %c0_24] : memref<1x128x16xf32, #tpu.memory_space<vmem>>, vector<1x32x16xf32>
    %71 = vector.shape_cast %70 : vector<1x32x16xf32> to vector<32x16xf32>
    %72 = vector.shape_cast %69 : vector<32x16xf32> to vector<1x32x16xf32>
    tpu.vector_store %arg3[%c0_23, %c32, %c0_24], %72 {strides = array<i32>} : memref<1x128x16xf32, #tpu.memory_space<vmem>>, vector<1x32x16xf32>,
    %73 = vector.broadcast %16 : vector<32x1xf32> to vector<32x16xf32>
    %74 = arith.subf %6, %73 : vector<32x16xf32>
    %75 = vector.broadcast %54 : vector<32x1xf32> to vector<32x16xf32>
    %76 = arith.mulf %74, %75 : vector<32x16xf32>
    %cst_25 = arith.constant 0.000000e+00 : f32
    %77 = vector.broadcast %cst_25 : f32 to vector<32x16xf32>
    %78 = arith.maximumf %76, %77 : vector<32x16xf32>
    %c0_26 = arith.constant 0 : index
    %c64 = arith.constant 64 : index
    %c0_27 = arith.constant 0 : index
    %79 = vector.load %arg3[%c0_26, %c64, %c0_27] : memref<1x128x16xf32, #tpu.memory_space<vmem>>, vector<1x32x16xf32>
    %80 = vector.shape_cast %79 : vector<1x32x16xf32> to vector<32x16xf32>
    %81 = vector.shape_cast %78 : vector<32x16xf32> to vector<1x32x16xf32>
    tpu.vector_store %arg3[%c0_26, %c64, %c0_27], %81 {strides = array<i32>} : memref<1x128x16xf32, #tpu.memory_space<vmem>>, vector<1x32x16xf32>,
    %82 = vector.broadcast %16 : vector<32x1xf32> to vector<32x16xf32>
    %83 = arith.subf %7, %82 : vector<32x16xf32>
    %84 = vector.broadcast %54 : vector<32x1xf32> to vector<32x16xf32>
    %85 = arith.mulf %83, %84 : vector<32x16xf32>
    %cst_28 = arith.constant 0.000000e+00 : f32
    %86 = vector.broadcast %cst_28 : f32 to vector<32x16xf32>
    %87 = arith.maximumf %85, %86 : vector<32x16xf32>
    %c0_29 = arith.constant 0 : index
    %c96 = arith.constant 96 : index
    %c0_30 = arith.constant 0 : index
    %88 = vector.load %arg3[%c0_29, %c96, %c0_30] : memref<1x128x16xf32, #tpu.memory_space<vmem>>, vector<1x32x16xf32>
    %89 = vector.shape_cast %88 : vector<1x32x16xf32> to vector<32x16xf32>
    %90 = vector.shape_cast %87 : vector<32x16xf32> to vector<1x32x16xf32>
    tpu.vector_store %arg3[%c0_29, %c96, %c0_30], %90 {strides = array<i32>} : memref<1x128x16xf32, #tpu.memory_space<vmem>>, vector<1x32x16xf32>,
    return
  }
  func.func @transform_0(%arg0: i32) -> (i32, i32) {
    %c0_i32 = arith.constant 0 : i32
    %c0_i32_0 = arith.constant 0 : i32
    %c0_i32_1 = arith.constant 0 : i32
    return %c0_i32, %c0_i32_0 : i32, i32
  }
  func.func @transform_1(%arg0: i32) -> (i32, i32, i32) {
    %c0_i32 = arith.constant 0 : i32
    %c0_i32_0 = arith.constant 0 : i32
    %c0_i32_1 = arith.constant 0 : i32
    return %arg0, %c0_i32, %c0_i32_0 : i32, i32, i32
  }
  func.func @transform_2(%arg0: i32) -> (i32, i32, i32) {
    %c0_i32 = arith.constant 0 : i32
    %c0_i32_0 = arith.constant 0 : i32
    %c0_i32_1 = arith.constant 0 : i32
    return %arg0, %c0_i32, %c0_i32_0 : i32, i32, i32
  }
}

module attributes {stable_mosaic.version = 11 : i64} {
  func.func @_deconv_in_relu_kernel(%arg0: i32, %arg1: memref<64x128xbf16, #tpu.memory_space<vmem>>, %arg2: memref<1x128x64xbf16, #tpu.memory_space<vmem>>, %arg3: memref<1x64x64xf32, #tpu.memory_space<vmem>>) attributes {dimension_semantics = [#tpu.dimension_semantics<parallel>], iteration_bounds = array<i64: 2>, scalar_prefetch = 0 : i64, scratch_operands = 0 : i64, tpu.core_type = #tpu.core_type<tc>, window_params = [{pipeline_mode = #tpu.pipeline_mode<synchronous>, transform_indices = @transform_0, window_bounds = array<i64: 64, 128>}, {transform_indices = @transform_1, window_bounds = array<i64: 1, 128, 64>}, {transform_indices = @transform_2, window_bounds = array<i64: 1, 64, 64>}]} {
    %c0 = arith.constant 0 : index
    %c0_0 = arith.constant 0 : index
    %0 = vector.load %arg1[%c0, %c0_0] : memref<64x128xbf16, #tpu.memory_space<vmem>>, vector<64x128xbf16>
    %c0_1 = arith.constant 0 : index
    %c0_2 = arith.constant 0 : index
    %c0_3 = arith.constant 0 : index
    %1 = vector.load %arg2[%c0_1, %c0_2, %c0_3] : memref<1x128x64xbf16, #tpu.memory_space<vmem>>, vector<1x128x64xbf16>
    %2 = vector.shape_cast %1 : vector<1x128x64xbf16> to vector<128x64xbf16>
    %cst = arith.constant dense<0.000000e+00> : vector<64x64xf32>
    %3 = tpu.matmul %0, %2, %cst {dimension_numbers = #tpu.dot_dimension_numbers<[1], [0], [0], [1], [0, 0, 1, 1], [], []>} : vector<64x128xbf16>, vector<128x64xbf16>, vector<64x64xf32> -> vector<64x64xf32>
    %4 = vector.extract_strided_slice %3 {offsets = [0, 0], sizes = [16, 64], strides = [1, 1]} : vector<64x64xf32> to vector<16x64xf32>
    %5 = vector.extract_strided_slice %3 {offsets = [16, 0], sizes = [16, 64], strides = [1, 1]} : vector<64x64xf32> to vector<16x64xf32>
    %6 = vector.extract_strided_slice %3 {offsets = [32, 0], sizes = [16, 64], strides = [1, 1]} : vector<64x64xf32> to vector<16x64xf32>
    %7 = vector.extract_strided_slice %3 {offsets = [48, 0], sizes = [16, 64], strides = [1, 1]} : vector<64x64xf32> to vector<16x64xf32>
    %8 = arith.addf %4, %5 : vector<16x64xf32>
    %9 = arith.addf %8, %6 : vector<16x64xf32>
    %10 = arith.addf %9, %7 : vector<16x64xf32>
    %cst_4 = arith.constant dense<0.000000e+00> : vector<16xf32>
    %11 = vector.multi_reduction <add>, %10, %cst_4 [1] : vector<16x64xf32> to vector<16xf32>
    %12 = vector.shape_cast %11 : vector<16xf32> to vector<16x1xf32>
    %cst_5 = arith.constant 6.400000e+01 : f32
    %13 = vector.broadcast %cst_5 : f32 to vector<16x1xf32>
    %14 = arith.divf %12, %13 : vector<16x1xf32>
    %cst_6 = arith.constant 2.500000e-01 : f32
    %15 = vector.broadcast %cst_6 : f32 to vector<16x1xf32>
    %16 = arith.mulf %14, %15 : vector<16x1xf32>
    %17 = vector.broadcast %16 : vector<16x1xf32> to vector<16x64xf32>
    %18 = arith.subf %4, %17 : vector<16x64xf32>
    %19 = arith.mulf %18, %18 : vector<16x64xf32>
    %cst_7 = arith.constant dense<0.000000e+00> : vector<16xf32>
    %20 = vector.multi_reduction <add>, %19, %cst_7 [1] : vector<16x64xf32> to vector<16xf32>
    %21 = vector.shape_cast %20 : vector<16xf32> to vector<16x1xf32>
    %cst_8 = arith.constant 6.400000e+01 : f32
    %22 = vector.broadcast %cst_8 : f32 to vector<16x1xf32>
    %23 = arith.divf %21, %22 : vector<16x1xf32>
    %cst_9 = arith.constant 0.000000e+00 : f32
    %24 = vector.broadcast %cst_9 : f32 to vector<16x1xf32>
    %25 = arith.addf %24, %23 : vector<16x1xf32>
    %26 = vector.broadcast %16 : vector<16x1xf32> to vector<16x64xf32>
    %27 = arith.subf %5, %26 : vector<16x64xf32>
    %28 = arith.mulf %27, %27 : vector<16x64xf32>
    %cst_10 = arith.constant dense<0.000000e+00> : vector<16xf32>
    %29 = vector.multi_reduction <add>, %28, %cst_10 [1] : vector<16x64xf32> to vector<16xf32>
    %30 = vector.shape_cast %29 : vector<16xf32> to vector<16x1xf32>
    %cst_11 = arith.constant 6.400000e+01 : f32
    %31 = vector.broadcast %cst_11 : f32 to vector<16x1xf32>
    %32 = arith.divf %30, %31 : vector<16x1xf32>
    %33 = arith.addf %25, %32 : vector<16x1xf32>
    %34 = vector.broadcast %16 : vector<16x1xf32> to vector<16x64xf32>
    %35 = arith.subf %6, %34 : vector<16x64xf32>
    %36 = arith.mulf %35, %35 : vector<16x64xf32>
    %cst_12 = arith.constant dense<0.000000e+00> : vector<16xf32>
    %37 = vector.multi_reduction <add>, %36, %cst_12 [1] : vector<16x64xf32> to vector<16xf32>
    %38 = vector.shape_cast %37 : vector<16xf32> to vector<16x1xf32>
    %cst_13 = arith.constant 6.400000e+01 : f32
    %39 = vector.broadcast %cst_13 : f32 to vector<16x1xf32>
    %40 = arith.divf %38, %39 : vector<16x1xf32>
    %41 = arith.addf %33, %40 : vector<16x1xf32>
    %42 = vector.broadcast %16 : vector<16x1xf32> to vector<16x64xf32>
    %43 = arith.subf %7, %42 : vector<16x64xf32>
    %44 = arith.mulf %43, %43 : vector<16x64xf32>
    %cst_14 = arith.constant dense<0.000000e+00> : vector<16xf32>
    %45 = vector.multi_reduction <add>, %44, %cst_14 [1] : vector<16x64xf32> to vector<16xf32>
    %46 = vector.shape_cast %45 : vector<16xf32> to vector<16x1xf32>
    %cst_15 = arith.constant 6.400000e+01 : f32
    %47 = vector.broadcast %cst_15 : f32 to vector<16x1xf32>
    %48 = arith.divf %46, %47 : vector<16x1xf32>
    %49 = arith.addf %41, %48 : vector<16x1xf32>
    %cst_16 = arith.constant 2.500000e-01 : f32
    %50 = vector.broadcast %cst_16 : f32 to vector<16x1xf32>
    %51 = arith.mulf %49, %50 : vector<16x1xf32>
    %cst_17 = arith.constant 9.99999974E-6 : f32
    %52 = vector.broadcast %cst_17 : f32 to vector<16x1xf32>
    %53 = arith.addf %51, %52 : vector<16x1xf32>
    %54 = math.rsqrt %53 : vector<16x1xf32>
    %55 = vector.broadcast %16 : vector<16x1xf32> to vector<16x64xf32>
    %56 = arith.subf %4, %55 : vector<16x64xf32>
    %57 = vector.broadcast %54 : vector<16x1xf32> to vector<16x64xf32>
    %58 = arith.mulf %56, %57 : vector<16x64xf32>
    %cst_18 = arith.constant 0.000000e+00 : f32
    %59 = vector.broadcast %cst_18 : f32 to vector<16x64xf32>
    %60 = arith.maximumf %58, %59 : vector<16x64xf32>
    %c0_19 = arith.constant 0 : index
    %c0_20 = arith.constant 0 : index
    %c0_21 = arith.constant 0 : index
    %61 = vector.load %arg3[%c0_19, %c0_20, %c0_21] : memref<1x64x64xf32, #tpu.memory_space<vmem>>, vector<1x16x64xf32>
    %62 = vector.shape_cast %61 : vector<1x16x64xf32> to vector<16x64xf32>
    %63 = vector.shape_cast %60 : vector<16x64xf32> to vector<1x16x64xf32>
    tpu.vector_store %arg3[%c0_19, %c0_20, %c0_21], %63 {strides = array<i32>} : memref<1x64x64xf32, #tpu.memory_space<vmem>>, vector<1x16x64xf32>,
    %64 = vector.broadcast %16 : vector<16x1xf32> to vector<16x64xf32>
    %65 = arith.subf %5, %64 : vector<16x64xf32>
    %66 = vector.broadcast %54 : vector<16x1xf32> to vector<16x64xf32>
    %67 = arith.mulf %65, %66 : vector<16x64xf32>
    %cst_22 = arith.constant 0.000000e+00 : f32
    %68 = vector.broadcast %cst_22 : f32 to vector<16x64xf32>
    %69 = arith.maximumf %67, %68 : vector<16x64xf32>
    %c0_23 = arith.constant 0 : index
    %c16 = arith.constant 16 : index
    %c0_24 = arith.constant 0 : index
    %70 = vector.load %arg3[%c0_23, %c16, %c0_24] : memref<1x64x64xf32, #tpu.memory_space<vmem>>, vector<1x16x64xf32>
    %71 = vector.shape_cast %70 : vector<1x16x64xf32> to vector<16x64xf32>
    %72 = vector.shape_cast %69 : vector<16x64xf32> to vector<1x16x64xf32>
    tpu.vector_store %arg3[%c0_23, %c16, %c0_24], %72 {strides = array<i32>} : memref<1x64x64xf32, #tpu.memory_space<vmem>>, vector<1x16x64xf32>,
    %73 = vector.broadcast %16 : vector<16x1xf32> to vector<16x64xf32>
    %74 = arith.subf %6, %73 : vector<16x64xf32>
    %75 = vector.broadcast %54 : vector<16x1xf32> to vector<16x64xf32>
    %76 = arith.mulf %74, %75 : vector<16x64xf32>
    %cst_25 = arith.constant 0.000000e+00 : f32
    %77 = vector.broadcast %cst_25 : f32 to vector<16x64xf32>
    %78 = arith.maximumf %76, %77 : vector<16x64xf32>
    %c0_26 = arith.constant 0 : index
    %c32 = arith.constant 32 : index
    %c0_27 = arith.constant 0 : index
    %79 = vector.load %arg3[%c0_26, %c32, %c0_27] : memref<1x64x64xf32, #tpu.memory_space<vmem>>, vector<1x16x64xf32>
    %80 = vector.shape_cast %79 : vector<1x16x64xf32> to vector<16x64xf32>
    %81 = vector.shape_cast %78 : vector<16x64xf32> to vector<1x16x64xf32>
    tpu.vector_store %arg3[%c0_26, %c32, %c0_27], %81 {strides = array<i32>} : memref<1x64x64xf32, #tpu.memory_space<vmem>>, vector<1x16x64xf32>,
    %82 = vector.broadcast %16 : vector<16x1xf32> to vector<16x64xf32>
    %83 = arith.subf %7, %82 : vector<16x64xf32>
    %84 = vector.broadcast %54 : vector<16x1xf32> to vector<16x64xf32>
    %85 = arith.mulf %83, %84 : vector<16x64xf32>
    %cst_28 = arith.constant 0.000000e+00 : f32
    %86 = vector.broadcast %cst_28 : f32 to vector<16x64xf32>
    %87 = arith.maximumf %85, %86 : vector<16x64xf32>
    %c0_29 = arith.constant 0 : index
    %c48 = arith.constant 48 : index
    %c0_30 = arith.constant 0 : index
    %88 = vector.load %arg3[%c0_29, %c48, %c0_30] : memref<1x64x64xf32, #tpu.memory_space<vmem>>, vector<1x16x64xf32>
    %89 = vector.shape_cast %88 : vector<1x16x64xf32> to vector<16x64xf32>
    %90 = vector.shape_cast %87 : vector<16x64xf32> to vector<1x16x64xf32>
    tpu.vector_store %arg3[%c0_29, %c48, %c0_30], %90 {strides = array<i32>} : memref<1x64x64xf32, #tpu.memory_space<vmem>>, vector<1x16x64xf32>,
    return
  }
  func.func @transform_0(%arg0: i32) -> (i32, i32) {
    %c0_i32 = arith.constant 0 : i32
    %c0_i32_0 = arith.constant 0 : i32
    %c0_i32_1 = arith.constant 0 : i32
    return %c0_i32, %c0_i32_0 : i32, i32
  }
  func.func @transform_1(%arg0: i32) -> (i32, i32, i32) {
    %c0_i32 = arith.constant 0 : i32
    %c0_i32_0 = arith.constant 0 : i32
    %c0_i32_1 = arith.constant 0 : i32
    return %arg0, %c0_i32, %c0_i32_0 : i32, i32, i32
  }
  func.func @transform_2(%arg0: i32) -> (i32, i32, i32) {
    %c0_i32 = arith.constant 0 : i32
    %c0_i32_0 = arith.constant 0 : i32
    %c0_i32_1 = arith.constant 0 : i32
    return %arg0, %c0_i32, %c0_i32_0 : i32, i32, i32
  }
}

module attributes {stable_mosaic.version = 11 : i64} {
  func.func @_head_combine_kernel(%arg0: i32, %arg1: memref<27x392xbf16, #tpu.memory_space<vmem>>, %arg2: memref<27x1xf32, #tpu.memory_space<vmem>>, %arg3: memref<10x8xbf16, #tpu.memory_space<vmem>>, %arg4: memref<10x1xf32, #tpu.memory_space<vmem>>, %arg5: memref<1x392x256xbf16, #tpu.memory_space<vmem>>, %arg6: memref<1x8x256xbf16, #tpu.memory_space<vmem>>, %arg7: memref<1x3x256xf32, #tpu.memory_space<vmem>>, %arg8: memref<1x3x256xf32, #tpu.memory_space<vmem>>, %arg9: memref<1x10x3x256xf32, #tpu.memory_space<vmem>>, %arg10: memref<1x10x3x256xf32, #tpu.memory_space<vmem>>, %arg11: memref<1x27x256xf32, #tpu.memory_space<vmem>>) attributes {dimension_semantics = [#tpu.dimension_semantics<parallel>], iteration_bounds = array<i64: 2>, scalar_prefetch = 0 : i64, scratch_operands = 0 : i64, tpu.core_type = #tpu.core_type<tc>, window_params = [{pipeline_mode = #tpu.pipeline_mode<synchronous>, transform_indices = @transform_0, window_bounds = array<i64: 27, 392>}, {pipeline_mode = #tpu.pipeline_mode<synchronous>, transform_indices = @transform_1, window_bounds = array<i64: 27, 1>}, {pipeline_mode = #tpu.pipeline_mode<synchronous>, transform_indices = @transform_2, window_bounds = array<i64: 10, 8>}, {pipeline_mode = #tpu.pipeline_mode<synchronous>, transform_indices = @transform_3, window_bounds = array<i64: 10, 1>}, {transform_indices = @transform_4, window_bounds = array<i64: 1, 392, 256>}, {transform_indices = @transform_5, window_bounds = array<i64: 1, 8, 256>}, {transform_indices = @transform_6, window_bounds = array<i64: 1, 3, 256>}, {transform_indices = @transform_7, window_bounds = array<i64: 1, 3, 256>}, {transform_indices = @transform_8, window_bounds = array<i64: 1, 10, 3, 256>}, {transform_indices = @transform_9, window_bounds = array<i64: 1, 10, 3, 256>}, {transform_indices = @transform_10, window_bounds = array<i64: 1, 27, 256>}]} {
    %c0 = arith.constant 0 : index
    %c0_0 = arith.constant 0 : index
    %0 = vector.load %arg1[%c0, %c0_0] : memref<27x392xbf16, #tpu.memory_space<vmem>>, vector<27x392xbf16>
    %c0_1 = arith.constant 0 : index
    %c0_2 = arith.constant 0 : index
    %c0_3 = arith.constant 0 : index
    %1 = vector.load %arg5[%c0_1, %c0_2, %c0_3] : memref<1x392x256xbf16, #tpu.memory_space<vmem>>, vector<1x392x256xbf16>
    %2 = vector.shape_cast %1 : vector<1x392x256xbf16> to vector<392x256xbf16>
    %cst = arith.constant dense<0.000000e+00> : vector<27x256xf32>
    %3 = tpu.matmul %0, %2, %cst {dimension_numbers = #tpu.dot_dimension_numbers<[1], [0], [0], [1], [0, 0, 1, 1], [], []>} : vector<27x392xbf16>, vector<392x256xbf16>, vector<27x256xf32> -> vector<27x256xf32>
    %c0_4 = arith.constant 0 : index
    %c0_5 = arith.constant 0 : index
    %4 = vector.load %arg2[%c0_4, %c0_5] : memref<27x1xf32, #tpu.memory_space<vmem>>, vector<27x1xf32>
    %5 = vector.broadcast %4 : vector<27x1xf32> to vector<27x256xf32>
    %6 = arith.addf %3, %5 : vector<27x256xf32>
    %7 = math.tanh %6 : vector<27x256xf32>
    %c0_6 = arith.constant 0 : index
    %c0_7 = arith.constant 0 : index
    %8 = vector.load %arg3[%c0_6, %c0_7] : memref<10x8xbf16, #tpu.memory_space<vmem>>, vector<10x8xbf16>
    %c0_8 = arith.constant 0 : index
    %c0_9 = arith.constant 0 : index
    %c0_10 = arith.constant 0 : index
    %9 = vector.load %arg6[%c0_8, %c0_9, %c0_10] : memref<1x8x256xbf16, #tpu.memory_space<vmem>>, vector<1x8x256xbf16>
    %10 = vector.shape_cast %9 : vector<1x8x256xbf16> to vector<8x256xbf16>
    %cst_11 = arith.constant dense<0.000000e+00> : vector<10x256xf32>
    %11 = tpu.matmul %8, %10, %cst_11 {dimension_numbers = #tpu.dot_dimension_numbers<[1], [0], [0], [1], [0, 0, 1, 1], [], []>} : vector<10x8xbf16>, vector<8x256xbf16>, vector<10x256xf32> -> vector<10x256xf32>
    %c0_12 = arith.constant 0 : index
    %c0_13 = arith.constant 0 : index
    %12 = vector.load %arg4[%c0_12, %c0_13] : memref<10x1xf32, #tpu.memory_space<vmem>>, vector<10x1xf32>
    %13 = vector.broadcast %12 : vector<10x1xf32> to vector<10x256xf32>
    %14 = arith.addf %11, %13 : vector<10x256xf32>
    %cst_14 = arith.constant dense<0xFF800000> : vector<256xf32>
    %15 = vector.multi_reduction <maximumf>, %14, %cst_14 [0] : vector<10x256xf32> to vector<256xf32>
    %16 = vector.shape_cast %15 : vector<256xf32> to vector<1x256xf32>
    %17 = vector.broadcast %16 : vector<1x256xf32> to vector<10x256xf32>
    %18 = arith.subf %14, %17 : vector<10x256xf32>
    %19 = math.exp %18 : vector<10x256xf32>
    %cst_15 = arith.constant dense<0.000000e+00> : vector<256xf32>
    %20 = vector.multi_reduction <add>, %19, %cst_15 [0] : vector<10x256xf32> to vector<256xf32>
    %21 = vector.shape_cast %20 : vector<256xf32> to vector<1x256xf32>
    %22 = vector.broadcast %21 : vector<1x256xf32> to vector<10x256xf32>
    %23 = arith.divf %19, %22 : vector<10x256xf32>
    %c0_16 = arith.constant 0 : index
    %c0_17 = arith.constant 0 : index
    %c0_18 = arith.constant 0 : index
    %24 = vector.load %arg7[%c0_16, %c0_17, %c0_18] : memref<1x3x256xf32, #tpu.memory_space<vmem>>, vector<1x3x256xf32>
    %25 = vector.shape_cast %24 : vector<1x3x256xf32> to vector<3x256xf32>
    %26 = vector.extract_strided_slice %23 {offsets = [9, 0], sizes = [1, 256], strides = [1, 1]} : vector<10x256xf32> to vector<1x256xf32>
    %27 = vector.broadcast %26 : vector<1x256xf32> to vector<3x256xf32>
    %28 = arith.mulf %25, %27 : vector<3x256xf32>
    %c0_19 = arith.constant 0 : index
    %c9 = arith.constant 9 : index
    %c0_20 = arith.constant 0 : index
    %c0_21 = arith.constant 0 : index
    %29 = vector.load %arg9[%c0_19, %c9, %c0_20, %c0_21] : memref<1x10x3x256xf32, #tpu.memory_space<vmem>>, vector<1x1x3x256xf32>
    %30 = vector.shape_cast %29 : vector<1x1x3x256xf32> to vector<3x256xf32>
    %31 = vector.shape_cast %28 : vector<3x256xf32> to vector<1x1x3x256xf32>
    tpu.vector_store %arg9[%c0_19, %c9, %c0_20, %c0_21], %31 {strides = array<i32>} : memref<1x10x3x256xf32, #tpu.memory_space<vmem>>, vector<1x1x3x256xf32>,
    %32 = vector.extract_strided_slice %23 {offsets = [9, 0], sizes = [1, 256], strides = [1, 1]} : vector<10x256xf32> to vector<1x256xf32>
    %33 = vector.shape_cast %32 : vector<1x256xf32> to vector<1x256xf32>
    %34 = vector.broadcast %33 : vector<1x256xf32> to vector<3x256xf32>
    %c0_22 = arith.constant 0 : index
    %c9_23 = arith.constant 9 : index
    %c0_24 = arith.constant 0 : index
    %c0_25 = arith.constant 0 : index
    %35 = vector.load %arg10[%c0_22, %c9_23, %c0_24, %c0_25] : memref<1x10x3x256xf32, #tpu.memory_space<vmem>>, vector<1x1x3x256xf32>
    %36 = vector.shape_cast %35 : vector<1x1x3x256xf32> to vector<3x256xf32>
    %37 = vector.shape_cast %34 : vector<3x256xf32> to vector<1x1x3x256xf32>
    tpu.vector_store %arg10[%c0_22, %c9_23, %c0_24, %c0_25], %37 {strides = array<i32>} : memref<1x10x3x256xf32, #tpu.memory_space<vmem>>, vector<1x1x3x256xf32>,
    %38 = vector.extract_strided_slice %23 {offsets = [0, 0], sizes = [1, 256], strides = [1, 1]} : vector<10x256xf32> to vector<1x256xf32>
    %39 = vector.extract_strided_slice %7 {offsets = [0, 0], sizes = [3, 256], strides = [1, 1]} : vector<27x256xf32> to vector<3x256xf32>
    %40 = vector.broadcast %38 : vector<1x256xf32> to vector<3x256xf32>
    %41 = arith.mulf %39, %40 : vector<3x256xf32>
    %c0_26 = arith.constant 0 : index
    %c0_27 = arith.constant 0 : index
    %c0_28 = arith.constant 0 : index
    %c0_29 = arith.constant 0 : index
    %42 = vector.load %arg9[%c0_26, %c0_27, %c0_28, %c0_29] : memref<1x10x3x256xf32, #tpu.memory_space<vmem>>, vector<1x1x3x256xf32>
    %43 = vector.shape_cast %42 : vector<1x1x3x256xf32> to vector<3x256xf32>
    %44 = vector.shape_cast %41 : vector<3x256xf32> to vector<1x1x3x256xf32>
    tpu.vector_store %arg9[%c0_26, %c0_27, %c0_28, %c0_29], %44 {strides = array<i32>} : memref<1x10x3x256xf32, #tpu.memory_space<vmem>>, vector<1x1x3x256xf32>,
    %45 = vector.shape_cast %38 : vector<1x256xf32> to vector<1x256xf32>
    %46 = vector.broadcast %45 : vector<1x256xf32> to vector<3x256xf32>
    %c0_30 = arith.constant 0 : index
    %c0_31 = arith.constant 0 : index
    %c0_32 = arith.constant 0 : index
    %c0_33 = arith.constant 0 : index
    %47 = vector.load %arg10[%c0_30, %c0_31, %c0_32, %c0_33] : memref<1x10x3x256xf32, #tpu.memory_space<vmem>>, vector<1x1x3x256xf32>
    %48 = vector.shape_cast %47 : vector<1x1x3x256xf32> to vector<3x256xf32>
    %49 = vector.shape_cast %46 : vector<3x256xf32> to vector<1x1x3x256xf32>
    tpu.vector_store %arg10[%c0_30, %c0_31, %c0_32, %c0_33], %49 {strides = array<i32>} : memref<1x10x3x256xf32, #tpu.memory_space<vmem>>, vector<1x1x3x256xf32>,
    %50 = arith.addf %28, %41 : vector<3x256xf32>
    %51 = vector.extract_strided_slice %23 {offsets = [1, 0], sizes = [1, 256], strides = [1, 1]} : vector<10x256xf32> to vector<1x256xf32>
    %52 = vector.extract_strided_slice %7 {offsets = [3, 0], sizes = [3, 256], strides = [1, 1]} : vector<27x256xf32> to vector<3x256xf32>
    %53 = vector.broadcast %51 : vector<1x256xf32> to vector<3x256xf32>
    %54 = arith.mulf %52, %53 : vector<3x256xf32>
    %c0_34 = arith.constant 0 : index
    %c1 = arith.constant 1 : index
    %c0_35 = arith.constant 0 : index
    %c0_36 = arith.constant 0 : index
    %55 = vector.load %arg9[%c0_34, %c1, %c0_35, %c0_36] : memref<1x10x3x256xf32, #tpu.memory_space<vmem>>, vector<1x1x3x256xf32>
    %56 = vector.shape_cast %55 : vector<1x1x3x256xf32> to vector<3x256xf32>
    %57 = vector.shape_cast %54 : vector<3x256xf32> to vector<1x1x3x256xf32>
    tpu.vector_store %arg9[%c0_34, %c1, %c0_35, %c0_36], %57 {strides = array<i32>} : memref<1x10x3x256xf32, #tpu.memory_space<vmem>>, vector<1x1x3x256xf32>,
    %58 = vector.shape_cast %51 : vector<1x256xf32> to vector<1x256xf32>
    %59 = vector.broadcast %58 : vector<1x256xf32> to vector<3x256xf32>
    %c0_37 = arith.constant 0 : index
    %c1_38 = arith.constant 1 : index
    %c0_39 = arith.constant 0 : index
    %c0_40 = arith.constant 0 : index
    %60 = vector.load %arg10[%c0_37, %c1_38, %c0_39, %c0_40] : memref<1x10x3x256xf32, #tpu.memory_space<vmem>>, vector<1x1x3x256xf32>
    %61 = vector.shape_cast %60 : vector<1x1x3x256xf32> to vector<3x256xf32>
    %62 = vector.shape_cast %59 : vector<3x256xf32> to vector<1x1x3x256xf32>
    tpu.vector_store %arg10[%c0_37, %c1_38, %c0_39, %c0_40], %62 {strides = array<i32>} : memref<1x10x3x256xf32, #tpu.memory_space<vmem>>, vector<1x1x3x256xf32>,
    %63 = arith.addf %50, %54 : vector<3x256xf32>
    %64 = vector.extract_strided_slice %23 {offsets = [2, 0], sizes = [1, 256], strides = [1, 1]} : vector<10x256xf32> to vector<1x256xf32>
    %65 = vector.extract_strided_slice %7 {offsets = [6, 0], sizes = [3, 256], strides = [1, 1]} : vector<27x256xf32> to vector<3x256xf32>
    %66 = vector.broadcast %64 : vector<1x256xf32> to vector<3x256xf32>
    %67 = arith.mulf %65, %66 : vector<3x256xf32>
    %c0_41 = arith.constant 0 : index
    %c2 = arith.constant 2 : index
    %c0_42 = arith.constant 0 : index
    %c0_43 = arith.constant 0 : index
    %68 = vector.load %arg9[%c0_41, %c2, %c0_42, %c0_43] : memref<1x10x3x256xf32, #tpu.memory_space<vmem>>, vector<1x1x3x256xf32>
    %69 = vector.shape_cast %68 : vector<1x1x3x256xf32> to vector<3x256xf32>
    %70 = vector.shape_cast %67 : vector<3x256xf32> to vector<1x1x3x256xf32>
    tpu.vector_store %arg9[%c0_41, %c2, %c0_42, %c0_43], %70 {strides = array<i32>} : memref<1x10x3x256xf32, #tpu.memory_space<vmem>>, vector<1x1x3x256xf32>,
    %71 = vector.shape_cast %64 : vector<1x256xf32> to vector<1x256xf32>
    %72 = vector.broadcast %71 : vector<1x256xf32> to vector<3x256xf32>
    %c0_44 = arith.constant 0 : index
    %c2_45 = arith.constant 2 : index
    %c0_46 = arith.constant 0 : index
    %c0_47 = arith.constant 0 : index
    %73 = vector.load %arg10[%c0_44, %c2_45, %c0_46, %c0_47] : memref<1x10x3x256xf32, #tpu.memory_space<vmem>>, vector<1x1x3x256xf32>
    %74 = vector.shape_cast %73 : vector<1x1x3x256xf32> to vector<3x256xf32>
    %75 = vector.shape_cast %72 : vector<3x256xf32> to vector<1x1x3x256xf32>
    tpu.vector_store %arg10[%c0_44, %c2_45, %c0_46, %c0_47], %75 {strides = array<i32>} : memref<1x10x3x256xf32, #tpu.memory_space<vmem>>, vector<1x1x3x256xf32>,
    %76 = arith.addf %63, %67 : vector<3x256xf32>
    %77 = vector.extract_strided_slice %23 {offsets = [3, 0], sizes = [1, 256], strides = [1, 1]} : vector<10x256xf32> to vector<1x256xf32>
    %78 = vector.extract_strided_slice %7 {offsets = [9, 0], sizes = [3, 256], strides = [1, 1]} : vector<27x256xf32> to vector<3x256xf32>
    %79 = vector.broadcast %77 : vector<1x256xf32> to vector<3x256xf32>
    %80 = arith.mulf %78, %79 : vector<3x256xf32>
    %c0_48 = arith.constant 0 : index
    %c3 = arith.constant 3 : index
    %c0_49 = arith.constant 0 : index
    %c0_50 = arith.constant 0 : index
    %81 = vector.load %arg9[%c0_48, %c3, %c0_49, %c0_50] : memref<1x10x3x256xf32, #tpu.memory_space<vmem>>, vector<1x1x3x256xf32>
    %82 = vector.shape_cast %81 : vector<1x1x3x256xf32> to vector<3x256xf32>
    %83 = vector.shape_cast %80 : vector<3x256xf32> to vector<1x1x3x256xf32>
    tpu.vector_store %arg9[%c0_48, %c3, %c0_49, %c0_50], %83 {strides = array<i32>} : memref<1x10x3x256xf32, #tpu.memory_space<vmem>>, vector<1x1x3x256xf32>,
    %84 = vector.shape_cast %77 : vector<1x256xf32> to vector<1x256xf32>
    %85 = vector.broadcast %84 : vector<1x256xf32> to vector<3x256xf32>
    %c0_51 = arith.constant 0 : index
    %c3_52 = arith.constant 3 : index
    %c0_53 = arith.constant 0 : index
    %c0_54 = arith.constant 0 : index
    %86 = vector.load %arg10[%c0_51, %c3_52, %c0_53, %c0_54] : memref<1x10x3x256xf32, #tpu.memory_space<vmem>>, vector<1x1x3x256xf32>
    %87 = vector.shape_cast %86 : vector<1x1x3x256xf32> to vector<3x256xf32>
    %88 = vector.shape_cast %85 : vector<3x256xf32> to vector<1x1x3x256xf32>
    tpu.vector_store %arg10[%c0_51, %c3_52, %c0_53, %c0_54], %88 {strides = array<i32>} : memref<1x10x3x256xf32, #tpu.memory_space<vmem>>, vector<1x1x3x256xf32>,
    %89 = arith.addf %76, %80 : vector<3x256xf32>
    %90 = vector.extract_strided_slice %23 {offsets = [4, 0], sizes = [1, 256], strides = [1, 1]} : vector<10x256xf32> to vector<1x256xf32>
    %91 = vector.extract_strided_slice %7 {offsets = [12, 0], sizes = [3, 256], strides = [1, 1]} : vector<27x256xf32> to vector<3x256xf32>
    %92 = vector.broadcast %90 : vector<1x256xf32> to vector<3x256xf32>
    %93 = arith.mulf %91, %92 : vector<3x256xf32>
    %c0_55 = arith.constant 0 : index
    %c4 = arith.constant 4 : index
    %c0_56 = arith.constant 0 : index
    %c0_57 = arith.constant 0 : index
    %94 = vector.load %arg9[%c0_55, %c4, %c0_56, %c0_57] : memref<1x10x3x256xf32, #tpu.memory_space<vmem>>, vector<1x1x3x256xf32>
    %95 = vector.shape_cast %94 : vector<1x1x3x256xf32> to vector<3x256xf32>
    %96 = vector.shape_cast %93 : vector<3x256xf32> to vector<1x1x3x256xf32>
    tpu.vector_store %arg9[%c0_55, %c4, %c0_56, %c0_57], %96 {strides = array<i32>} : memref<1x10x3x256xf32, #tpu.memory_space<vmem>>, vector<1x1x3x256xf32>,
    %97 = vector.shape_cast %90 : vector<1x256xf32> to vector<1x256xf32>
    %98 = vector.broadcast %97 : vector<1x256xf32> to vector<3x256xf32>
    %c0_58 = arith.constant 0 : index
    %c4_59 = arith.constant 4 : index
    %c0_60 = arith.constant 0 : index
    %c0_61 = arith.constant 0 : index
    %99 = vector.load %arg10[%c0_58, %c4_59, %c0_60, %c0_61] : memref<1x10x3x256xf32, #tpu.memory_space<vmem>>, vector<1x1x3x256xf32>
    %100 = vector.shape_cast %99 : vector<1x1x3x256xf32> to vector<3x256xf32>
    %101 = vector.shape_cast %98 : vector<3x256xf32> to vector<1x1x3x256xf32>
    tpu.vector_store %arg10[%c0_58, %c4_59, %c0_60, %c0_61], %101 {strides = array<i32>} : memref<1x10x3x256xf32, #tpu.memory_space<vmem>>, vector<1x1x3x256xf32>,
    %102 = arith.addf %89, %93 : vector<3x256xf32>
    %103 = vector.extract_strided_slice %23 {offsets = [5, 0], sizes = [1, 256], strides = [1, 1]} : vector<10x256xf32> to vector<1x256xf32>
    %104 = vector.extract_strided_slice %7 {offsets = [15, 0], sizes = [3, 256], strides = [1, 1]} : vector<27x256xf32> to vector<3x256xf32>
    %105 = vector.broadcast %103 : vector<1x256xf32> to vector<3x256xf32>
    %106 = arith.mulf %104, %105 : vector<3x256xf32>
    %c0_62 = arith.constant 0 : index
    %c5 = arith.constant 5 : index
    %c0_63 = arith.constant 0 : index
    %c0_64 = arith.constant 0 : index
    %107 = vector.load %arg9[%c0_62, %c5, %c0_63, %c0_64] : memref<1x10x3x256xf32, #tpu.memory_space<vmem>>, vector<1x1x3x256xf32>
    %108 = vector.shape_cast %107 : vector<1x1x3x256xf32> to vector<3x256xf32>
    %109 = vector.shape_cast %106 : vector<3x256xf32> to vector<1x1x3x256xf32>
    tpu.vector_store %arg9[%c0_62, %c5, %c0_63, %c0_64], %109 {strides = array<i32>} : memref<1x10x3x256xf32, #tpu.memory_space<vmem>>, vector<1x1x3x256xf32>,
    %110 = vector.shape_cast %103 : vector<1x256xf32> to vector<1x256xf32>
    %111 = vector.broadcast %110 : vector<1x256xf32> to vector<3x256xf32>
    %c0_65 = arith.constant 0 : index
    %c5_66 = arith.constant 5 : index
    %c0_67 = arith.constant 0 : index
    %c0_68 = arith.constant 0 : index
    %112 = vector.load %arg10[%c0_65, %c5_66, %c0_67, %c0_68] : memref<1x10x3x256xf32, #tpu.memory_space<vmem>>, vector<1x1x3x256xf32>
    %113 = vector.shape_cast %112 : vector<1x1x3x256xf32> to vector<3x256xf32>
    %114 = vector.shape_cast %111 : vector<3x256xf32> to vector<1x1x3x256xf32>
    tpu.vector_store %arg10[%c0_65, %c5_66, %c0_67, %c0_68], %114 {strides = array<i32>} : memref<1x10x3x256xf32, #tpu.memory_space<vmem>>, vector<1x1x3x256xf32>,
    %115 = arith.addf %102, %106 : vector<3x256xf32>
    %116 = vector.extract_strided_slice %23 {offsets = [6, 0], sizes = [1, 256], strides = [1, 1]} : vector<10x256xf32> to vector<1x256xf32>
    %117 = vector.extract_strided_slice %7 {offsets = [18, 0], sizes = [3, 256], strides = [1, 1]} : vector<27x256xf32> to vector<3x256xf32>
    %118 = vector.broadcast %116 : vector<1x256xf32> to vector<3x256xf32>
    %119 = arith.mulf %117, %118 : vector<3x256xf32>
    %c0_69 = arith.constant 0 : index
    %c6 = arith.constant 6 : index
    %c0_70 = arith.constant 0 : index
    %c0_71 = arith.constant 0 : index
    %120 = vector.load %arg9[%c0_69, %c6, %c0_70, %c0_71] : memref<1x10x3x256xf32, #tpu.memory_space<vmem>>, vector<1x1x3x256xf32>
    %121 = vector.shape_cast %120 : vector<1x1x3x256xf32> to vector<3x256xf32>
    %122 = vector.shape_cast %119 : vector<3x256xf32> to vector<1x1x3x256xf32>
    tpu.vector_store %arg9[%c0_69, %c6, %c0_70, %c0_71], %122 {strides = array<i32>} : memref<1x10x3x256xf32, #tpu.memory_space<vmem>>, vector<1x1x3x256xf32>,
    %123 = vector.shape_cast %116 : vector<1x256xf32> to vector<1x256xf32>
    %124 = vector.broadcast %123 : vector<1x256xf32> to vector<3x256xf32>
    %c0_72 = arith.constant 0 : index
    %c6_73 = arith.constant 6 : index
    %c0_74 = arith.constant 0 : index
    %c0_75 = arith.constant 0 : index
    %125 = vector.load %arg10[%c0_72, %c6_73, %c0_74, %c0_75] : memref<1x10x3x256xf32, #tpu.memory_space<vmem>>, vector<1x1x3x256xf32>
    %126 = vector.shape_cast %125 : vector<1x1x3x256xf32> to vector<3x256xf32>
    %127 = vector.shape_cast %124 : vector<3x256xf32> to vector<1x1x3x256xf32>
    tpu.vector_store %arg10[%c0_72, %c6_73, %c0_74, %c0_75], %127 {strides = array<i32>} : memref<1x10x3x256xf32, #tpu.memory_space<vmem>>, vector<1x1x3x256xf32>,
    %128 = arith.addf %115, %119 : vector<3x256xf32>
    %129 = vector.extract_strided_slice %23 {offsets = [7, 0], sizes = [1, 256], strides = [1, 1]} : vector<10x256xf32> to vector<1x256xf32>
    %130 = vector.extract_strided_slice %7 {offsets = [21, 0], sizes = [3, 256], strides = [1, 1]} : vector<27x256xf32> to vector<3x256xf32>
    %131 = vector.broadcast %129 : vector<1x256xf32> to vector<3x256xf32>
    %132 = arith.mulf %130, %131 : vector<3x256xf32>
    %c0_76 = arith.constant 0 : index
    %c7 = arith.constant 7 : index
    %c0_77 = arith.constant 0 : index
    %c0_78 = arith.constant 0 : index
    %133 = vector.load %arg9[%c0_76, %c7, %c0_77, %c0_78] : memref<1x10x3x256xf32, #tpu.memory_space<vmem>>, vector<1x1x3x256xf32>
    %134 = vector.shape_cast %133 : vector<1x1x3x256xf32> to vector<3x256xf32>
    %135 = vector.shape_cast %132 : vector<3x256xf32> to vector<1x1x3x256xf32>
    tpu.vector_store %arg9[%c0_76, %c7, %c0_77, %c0_78], %135 {strides = array<i32>} : memref<1x10x3x256xf32, #tpu.memory_space<vmem>>, vector<1x1x3x256xf32>,
    %136 = vector.shape_cast %129 : vector<1x256xf32> to vector<1x256xf32>
    %137 = vector.broadcast %136 : vector<1x256xf32> to vector<3x256xf32>
    %c0_79 = arith.constant 0 : index
    %c7_80 = arith.constant 7 : index
    %c0_81 = arith.constant 0 : index
    %c0_82 = arith.constant 0 : index
    %138 = vector.load %arg10[%c0_79, %c7_80, %c0_81, %c0_82] : memref<1x10x3x256xf32, #tpu.memory_space<vmem>>, vector<1x1x3x256xf32>
    %139 = vector.shape_cast %138 : vector<1x1x3x256xf32> to vector<3x256xf32>
    %140 = vector.shape_cast %137 : vector<3x256xf32> to vector<1x1x3x256xf32>
    tpu.vector_store %arg10[%c0_79, %c7_80, %c0_81, %c0_82], %140 {strides = array<i32>} : memref<1x10x3x256xf32, #tpu.memory_space<vmem>>, vector<1x1x3x256xf32>,
    %141 = arith.addf %128, %132 : vector<3x256xf32>
    %142 = vector.extract_strided_slice %23 {offsets = [8, 0], sizes = [1, 256], strides = [1, 1]} : vector<10x256xf32> to vector<1x256xf32>
    %143 = vector.extract_strided_slice %7 {offsets = [24, 0], sizes = [3, 256], strides = [1, 1]} : vector<27x256xf32> to vector<3x256xf32>
    %144 = vector.broadcast %142 : vector<1x256xf32> to vector<3x256xf32>
    %145 = arith.mulf %143, %144 : vector<3x256xf32>
    %c0_83 = arith.constant 0 : index
    %c8 = arith.constant 8 : index
    %c0_84 = arith.constant 0 : index
    %c0_85 = arith.constant 0 : index
    %146 = vector.load %arg9[%c0_83, %c8, %c0_84, %c0_85] : memref<1x10x3x256xf32, #tpu.memory_space<vmem>>, vector<1x1x3x256xf32>
    %147 = vector.shape_cast %146 : vector<1x1x3x256xf32> to vector<3x256xf32>
    %148 = vector.shape_cast %145 : vector<3x256xf32> to vector<1x1x3x256xf32>
    tpu.vector_store %arg9[%c0_83, %c8, %c0_84, %c0_85], %148 {strides = array<i32>} : memref<1x10x3x256xf32, #tpu.memory_space<vmem>>, vector<1x1x3x256xf32>,
    %149 = vector.shape_cast %142 : vector<1x256xf32> to vector<1x256xf32>
    %150 = vector.broadcast %149 : vector<1x256xf32> to vector<3x256xf32>
    %c0_86 = arith.constant 0 : index
    %c8_87 = arith.constant 8 : index
    %c0_88 = arith.constant 0 : index
    %c0_89 = arith.constant 0 : index
    %151 = vector.load %arg10[%c0_86, %c8_87, %c0_88, %c0_89] : memref<1x10x3x256xf32, #tpu.memory_space<vmem>>, vector<1x1x3x256xf32>
    %152 = vector.shape_cast %151 : vector<1x1x3x256xf32> to vector<3x256xf32>
    %153 = vector.shape_cast %150 : vector<3x256xf32> to vector<1x1x3x256xf32>
    tpu.vector_store %arg10[%c0_86, %c8_87, %c0_88, %c0_89], %153 {strides = array<i32>} : memref<1x10x3x256xf32, #tpu.memory_space<vmem>>, vector<1x1x3x256xf32>,
    %154 = arith.addf %141, %145 : vector<3x256xf32>
    %c0_90 = arith.constant 0 : index
    %c0_91 = arith.constant 0 : index
    %c0_92 = arith.constant 0 : index
    %155 = vector.load %arg8[%c0_90, %c0_91, %c0_92] : memref<1x3x256xf32, #tpu.memory_space<vmem>>, vector<1x3x256xf32>
    %156 = vector.shape_cast %155 : vector<1x3x256xf32> to vector<3x256xf32>
    %157 = vector.shape_cast %154 : vector<3x256xf32> to vector<1x3x256xf32>
    tpu.vector_store %arg8[%c0_90, %c0_91, %c0_92], %157 {strides = array<i32>} : memref<1x3x256xf32, #tpu.memory_space<vmem>>, vector<1x3x256xf32>,
    %c0_93 = arith.constant 0 : index
    %c0_94 = arith.constant 0 : index
    %c0_95 = arith.constant 0 : index
    %158 = vector.load %arg11[%c0_93, %c0_94, %c0_95] : memref<1x27x256xf32, #tpu.memory_space<vmem>>, vector<1x27x256xf32>
    %159 = vector.shape_cast %158 : vector<1x27x256xf32> to vector<27x256xf32>
    %160 = vector.shape_cast %7 : vector<27x256xf32> to vector<1x27x256xf32>
    tpu.vector_store %arg11[%c0_93, %c0_94, %c0_95], %160 {strides = array<i32>} : memref<1x27x256xf32, #tpu.memory_space<vmem>>, vector<1x27x256xf32>,
    return
  }
  func.func @transform_0(%arg0: i32) -> (i32, i32) {
    %c0_i32 = arith.constant 0 : i32
    %c0_i32_0 = arith.constant 0 : i32
    %c0_i32_1 = arith.constant 0 : i32
    return %c0_i32, %c0_i32_0 : i32, i32
  }
  func.func @transform_1(%arg0: i32) -> (i32, i32) {
    %c0_i32 = arith.constant 0 : i32
    %c0_i32_0 = arith.constant 0 : i32
    %c0_i32_1 = arith.constant 0 : i32
    return %c0_i32, %c0_i32_0 : i32, i32
  }
  func.func @transform_2(%arg0: i32) -> (i32, i32) {
    %c0_i32 = arith.constant 0 : i32
    %c0_i32_0 = arith.constant 0 : i32
    %c0_i32_1 = arith.constant 0 : i32
    return %c0_i32, %c0_i32_0 : i32, i32
  }
  func.func @transform_3(%arg0: i32) -> (i32, i32) {
    %c0_i32 = arith.constant 0 : i32
    %c0_i32_0 = arith.constant 0 : i32
    %c0_i32_1 = arith.constant 0 : i32
    return %c0_i32, %c0_i32_0 : i32, i32
  }
  func.func @transform_4(%arg0: i32) -> (i32, i32, i32) {
    %c0_i32 = arith.constant 0 : i32
    %c0_i32_0 = arith.constant 0 : i32
    %c0_i32_1 = arith.constant 0 : i32
    return %arg0, %c0_i32, %c0_i32_0 : i32, i32, i32
  }
  func.func @transform_5(%arg0: i32) -> (i32, i32, i32) {
    %c0_i32 = arith.constant 0 : i32
    %c0_i32_0 = arith.constant 0 : i32
    %c0_i32_1 = arith.constant 0 : i32
    return %arg0, %c0_i32, %c0_i32_0 : i32, i32, i32
  }
  func.func @transform_6(%arg0: i32) -> (i32, i32, i32) {
    %c0_i32 = arith.constant 0 : i32
    %c0_i32_0 = arith.constant 0 : i32
    %c0_i32_1 = arith.constant 0 : i32
    return %arg0, %c0_i32, %c0_i32_0 : i32, i32, i32
  }
  func.func @transform_7(%arg0: i32) -> (i32, i32, i32) {
    %c0_i32 = arith.constant 0 : i32
    %c0_i32_0 = arith.constant 0 : i32
    %c0_i32_1 = arith.constant 0 : i32
    return %arg0, %c0_i32, %c0_i32_0 : i32, i32, i32
  }
  func.func @transform_8(%arg0: i32) -> (i32, i32, i32, i32) {
    %c0_i32 = arith.constant 0 : i32
    %c0_i32_0 = arith.constant 0 : i32
    %c0_i32_1 = arith.constant 0 : i32
    %c0_i32_2 = arith.constant 0 : i32
    return %arg0, %c0_i32, %c0_i32_0, %c0_i32_1 : i32, i32, i32, i32
  }
  func.func @transform_9(%arg0: i32) -> (i32, i32, i32, i32) {
    %c0_i32 = arith.constant 0 : i32
    %c0_i32_0 = arith.constant 0 : i32
    %c0_i32_1 = arith.constant 0 : i32
    %c0_i32_2 = arith.constant 0 : i32
    return %arg0, %c0_i32, %c0_i32_0, %c0_i32_1 : i32, i32, i32, i32
  }
  func.func @transform_10(%arg0: i32) -> (i32, i32, i32) {
    %c0_i32 = arith.constant 0 : i32
    %c0_i32_0 = arith.constant 0 : i32
    %c0_i32_1 = arith.constant 0 : i32
    return %arg0, %c0_i32, %c0_i32_0 : i32, i32, i32
  }
}

</mosaic_0001>

<llo_original>
// kernel: forward.10
$region0: #{forward.10}
  #allocation0 [shape = 'u32[]', space=smem, size = 0x4, offset = 0x4, fixed_abs, tag = 'smem constant byte address 0x4 - core index']
  #allocation1 [shape = 'u32[72,128]{1,0:T(1,128)}', space=vmem, size = 0x9000, scoped, tag = 'internal scratch']
  %s0 = inlined_call_operand.vmem [shape: bf16[8,147], index: 0, kind: input, shape index: {}]
  %s1 = inlined_call_operand.vmem [shape: bf16[2,147,256], index: 1, kind: input, shape index: {}]
  %s2 = inlined_call_operand.vmem [shape: f32[2,8,256], index: 2, kind: output, shape index: {}]
  %s3 = sld [smem:[#allocation0]]
  $region41: #{forward.10} parent=0
    _
  %s5 = ssub.s32 1, %s3
  %s6 = scalar_select 0, %s5, %s3
  loop: start=0, step=1, limit=4
  $region2: #{forward.10} parent=0 // loop_pre_header
    _
  $region3: #{forward.10} parent=0 // loop_header
    %s8 = sphi 0, %s12
    %p9 = scmp.ge.s32.totalorder %s8, 4
    %s16 = sphi 0, %s16
    %s18 = sphi 0, %s16
    %s19 = sphi 0, %s18
    %s33 = sphi 0, %s19
    %s39 = sphi 0, %s41
    %s42 = sphi 0, %s39
    %s43 = sphi 0, %s42
    %s59 = sphi 0, %s43
    %s65 = sphi 0, %s67
    %s68 = sphi 0, %s65
    %s69 = sphi 0, %s68
    %s85 = sphi 0, %s69
  $region4: #{forward.10} parent=0 // loop_header_branch
    %11 = sbr.rel (%p9) target = $region8
  $region5: #{forward.10} parent=0 // loop_body
    %s13 = ssub.s32 %s8, 1
    %s14 = ssub.s32 %s8, 2
    %s15 = sadd.s32 %s8, 1
    %s17 = sadd.s32 %s16, 1
    %p20 = scmp.eq.s32.totalorder %s8, 1
    %p21 = scmp.ne.s32.totalorder %s16, %s18
    %p22 = scmp.eq.s32.totalorder %s8, 0
    %p23 = por %p21, %p22
    %p24 = scmp.ne.s32.totalorder %s16, %s18
    %p25 = scmp.eq.s32.totalorder %s13, 1
    %p26 = por %p24, %p25
    %p27 = scmp.ne.s32.totalorder %s18, %s19
    %p28 = scmp.eq.s32.totalorder %s13, 0
    %p29 = por %p27, %p28
    %p30 = scmp.ne.s32.totalorder %s18, %s19
    %p31 = scmp.eq.s32.totalorder %s14, 1
    %p32 = por %p30, %p31
    %p34 = scmp.ne.s32.totalorder %s19, %s33
    %p35 = scmp.eq.s32.totalorder %s14, 0
    %p36 = por %p34, %p35
    %s37 = ssub.s32 %s8, %s15
    %p38 = scmp.eq.s32.totalorder %s37, 0
    %s40 = sadd.s32 %s39, 1
    %s41 = scalar_select %p38, %s39, %s40
    %p44 = pneg %p38
    %p45 = scmp.eq.s32.totalorder %s8, 1
    %p46 = por %p44, %p45
    %p47 = scmp.ne.s32.totalorder %s39, %s42
    %p48 = scmp.eq.s32.totalorder %s8, 0
    %p49 = por %p47, %p48
    %p50 = scmp.ne.s32.totalorder %s39, %s42
    %p51 = scmp.eq.s32.totalorder %s13, 1
    %p52 = por %p50, %p51
    %p53 = scmp.ne.s32.totalorder %s42, %s43
    %p54 = scmp.eq.s32.totalorder %s13, 0
    %p55 = por %p53, %p54
    %p56 = scmp.ne.s32.totalorder %s42, %s43
    %p57 = scmp.eq.s32.totalorder %s14, 1
    %p58 = por %p56, %p57
    %p60 = scmp.ne.s32.totalorder %s43, %s59
    %p61 = scmp.eq.s32.totalorder %s14, 0
    %p62 = por %p60, %p61
    %s63 = ssub.s32 %s8, %s15
    %p64 = scmp.eq.s32.totalorder %s63, 0
    %s66 = sadd.s32 %s65, 1
    %s67 = scalar_select %p64, %s65, %s66
    %p70 = pneg %p64
    %p71 = scmp.eq.s32.totalorder %s8, 1
    %p72 = por %p70, %p71
    %p73 = scmp.ne.s32.totalorder %s65, %s68
    %p74 = scmp.eq.s32.totalorder %s8, 0
    %p75 = por %p73, %p74
    %p76 = scmp.ne.s32.totalorder %s65, %s68
    %p77 = scmp.eq.s32.totalorder %s13, 1
    %p78 = por %p76, %p77
    %p79 = scmp.ne.s32.totalorder %s68, %s69
    %p80 = scmp.eq.s32.totalorder %s13, 0
    %p81 = por %p79, %p80
    %p82 = scmp.ne.s32.totalorder %s68, %s69
    %p83 = scmp.eq.s32.totalorder %s14, 1
    %p84 = por %p82, %p83
    %p86 = scmp.ne.s32.totalorder %s69, %s85
    %p87 = scmp.eq.s32.totalorder %s14, 0
    %p88 = por %p86, %p87
    %p89 = scmp.le.s32.totalorder 1, %s8
    %p90 = scmp.lt.s32.totalorder %s8, 3
    %p91 = pnand %p89, %p90
    %p92 = pneg %p91
    // Predicated region
    $region9: #{forward.10} parent=5 // pred_check
      _
    $region10: #{forward.10} parent=5 // pred_check_branch
      %94 = sbr.rel (%p91) target = $region12
    $region11: #{forward.10} parent=5 // pred_region
      %s95 = ssub.s32 %s8, 1
      // Predicated region
      $region13: #{forward.10} parent=11 // pred_check
        %p96 = pneg %p29
      $region14: #{forward.10} parent=11 // pred_check_branch
        %98 = sbr.rel (%p96) target = $region16
      $region15: #{forward.10} parent=11 // pred_region
        _
      $region16: #{forward.10} parent=11 // pred_fallthru
        _
    $region12: #{forward.10} parent=5 // pred_fallthru
      _
    %p99 = scmp.lt.s32.totalorder %s8, 2
    // Predicated region
    $region17: #{forward.10} parent=5 // pred_check
      %p100 = pneg %p99
    $region18: #{forward.10} parent=5 // pred_check_branch
      %102 = sbr.rel (%p100) target = $region20
    $region19: #{forward.10} parent=5 // pred_region
      // Predicated region
      $region21: #{forward.10} parent=19 // pred_check
        %p103 = pneg %p49
      $region22: #{forward.10} parent=19 // pred_check_branch
        %105 = sbr.rel (%p103) target = $region24
      $region23: #{forward.10} parent=19 // pred_region
        %p106 = scmp.lt.s32.totalorder %s8, 1
        %s107 = scalar_select %p106, %s8, 1
        %s108 = smul.addr %s107, 38
        %s109 = smul.addr %s108, 4
        %s110 = scalar_lea.vmem %s1, %s109
      $region24: #{forward.10} parent=19 // pred_fallthru
        _
    $region20: #{forward.10} parent=5 // pred_fallthru
      _
    %p111 = scmp.le.s32.totalorder 1, %s8
    %p112 = scmp.lt.s32.totalorder %s8, 3
    %p113 = pnand %p111, %p112
    %p114 = pneg %p113
    // Predicated region
    $region25: #{forward.10} parent=5 // pred_check
      _
    $region26: #{forward.10} parent=5 // pred_check_branch
      %116 = sbr.rel (%p113) target = $region28
    $region27: #{forward.10} parent=5 // pred_region
      %s117 = ssub.s32 %s8, 1
      %p118 = pneg %p29
      %p119 = pneg %p26
      %p120 = scmp.lt.s32.totalorder %s13, 1
      %s121 = scalar_select %p120, %s13, 1
      %s122 = smul.addr %s121, 38
      %s123 = smul.addr %s122, 4
      %s124 = scalar_lea.vmem %s1, %s123
      %p125 = pneg %p55
      %p126 = pneg %p52
      %p127 = pneg %p81
      %p128 = pneg %p78
      %p129 = scmp.lt.s32.totalorder %s13, 1
      %s130 = scalar_select %p129, %s13, 1
      %s131 = smul.addr %s130, 2
      %s132 = smul.addr %s131, 8
      %s133 = scalar_lea.vmem %s2, %s132
      %p134 = scmp.lt.s32.totalorder %s13, 1
      %s135 = scalar_select %p134, %s13, 1
      %s136 = smul.addr %s135, 38
      %s137 = smul.addr %s136, 4
      %s138 = scalar_lea.vmem %s1, %s137
      %p139 = scmp.lt.s32.totalorder %s13, 1
      %s140 = scalar_select %p139, %s13, 1
      %s141 = smul.addr %s140, 2
      %s142 = smul.addr %s141, 8
      %s143 = scalar_lea.vmem %s2, %s142
      %v145 = vld [vmem:[%s0] sm:$0xff]
      %v146 = vld [vmem:[%s138] sm:$0xff]
      %v147 = vld [vmem:[%s138 + $0x8] sm:$0xff]
      %v148 = vld [vmem:[%s138 + $0x10] sm:$0xff]
      %v149 = vld [vmem:[%s138 + $0x18] sm:$0xff]
      %v150 = vld [vmem:[%s138 + $0x20] sm:$0xff]
      %v151 = vld [vmem:[%s138 + $0x28] sm:$0xff]
      %v152 = vld [vmem:[%s138 + $0x30] sm:$0xff]
      %v153 = vld [vmem:[%s138 + $0x38] sm:$0xff]
      %v154 = vld [vmem:[%s138 + $0x40] sm:$0xff]
      %v155 = vld [vmem:[%s138 + $0x48] sm:$0xff]
      %v156 = vld [vmem:[%s138 + $0x50] sm:$0xff]
      %v157 = vld [vmem:[%s138 + $0x58] sm:$0xff]
      %v158 = vld [vmem:[%s138 + $0x60] sm:$0xff]
      %v159 = vld [vmem:[%s138 + $0x68] sm:$0xff]
      %v160 = vld [vmem:[%s138 + $0x70] sm:$0xff]
      %v161 = vld [vmem:[%s138 + $0x78] sm:$0xff]
      %v162 = vld [vmem:[%s138 + $0x80] sm:$0xff]
      %v163 = vld [vmem:[%s138 + $0x88] sm:$0xff]
      %v164 = vld [vmem:[%s138 + $0x90] sm:$0x33]
      %v166 = vunpack.c.l.b16 %v145
      %v167 = vunpack.c.h.b16 %v145
      %v168 = vpack.c.b16 %v166, %v166
      %v169 = vpack.c.b16 %v167, %v167
      %v190 = vunpack.c.l.b16 %v146
      %v191 = vunpack.c.h.b16 %v146
      %v192 = vunpack.c.l.b16 %v147
      %v193 = vunpack.c.h.b16 %v147
      %v194 = vunpack.c.l.b16 %v148
      %v195 = vunpack.c.h.b16 %v148
      %v196 = vunpack.c.l.b16 %v149
      %v197 = vunpack.c.h.b16 %v149
      %v198 = vunpack.c.l.b16 %v150
      %v199 = vunpack.c.h.b16 %v150
      %v200 = vunpack.c.l.b16 %v151
      %v201 = vunpack.c.h.b16 %v151
      %v202 = vunpack.c.l.b16 %v152
      %v203 = vunpack.c.h.b16 %v152
      %v204 = vunpack.c.l.b16 %v153
      %v205 = vunpack.c.h.b16 %v153
      %v206 = vunpack.c.l.b16 %v154
      %v207 = vunpack.c.h.b16 %v154
      %v208 = vunpack.c.l.b16 %v155
      %v209 = vunpack.c.h.b16 %v155
      %v210 = vunpack.c.l.b16 %v156
      %v211 = vunpack.c.h.b16 %v156
      %v212 = vunpack.c.l.b16 %v157
      %v213 = vunpack.c.h.b16 %v157
      %v214 = vunpack.c.l.b16 %v158
      %v215 = vunpack.c.h.b16 %v158
      %v216 = vunpack.c.l.b16 %v159
      %v217 = vunpack.c.h.b16 %v159
      %v218 = vunpack.c.l.b16 %v160
      %v219 = vunpack.c.h.b16 %v160
      %v220 = vunpack.c.l.b16 %v161
      %v221 = vunpack.c.h.b16 %v161
      %v222 = vunpack.c.l.b16 %v162
      %v223 = vunpack.c.h.b16 %v162
      %v224 = vunpack.c.l.b16 %v163
      %v225 = vunpack.c.h.b16 %v163
      %v226 = vunpack.c.l.b16 %v164
      %v227 = vunpack.c.h.b16 %v164
      %v228 = vpack.c.b16 %v192, %v190
      %v229 = vpack.c.b16 %v193, %v191
      %v230 = vpack.c.b16 %v196, %v194
      %v231 = vpack.c.b16 %v197, %v195
      %v232 = vpack.c.b16 %v200, %v198
      %v233 = vpack.c.b16 %v201, %v199
      %v234 = vpack.c.b16 %v204, %v202
      %v235 = vpack.c.b16 %v205, %v203
      %v236 = vpack.c.b16 %v208, %v206
      %v237 = vpack.c.b16 %v209, %v207
      %v238 = vpack.c.b16 %v212, %v210
      %v239 = vpack.c.b16 %v213, %v211
      %v240 = vpack.c.b16 %v216, %v214
      %v241 = vpack.c.b16 %v217, %v215
      %v242 = vpack.c.b16 %v220, %v218
      %v243 = vpack.c.b16 %v221, %v219
      %v244 = vpack.c.b16 %v224, %v222
      %v245 = vpack.c.b16 %v225, %v223
      %v246 = vpack.c.b16 %v226, %v226
      %v247 = vpack.c.b16 %v227, %v227
      %vm266 = vcmask 154624
      %v268 = vsel %vm266, %v169, 0
      %vm270 = vcmask 1040384
      %vm271 = vcmask 1041408
      %v272 = vsel %vm270, 4294967295, 65535
      %v273 = vsel %vm271, %v272, 0
      %v275 = vand.u32 %v246, %v273
      %v278 = vand.u32 %v247, %v273
      %280 = vmatpush.bf16.msra.mxu0 %v242
      %281 = vmatpush.bf16.msra.mxu0 %v240
      %282 = vmatpush.bf16.msra.mxu0 %v238
      %283 = vmatpush.bf16.msra.mxu0 %v236
      %284 = vmatpush.bf16.msra.mxu0 %v234
      %285 = vmatpush.bf16.msra.mxu0 %v232
      %286 = vmatpush.bf16.msra.mxu0 %v230
      %287 = vmatpush.bf16.msra.mxu0 %v228
      %288 = vmatmul.bf16.gmra.mxu0 %v168
      %v289 = vpop.f32.mrf.mxu0
      %v290 = vadd.f32 0.0, %v289
      %v291 = vpop.f32.mrf.mxu0
      %292 = vdwg.mxu0
      %293 = vmatpush.bf16.msra.mxu0 0
      %294 = vmatpush.bf16.msra.mxu0 0
      %295 = vmatpush.bf16.msra.mxu0 0
      %296 = vmatpush.bf16.msra.mxu0 0
      %297 = vmatpush.bf16.msra.mxu0 0
      %298 = vmatpush.bf16.msra.mxu0 0
      %299 = vmatpush.bf16.msra.mxu0 %v275
      %300 = vmatpush.bf16.msra.mxu0 %v244
      %301 = vmatmul.bf16.gmra.mxu0 %v268
      %v302 = vpop.f32.mrf.mxu0
      %v303 = vadd.f32 %v290, %v302
      %v304 = vpop.f32.mrf.mxu0
      %305 = vdwg.mxu0
      %306 = vmatpush.bf16.msra.mxu0 %v243
      %307 = vmatpush.bf16.msra.mxu0 %v241
      %308 = vmatpush.bf16.msra.mxu0 %v239
      %309 = vmatpush.bf16.msra.mxu0 %v237
      %310 = vmatpush.bf16.msra.mxu0 %v235
      %311 = vmatpush.bf16.msra.mxu0 %v233
      %312 = vmatpush.bf16.msra.mxu0 %v231
      %313 = vmatpush.bf16.msra.mxu0 %v229
      %314 = vmatmul.bf16.gmra.mxu0 %v168
      %v315 = vpop.f32.mrf.mxu0
      %v316 = vadd.f32 0.0, %v315
      %v317 = vpop.f32.mrf.mxu0
      %318 = vdwg.mxu0
      %319 = vmatpush.bf16.msra.mxu0 0
      %320 = vmatpush.bf16.msra.mxu0 0
      %321 = vmatpush.bf16.msra.mxu0 0
      %322 = vmatpush.bf16.msra.mxu0 0
      %323 = vmatpush.bf16.msra.mxu0 0
      %324 = vmatpush.bf16.msra.mxu0 0
      %325 = vmatpush.bf16.msra.mxu0 %v278
      %326 = vmatpush.bf16.msra.mxu0 %v245
      %327 = vmatmul.bf16.gmra.mxu0 %v268
      %v328 = vpop.f32.mrf.mxu0
      %v329 = vadd.f32 %v316, %v328
      %v330 = vpop.f32.mrf.mxu0
      %331 = vdwg.mxu0
      %v332 = vadd.f32 %v303, %v329
      %333 = vadd.xlane.f32.xlu0 %v332
      %v334 = vpop.xlane.xlu0 %333
      %v335 = vrcp.pop 256.0
      %v336 = vmul.f32 256.0, %v335
      %v337 = vsub.f32 1.0, %v336
      %v338 = vmul.f32 %v335, %v337
      %v339 = vadd.f32 %v335, %v338
      %vm340 = vweird.f32 %v335
      %v341 = vsel %vm340, %v335, %v339
      %v342 = vmul.f32 %v334, %v341
      %v343 = vsub.f32 %v303, %v342
      %v344 = vsub.f32 %v329, %v342
      %v345 = vmul.f32 %v343, %v343
      %v346 = vmul.f32 %v344, %v344
      %v347 = vadd.f32 %v345, %v346
      %348 = vadd.xlane.f32.xlu0 %v347
      %v349 = vpop.xlane.xlu0 %348
      %v350 = vmul.f32 %v349, %v341
      %v351 = vadd.f32 %v350, 1e-05
      %v352 = vrsqrt.pop %v351
      %v353 = vmul.f32 %v352, %v351
      %v354 = vmul.f32 %v353, %v352
      %v355 = vmul.f32 0.5, %v354
      %v356 = vsub.f32 1.5, %v355
      %v357 = vmul.f32 %v352, %v356
      %vm358 = vweird.f32 %v351
      %vm359 = vweird.f32 %v352
      %vm360 = vmor %vm358, %vm359
      %v361 = vsel %vm360, %v352, %v357
      %v362 = vmul.f32 %v343, %v361
      %v363 = vmul.f32 %v344, %v361
      %v364 = vmax.f32 %v362, 0.0
      %v365 = vmax.f32 %v363, 0.0
      %366 = vst [vmem:[%s143] sm:$0xff] %v364
      %367 = vst [vmem:[%s143 + $0x8] sm:$0xff] %v365
      %p368 = scmp.lt.s32.totalorder %s13, 1
      %s369 = scalar_select %p368, %s13, 1
      %s370 = smul.addr %s369, 2
      %s371 = smul.addr %s370, 8
      %s372 = scalar_lea.vmem %s2, %s371
      // Predicated region
      $region29: #{forward.10} parent=27 // pred_check
        %p373 = pneg %p78
      $region30: #{forward.10} parent=27 // pred_check_branch
        %375 = sbr.rel (%p373) target = $region32
      $region31: #{forward.10} parent=27 // pred_region
        _
      $region32: #{forward.10} parent=27 // pred_fallthru
        _
    $region28: #{forward.10} parent=5 // pred_fallthru
      _
    %p376 = scmp.le.s32.totalorder 2, %s8
    // Predicated region
    $region33: #{forward.10} parent=5 // pred_check
      %p377 = pneg %p376
    $region34: #{forward.10} parent=5 // pred_check_branch
      %379 = sbr.rel (%p377) target = $region36
    $region35: #{forward.10} parent=5 // pred_region
      %s380 = ssub.s32 %s8, 2
      // Predicated region
      $region37: #{forward.10} parent=35 // pred_check
        %p381 = pneg %p84
      $region38: #{forward.10} parent=35 // pred_check_branch
        %383 = sbr.rel (%p381) target = $region40
      $region39: #{forward.10} parent=35 // pred_region
        %p384 = scmp.lt.s32.totalorder %s14, 1
        %s385 = scalar_select %p384, %s14, 1
        %s386 = smul.addr %s385, 2
        %s387 = smul.addr %s386, 8
        %s388 = scalar_lea.vmem %s2, %s387
      $region40: #{forward.10} parent=35 // pred_fallthru
        _
    $region36: #{forward.10} parent=5 // pred_fallthru
      _
  $region6: #{forward.10} parent=0 // loop_footer
    %s12 = sadd.s32 1, %s8
  $region7: #{forward.10} parent=0 // loop_footer_branch
    %7 = sbr.rel target = $region3
  $region8: #{forward.10} parent=0 // loop_exit
    _

// kernel: forward.11
$region0: #{forward.11}
  #allocation0 [shape = 'u32[]', space=smem, size = 0x4, offset = 0x4, fixed_abs, tag = 'smem constant byte address 0x4 - core index']
  #allocation1 [shape = 'u32[72,128]{1,0:T(1,128)}', space=vmem, size = 0x9000, scoped, tag = 'internal scratch']
  %s0 = inlined_call_operand.vmem [shape: bf16[16,72], index: 0, kind: input, shape index: {}]
  %s1 = inlined_call_operand.vmem [shape: bf16[2,72,64], index: 1, kind: input, shape index: {}]
  %s2 = inlined_call_operand.vmem [shape: f32[2,16,64], index: 2, kind: output, shape index: {}]
  %s3 = sld [smem:[#allocation0]]
  $region41: #{forward.11} parent=0
    _
  %s5 = ssub.s32 1, %s3
  %s6 = scalar_select 0, %s5, %s3
  loop: start=0, step=1, limit=4
  $region2: #{forward.11} parent=0 // loop_pre_header
    _
  $region3: #{forward.11} parent=0 // loop_header
    %s8 = sphi 0, %s12
    %p9 = scmp.ge.s32.totalorder %s8, 4
    %s16 = sphi 0, %s16
    %s18 = sphi 0, %s16
    %s19 = sphi 0, %s18
    %s33 = sphi 0, %s19
    %s39 = sphi 0, %s41
    %s42 = sphi 0, %s39
    %s43 = sphi 0, %s42
    %s59 = sphi 0, %s43
    %s65 = sphi 0, %s67
    %s68 = sphi 0, %s65
    %s69 = sphi 0, %s68
    %s85 = sphi 0, %s69
  $region4: #{forward.11} parent=0 // loop_header_branch
    %11 = sbr.rel (%p9) target = $region8
  $region5: #{forward.11} parent=0 // loop_body
    %s13 = ssub.s32 %s8, 1
    %s14 = ssub.s32 %s8, 2
    %s15 = sadd.s32 %s8, 1
    %s17 = sadd.s32 %s16, 1
    %p20 = scmp.eq.s32.totalorder %s8, 1
    %p21 = scmp.ne.s32.totalorder %s16, %s18
    %p22 = scmp.eq.s32.totalorder %s8, 0
    %p23 = por %p21, %p22
    %p24 = scmp.ne.s32.totalorder %s16, %s18
    %p25 = scmp.eq.s32.totalorder %s13, 1
    %p26 = por %p24, %p25
    %p27 = scmp.ne.s32.totalorder %s18, %s19
    %p28 = scmp.eq.s32.totalorder %s13, 0
    %p29 = por %p27, %p28
    %p30 = scmp.ne.s32.totalorder %s18, %s19
    %p31 = scmp.eq.s32.totalorder %s14, 1
    %p32 = por %p30, %p31
    %p34 = scmp.ne.s32.totalorder %s19, %s33
    %p35 = scmp.eq.s32.totalorder %s14, 0
    %p36 = por %p34, %p35
    %s37 = ssub.s32 %s8, %s15
    %p38 = scmp.eq.s32.totalorder %s37, 0
    %s40 = sadd.s32 %s39, 1
    %s41 = scalar_select %p38, %s39, %s40
    %p44 = pneg %p38
    %p45 = scmp.eq.s32.totalorder %s8, 1
    %p46 = por %p44, %p45
    %p47 = scmp.ne.s32.totalorder %s39, %s42
    %p48 = scmp.eq.s32.totalorder %s8, 0
    %p49 = por %p47, %p48
    %p50 = scmp.ne.s32.totalorder %s39, %s42
    %p51 = scmp.eq.s32.totalorder %s13, 1
    %p52 = por %p50, %p51
    %p53 = scmp.ne.s32.totalorder %s42, %s43
    %p54 = scmp.eq.s32.totalorder %s13, 0
    %p55 = por %p53, %p54
    %p56 = scmp.ne.s32.totalorder %s42, %s43
    %p57 = scmp.eq.s32.totalorder %s14, 1
    %p58 = por %p56, %p57
    %p60 = scmp.ne.s32.totalorder %s43, %s59
    %p61 = scmp.eq.s32.totalorder %s14, 0
    %p62 = por %p60, %p61
    %s63 = ssub.s32 %s8, %s15
    %p64 = scmp.eq.s32.totalorder %s63, 0
    %s66 = sadd.s32 %s65, 1
    %s67 = scalar_select %p64, %s65, %s66
    %p70 = pneg %p64
    %p71 = scmp.eq.s32.totalorder %s8, 1
    %p72 = por %p70, %p71
    %p73 = scmp.ne.s32.totalorder %s65, %s68
    %p74 = scmp.eq.s32.totalorder %s8, 0
    %p75 = por %p73, %p74
    %p76 = scmp.ne.s32.totalorder %s65, %s68
    %p77 = scmp.eq.s32.totalorder %s13, 1
    %p78 = por %p76, %p77
    %p79 = scmp.ne.s32.totalorder %s68, %s69
    %p80 = scmp.eq.s32.totalorder %s13, 0
    %p81 = por %p79, %p80
    %p82 = scmp.ne.s32.totalorder %s68, %s69
    %p83 = scmp.eq.s32.totalorder %s14, 1
    %p84 = por %p82, %p83
    %p86 = scmp.ne.s32.totalorder %s69, %s85
    %p87 = scmp.eq.s32.totalorder %s14, 0
    %p88 = por %p86, %p87
    %p89 = scmp.le.s32.totalorder 1, %s8
    %p90 = scmp.lt.s32.totalorder %s8, 3
    %p91 = pnand %p89, %p90
    %p92 = pneg %p91
    // Predicated region
    $region9: #{forward.11} parent=5 // pred_check
      _
    $region10: #{forward.11} parent=5 // pred_check_branch
      %94 = sbr.rel (%p91) target = $region12
    $region11: #{forward.11} parent=5 // pred_region
      %s95 = ssub.s32 %s8, 1
      // Predicated region
      $region13: #{forward.11} parent=11 // pred_check
        %p96 = pneg %p29
      $region14: #{forward.11} parent=11 // pred_check_branch
        %98 = sbr.rel (%p96) target = $region16
      $region15: #{forward.11} parent=11 // pred_region
        _
      $region16: #{forward.11} parent=11 // pred_fallthru
        _
    $region12: #{forward.11} parent=5 // pred_fallthru
      _
    %p99 = scmp.lt.s32.totalorder %s8, 2
    // Predicated region
    $region17: #{forward.11} parent=5 // pred_check
      %p100 = pneg %p99
    $region18: #{forward.11} parent=5 // pred_check_branch
      %102 = sbr.rel (%p100) target = $region20
    $region19: #{forward.11} parent=5 // pred_region
      // Predicated region
      $region21: #{forward.11} parent=19 // pred_check
        %p103 = pneg %p49
      $region22: #{forward.11} parent=19 // pred_check_branch
        %105 = sbr.rel (%p103) target = $region24
      $region23: #{forward.11} parent=19 // pred_region
        %p106 = scmp.lt.s32.totalorder %s8, 1
        %s107 = scalar_select %p106, %s8, 1
        %s108 = smul.addr %s107, 9
        %s109 = smul.addr %s108, 4
        %s110 = scalar_lea.vmem %s1, %s109
      $region24: #{forward.11} parent=19 // pred_fallthru
        _
    $region20: #{forward.11} parent=5 // pred_fallthru
      _
    %p111 = scmp.le.s32.totalorder 1, %s8
    %p112 = scmp.lt.s32.totalorder %s8, 3
    %p113 = pnand %p111, %p112
    %p114 = pneg %p113
    // Predicated region
    $region25: #{forward.11} parent=5 // pred_check
      _
    $region26: #{forward.11} parent=5 // pred_check_branch
      %116 = sbr.rel (%p113) target = $region28
    $region27: #{forward.11} parent=5 // pred_region
      %s117 = ssub.s32 %s8, 1
      %p118 = pneg %p29
      %p119 = pneg %p26
      %p120 = scmp.lt.s32.totalorder %s13, 1
      %s121 = scalar_select %p120, %s13, 1
      %s122 = smul.addr %s121, 9
      %s123 = smul.addr %s122, 4
      %s124 = scalar_lea.vmem %s1, %s123
      %p125 = pneg %p55
      %p126 = pneg %p52
      %p127 = pneg %p81
      %p128 = pneg %p78
      %p129 = scmp.lt.s32.totalorder %s13, 1
      %s130 = scalar_select %p129, %s13, 1
      %s131 = smul.addr %s130, 2
      %s132 = smul.addr %s131, 8
      %s133 = scalar_lea.vmem %s2, %s132
      %p134 = scmp.lt.s32.totalorder %s13, 1
      %s135 = scalar_select %p134, %s13, 1
      %s136 = smul.addr %s135, 9
      %s137 = smul.addr %s136, 4
      %s138 = scalar_lea.vmem %s1, %s137
      %p139 = scmp.lt.s32.totalorder %s13, 1
      %s140 = scalar_select %p139, %s13, 1
      %s141 = smul.addr %s140, 2
      %s142 = smul.addr %s141, 8
      %s143 = scalar_lea.vmem %s2, %s142
      %v145 = vld [vmem:[%s0] sm:$0xf]
      %v146 = vld [vmem:[%s0 + $0x4] sm:$0xf]
      %v147 = vld [vmem:[%s138] sm:$0xf]
      %v148 = vld [vmem:[%s138 + $0x4] sm:$0xf]
      %v149 = vld [vmem:[%s138 + $0x8] sm:$0xf]
      %v150 = vld [vmem:[%s138 + $0xc] sm:$0xf]
      %v151 = vld [vmem:[%s138 + $0x10] sm:$0xf]
      %v152 = vld [vmem:[%s138 + $0x14] sm:$0xf]
      %v153 = vld [vmem:[%s138 + $0x18] sm:$0xf]
      %v154 = vld [vmem:[%s138 + $0x1c] sm:$0xf]
      %v155 = vld [vmem:[%s138 + $0x20] sm:$0xf]
      %v158 = vunpack.c.l.b16 %v145
      %v159 = vunpack.c.l.b16 %v146
      %v160 = vpack.c.b16 %v159, %v158
      %v170 = vunpack.c.l.b16 %v147
      %v171 = vunpack.c.l.b16 %v148
      %v172 = vunpack.c.l.b16 %v149
      %v173 = vunpack.c.l.b16 %v150
      %v174 = vunpack.c.l.b16 %v151
      %v175 = vunpack.c.l.b16 %v152
      %v176 = vunpack.c.l.b16 %v153
      %v177 = vunpack.c.l.b16 %v154
      %v178 = vunpack.c.l.b16 %v155
      %v179 = vpack.c.b16 %v171, %v170
      %v180 = vpack.c.b16 %v173, %v172
      %v181 = vpack.c.b16 %v175, %v174
      %v182 = vpack.c.b16 %v177, %v176
      %v183 = vpack.c.b16 %v178, %v178
      %vm188 = vcmask 588800
      %v190 = vsel %vm188, %v160, 0
      %vm192 = vcmask 1043456
      %v194 = vsel %vm192, %v183, 0
      %196 = vmatpush.bf16.msra.mxu0 0
      %197 = vmatpush.bf16.msra.mxu0 0
      %198 = vmatpush.bf16.msra.mxu0 0
      %199 = vmatpush.bf16.msra.mxu0 %v194
      %200 = vmatpush.bf16.msra.mxu0 %v182
      %201 = vmatpush.bf16.msra.mxu0 %v181
      %202 = vmatpush.bf16.msra.mxu0 %v180
      %203 = vmatpush.bf16.msra.mxu0 %v179
      %204 = vmatmul.bf16.gmra.mxu0 %v190
      %v205 = vpop.f32.mrf.mxu0
      %v206 = vadd.f32 0.0, %v205
      %v207 = vpop.f32.mrf.mxu0
      %v208 = vadd.f32 0.0, %v207
      %209 = vdwg.mxu0
      %vm210 = vcmask 523264
      %v211 = vsel %vm210, %v206, 0.0
      %212 = vadd.xlane.f32.xlu0 %v211
      %v213 = vpop.xlane.xlu0 %212
      %v214 = vsel %vm210, %v208, 0.0
      %215 = vadd.xlane.f32.xlu0 %v214
      %v216 = vpop.xlane.xlu0 %215
      %v217 = vrcp.pop 64.0
      %v218 = vmul.f32 64.0, %v217
      %v219 = vsub.f32 1.0, %v218
      %v220 = vmul.f32 %v217, %v219
      %v221 = vadd.f32 %v217, %v220
      %vm222 = vweird.f32 %v217
      %v223 = vsel %vm222, %v217, %v221
      %v224 = vmul.f32 %v213, %v223
      %v225 = vmul.f32 %v216, %v223
      %v226 = vsub.f32 %v206, %v224
      %v227 = vsub.f32 %v208, %v225
      %v228 = vmul.f32 %v226, %v226
      %v229 = vmul.f32 %v227, %v227
      %v230 = vsel %vm210, %v228, 0.0
      %231 = vadd.xlane.f32.xlu0 %v230
      %v232 = vpop.xlane.xlu0 %231
      %v233 = vsel %vm210, %v229, 0.0
      %234 = vadd.xlane.f32.xlu0 %v233
      %v235 = vpop.xlane.xlu0 %234
      %v236 = vmul.f32 %v232, %v223
      %v237 = vmul.f32 %v235, %v223
      %v238 = vadd.f32 %v236, 1e-05
      %v239 = vadd.f32 %v237, 1e-05
      %v240 = vrsqrt.pop %v238
      %v241 = vmul.f32 %v240, %v238
      %v242 = vmul.f32 %v241, %v240
      %v243 = vmul.f32 0.5, %v242
      %v244 = vsub.f32 1.5, %v243
      %v245 = vmul.f32 %v240, %v244
      %vm246 = vweird.f32 %v238
      %vm247 = vweird.f32 %v240
      %vm248 = vmor %vm246, %vm247
      %v249 = vsel %vm248, %v240, %v245
      %v250 = vrsqrt.pop %v239
      %v251 = vmul.f32 %v250, %v239
      %v252 = vmul.f32 %v251, %v250
      %v253 = vmul.f32 0.5, %v252
      %v254 = vsub.f32 1.5, %v253
      %v255 = vmul.f32 %v250, %v254
      %vm256 = vweird.f32 %v239
      %vm257 = vweird.f32 %v250
      %vm258 = vmor %vm256, %vm257
      %v259 = vsel %vm258, %v250, %v255
      %v260 = vmul.f32 %v226, %v249
      %v261 = vmul.f32 %v227, %v259
      %v262 = vmax.f32 %v260, 0.0
      %v263 = vmax.f32 %v261, 0.0
      %264 = vst.msk [vmem:[%s143] sm:$0xff] %vm210, %v262
      %265 = vst.msk [vmem:[%s143 + $0x8] sm:$0xff] %vm210, %v263
      %p266 = scmp.lt.s32.totalorder %s13, 1
      %s267 = scalar_select %p266, %s13, 1
      %s268 = smul.addr %s267, 2
      %s269 = smul.addr %s268, 8
      %s270 = scalar_lea.vmem %s2, %s269
      // Predicated region
      $region29: #{forward.11} parent=27 // pred_check
        %p271 = pneg %p78
      $region30: #{forward.11} parent=27 // pred_check_branch
        %273 = sbr.rel (%p271) target = $region32
      $region31: #{forward.11} parent=27 // pred_region
        _
      $region32: #{forward.11} parent=27 // pred_fallthru
        _
    $region28: #{forward.11} parent=5 // pred_fallthru
      _
    %p274 = scmp.le.s32.totalorder 2, %s8
    // Predicated region
    $region33: #{forward.11} parent=5 // pred_check
      %p275 = pneg %p274
    $region34: #{forward.11} parent=5 // pred_check_branch
      %277 = sbr.rel (%p275) target = $region36
    $region35: #{forward.11} parent=5 // pred_region
      %s278 = ssub.s32 %s8, 2
      // Predicated region
      $region37: #{forward.11} parent=35 // pred_check
        %p279 = pneg %p84
      $region38: #{forward.11} parent=35 // pred_check_branch
        %281 = sbr.rel (%p279) target = $region40
      $region39: #{forward.11} parent=35 // pred_region
        %p282 = scmp.lt.s32.totalorder %s14, 1
        %s283 = scalar_select %p282, %s14, 1
        %s284 = smul.addr %s283, 2
        %s285 = smul.addr %s284, 8
        %s286 = scalar_lea.vmem %s2, %s285
      $region40: #{forward.11} parent=35 // pred_fallthru
        _
    $region36: #{forward.11} parent=5 // pred_fallthru
      _
  $region6: #{forward.11} parent=0 // loop_footer
    %s12 = sadd.s32 1, %s8
  $region7: #{forward.11} parent=0 // loop_footer_branch
    %7 = sbr.rel target = $region3
  $region8: #{forward.11} parent=0 // loop_exit
    _

// kernel: forward.12
$region0: #{forward.12}
  #allocation0 [shape = 'u32[]', space=smem, size = 0x4, offset = 0x4, fixed_abs, tag = 'smem constant byte address 0x4 - core index']
  #allocation1 [shape = 'u32[72,128]{1,0:T(1,128)}', space=vmem, size = 0x9000, scoped, tag = 'internal scratch']
  %s0 = inlined_call_operand.vmem [shape: bf16[32,144], index: 0, kind: input, shape index: {}]
  %s1 = inlined_call_operand.vmem [shape: bf16[2,144,16], index: 1, kind: input, shape index: {}]
  %s2 = inlined_call_operand.vmem [shape: f32[2,32,16], index: 2, kind: output, shape index: {}]
  %s3 = sld [smem:[#allocation0]]
  $region41: #{forward.12} parent=0
    _
  %s5 = ssub.s32 1, %s3
  %s6 = scalar_select 0, %s5, %s3
  loop: start=0, step=1, limit=4
  $region2: #{forward.12} parent=0 // loop_pre_header
    _
  $region3: #{forward.12} parent=0 // loop_header
    %s8 = sphi 0, %s12
    %p9 = scmp.ge.s32.totalorder %s8, 4
    %s16 = sphi 0, %s16
    %s18 = sphi 0, %s16
    %s19 = sphi 0, %s18
    %s33 = sphi 0, %s19
    %s39 = sphi 0, %s41
    %s42 = sphi 0, %s39
    %s43 = sphi 0, %s42
    %s59 = sphi 0, %s43
    %s65 = sphi 0, %s67
    %s68 = sphi 0, %s65
    %s69 = sphi 0, %s68
    %s85 = sphi 0, %s69
  $region4: #{forward.12} parent=0 // loop_header_branch
    %11 = sbr.rel (%p9) target = $region8
  $region5: #{forward.12} parent=0 // loop_body
    %s13 = ssub.s32 %s8, 1
    %s14 = ssub.s32 %s8, 2
    %s15 = sadd.s32 %s8, 1
    %s17 = sadd.s32 %s16, 1
    %p20 = scmp.eq.s32.totalorder %s8, 1
    %p21 = scmp.ne.s32.totalorder %s16, %s18
    %p22 = scmp.eq.s32.totalorder %s8, 0
    %p23 = por %p21, %p22
    %p24 = scmp.ne.s32.totalorder %s16, %s18
    %p25 = scmp.eq.s32.totalorder %s13, 1
    %p26 = por %p24, %p25
    %p27 = scmp.ne.s32.totalorder %s18, %s19
    %p28 = scmp.eq.s32.totalorder %s13, 0
    %p29 = por %p27, %p28
    %p30 = scmp.ne.s32.totalorder %s18, %s19
    %p31 = scmp.eq.s32.totalorder %s14, 1
    %p32 = por %p30, %p31
    %p34 = scmp.ne.s32.totalorder %s19, %s33
    %p35 = scmp.eq.s32.totalorder %s14, 0
    %p36 = por %p34, %p35
    %s37 = ssub.s32 %s8, %s15
    %p38 = scmp.eq.s32.totalorder %s37, 0
    %s40 = sadd.s32 %s39, 1
    %s41 = scalar_select %p38, %s39, %s40
    %p44 = pneg %p38
    %p45 = scmp.eq.s32.totalorder %s8, 1
    %p46 = por %p44, %p45
    %p47 = scmp.ne.s32.totalorder %s39, %s42
    %p48 = scmp.eq.s32.totalorder %s8, 0
    %p49 = por %p47, %p48
    %p50 = scmp.ne.s32.totalorder %s39, %s42
    %p51 = scmp.eq.s32.totalorder %s13, 1
    %p52 = por %p50, %p51
    %p53 = scmp.ne.s32.totalorder %s42, %s43
    %p54 = scmp.eq.s32.totalorder %s13, 0
    %p55 = por %p53, %p54
    %p56 = scmp.ne.s32.totalorder %s42, %s43
    %p57 = scmp.eq.s32.totalorder %s14, 1
    %p58 = por %p56, %p57
    %p60 = scmp.ne.s32.totalorder %s43, %s59
    %p61 = scmp.eq.s32.totalorder %s14, 0
    %p62 = por %p60, %p61
    %s63 = ssub.s32 %s8, %s15
    %p64 = scmp.eq.s32.totalorder %s63, 0
    %s66 = sadd.s32 %s65, 1
    %s67 = scalar_select %p64, %s65, %s66
    %p70 = pneg %p64
    %p71 = scmp.eq.s32.totalorder %s8, 1
    %p72 = por %p70, %p71
    %p73 = scmp.ne.s32.totalorder %s65, %s68
    %p74 = scmp.eq.s32.totalorder %s8, 0
    %p75 = por %p73, %p74
    %p76 = scmp.ne.s32.totalorder %s65, %s68
    %p77 = scmp.eq.s32.totalorder %s13, 1
    %p78 = por %p76, %p77
    %p79 = scmp.ne.s32.totalorder %s68, %s69
    %p80 = scmp.eq.s32.totalorder %s13, 0
    %p81 = por %p79, %p80
    %p82 = scmp.ne.s32.totalorder %s68, %s69
    %p83 = scmp.eq.s32.totalorder %s14, 1
    %p84 = por %p82, %p83
    %p86 = scmp.ne.s32.totalorder %s69, %s85
    %p87 = scmp.eq.s32.totalorder %s14, 0
    %p88 = por %p86, %p87
    %p89 = scmp.le.s32.totalorder 1, %s8
    %p90 = scmp.lt.s32.totalorder %s8, 3
    %p91 = pnand %p89, %p90
    %p92 = pneg %p91
    // Predicated region
    $region9: #{forward.12} parent=5 // pred_check
      _
    $region10: #{forward.12} parent=5 // pred_check_branch
      %94 = sbr.rel (%p91) target = $region12
    $region11: #{forward.12} parent=5 // pred_region
      %s95 = ssub.s32 %s8, 1
      // Predicated region
      $region13: #{forward.12} parent=11 // pred_check
        %p96 = pneg %p29
      $region14: #{forward.12} parent=11 // pred_check_branch
        %98 = sbr.rel (%p96) target = $region16
      $region15: #{forward.12} parent=11 // pred_region
        _
      $region16: #{forward.12} parent=11 // pred_fallthru
        _
    $region12: #{forward.12} parent=5 // pred_fallthru
      _
    %p99 = scmp.lt.s32.totalorder %s8, 2
    // Predicated region
    $region17: #{forward.12} parent=5 // pred_check
      %p100 = pneg %p99
    $region18: #{forward.12} parent=5 // pred_check_branch
      %102 = sbr.rel (%p100) target = $region20
    $region19: #{forward.12} parent=5 // pred_region
      // Predicated region
      $region21: #{forward.12} parent=19 // pred_check
        %p103 = pneg %p49
      $region22: #{forward.12} parent=19 // pred_check_branch
        %105 = sbr.rel (%p103) target = $region24
      $region23: #{forward.12} parent=19 // pred_region
        %p106 = scmp.lt.s32.totalorder %s8, 1
        %s107 = scalar_select %p106, %s8, 1
        %s108 = smul.addr %s107, 18
        %s109 = smul.addr %s108, 4
        %s110 = scalar_lea.vmem %s1, %s109
      $region24: #{forward.12} parent=19 // pred_fallthru
        _
    $region20: #{forward.12} parent=5 // pred_fallthru
      _
    %p111 = scmp.le.s32.totalorder 1, %s8
    %p112 = scmp.lt.s32.totalorder %s8, 3
    %p113 = pnand %p111, %p112
    %p114 = pneg %p113
    // Predicated region
    $region25: #{forward.12} parent=5 // pred_check
      _
    $region26: #{forward.12} parent=5 // pred_check_branch
      %116 = sbr.rel (%p113) target = $region28
    $region27: #{forward.12} parent=5 // pred_region
      %s117 = ssub.s32 %s8, 1
      %p118 = pneg %p29
      %p119 = pneg %p26
      %p120 = scmp.lt.s32.totalorder %s13, 1
      %s121 = scalar_select %p120, %s13, 1
      %s122 = smul.addr %s121, 18
      %s123 = smul.addr %s122, 4
      %s124 = scalar_lea.vmem %s1, %s123
      %p125 = pneg %p55
      %p126 = pneg %p52
      %p127 = pneg %p81
      %p128 = pneg %p78
      %p129 = scmp.lt.s32.totalorder %s13, 1
      %s130 = scalar_select %p129, %s13, 1
      %s131 = smul.addr %s130, 4
      %s132 = smul.addr %s131, 8
      %s133 = scalar_lea.vmem %s2, %s132
      %p134 = scmp.lt.s32.totalorder %s13, 1
      %s135 = scalar_select %p134, %s13, 1
      %s136 = smul.addr %s135, 18
      %s137 = smul.addr %s136, 4
      %s138 = scalar_lea.vmem %s1, %s137
      %p139 = scmp.lt.s32.totalorder %s13, 1
      %s140 = scalar_select %p139, %s13, 1
      %s141 = smul.addr %s140, 4
      %s142 = smul.addr %s141, 8
      %s143 = scalar_lea.vmem %s2, %s142
      %v145 = vld [vmem:[%s0] sm:$0xff]
      %v146 = vld [vmem:[%s0 + $0x8] sm:$0xff]
      %v147 = vld [vmem:[%s0 + $0x10] sm:$0xff]
      %v148 = vld [vmem:[%s0 + $0x18] sm:$0xff]
      %v149 = vld [vmem:[%s138] sm:$0xf]
      %v150 = vld [vmem:[%s138 + $0x4] sm:$0xf]
      %v151 = vld [vmem:[%s138 + $0x8] sm:$0xf]
      %v152 = vld [vmem:[%s138 + $0xc] sm:$0xf]
      %v153 = vld [vmem:[%s138 + $0x10] sm:$0xf]
      %v154 = vld [vmem:[%s138 + $0x14] sm:$0xf]
      %v155 = vld [vmem:[%s138 + $0x18] sm:$0xf]
      %v156 = vld [vmem:[%s138 + $0x1c] sm:$0xf]
      %v157 = vld [vmem:[%s138 + $0x20] sm:$0xf]
      %v158 = vld [vmem:[%s138 + $0x24] sm:$0xf]
      %v159 = vld [vmem:[%s138 + $0x28] sm:$0xf]
      %v160 = vld [vmem:[%s138 + $0x2c] sm:$0xf]
      %v161 = vld [vmem:[%s138 + $0x30] sm:$0xf]
      %v162 = vld [vmem:[%s138 + $0x34] sm:$0xf]
      %v163 = vld [vmem:[%s138 + $0x38] sm:$0xf]
      %v164 = vld [vmem:[%s138 + $0x3c] sm:$0xf]
      %v165 = vld [vmem:[%s138 + $0x40] sm:$0xf]
      %v166 = vld [vmem:[%s138 + $0x44] sm:$0xf]
      %v171 = vunpack.c.l.b16 %v145
      %v172 = vunpack.c.h.b16 %v145
      %v173 = vunpack.c.l.b16 %v146
      %v174 = vunpack.c.h.b16 %v146
      %v175 = vunpack.c.l.b16 %v147
      %v176 = vunpack.c.h.b16 %v147
      %v177 = vunpack.c.l.b16 %v148
      %v178 = vunpack.c.h.b16 %v148
      %v179 = vpack.c.b16 %v173, %v171
      %v180 = vpack.c.b16 %v174, %v172
      %v181 = vpack.c.b16 %v177, %v175
      %v182 = vpack.c.b16 %v178, %v176
      %v203 = vunpack.c.l.b16 %v149
      %v204 = vunpack.c.l.b16 %v150
      %v205 = vunpack.c.l.b16 %v151
      %v206 = vunpack.c.l.b16 %v152
      %v207 = vunpack.c.l.b16 %v153
      %v208 = vunpack.c.l.b16 %v154
      %v209 = vunpack.c.l.b16 %v155
      %v210 = vunpack.c.l.b16 %v156
      %v211 = vunpack.c.l.b16 %v157
      %v212 = vunpack.c.l.b16 %v158
      %v213 = vunpack.c.l.b16 %v159
      %v214 = vunpack.c.l.b16 %v160
      %v215 = vunpack.c.l.b16 %v161
      %v216 = vunpack.c.l.b16 %v162
      %v217 = vunpack.c.l.b16 %v163
      %v218 = vunpack.c.l.b16 %v164
      %v219 = vunpack.c.l.b16 %v165
      %v220 = vunpack.c.l.b16 %v166
      %v221 = vpack.c.b16 %v204, %v203
      %v222 = vpack.c.b16 %v206, %v205
      %v223 = vpack.c.b16 %v208, %v207
      %v224 = vpack.c.b16 %v210, %v209
      %v225 = vpack.c.b16 %v212, %v211
      %v226 = vpack.c.b16 %v214, %v213
      %v227 = vpack.c.b16 %v216, %v215
      %v228 = vpack.c.b16 %v218, %v217
      %v229 = vpack.c.b16 %v220, %v219
      %vm239 = vcmask 130048
      %v241 = vsel %vm239, %v180, 0
      %v244 = vsel %vm239, %v182, 0
      %246 = vmatpush.bf16.msra.mxu0 %v228
      %247 = vmatpush.bf16.msra.mxu0 %v227
      %248 = vmatpush.bf16.msra.mxu0 %v226
      %249 = vmatpush.bf16.msra.mxu0 %v225
      %250 = vmatpush.bf16.msra.mxu0 %v224
      %251 = vmatpush.bf16.msra.mxu0 %v223
      %252 = vmatpush.bf16.msra.mxu0 %v222
      %253 = vmatpush.bf16.msra.mxu0 %v221
      %254 = vmatmul.bf16.gmra.mxu0 %v179
      %v255 = vpop.f32.mrf.mxu0
      %v256 = vadd.f32 0.0, %v255
      %v257 = vpop.f32.mrf.mxu0
      %v258 = vadd.f32 0.0, %v257
      %259 = vmatmul.bf16.gmra.mxu0 %v181
      %v260 = vpop.f32.mrf.mxu0
      %v261 = vadd.f32 0.0, %v260
      %v262 = vpop.f32.mrf.mxu0
      %v263 = vadd.f32 0.0, %v262
      %264 = vdwg.mxu0
      %265 = vmatpush.bf16.msra.mxu0 0
      %266 = vmatpush.bf16.msra.mxu0 0
      %267 = vmatpush.bf16.msra.mxu0 0
      %268 = vmatpush.bf16.msra.mxu0 0
      %269 = vmatpush.bf16.msra.mxu0 0
      %270 = vmatpush.bf16.msra.mxu0 0
      %271 = vmatpush.bf16.msra.mxu0 0
      %272 = vmatpush.bf16.msra.mxu0 %v229
      %273 = vmatmul.bf16.gmra.mxu0 %v241
      %v274 = vpop.f32.mrf.mxu0
      %v275 = vadd.f32 %v256, %v274
      %v276 = vpop.f32.mrf.mxu0
      %v277 = vadd.f32 %v258, %v276
      %278 = vmatmul.bf16.gmra.mxu0 %v244
      %v279 = vpop.f32.mrf.mxu0
      %v280 = vadd.f32 %v261, %v279
      %v281 = vpop.f32.mrf.mxu0
      %v282 = vadd.f32 %v263, %v281
      %283 = vdwg.mxu0
      %v284 = vsel %vm239, %v275, 0.0
      %285 = vadd.xlane.f32.xlu0 %v284
      %v286 = vpop.xlane.xlu0 %285
      %v287 = vsel %vm239, %v277, 0.0
      %288 = vadd.xlane.f32.xlu0 %v287
      %v289 = vpop.xlane.xlu0 %288
      %v290 = vsel %vm239, %v280, 0.0
      %291 = vadd.xlane.f32.xlu0 %v290
      %v292 = vpop.xlane.xlu0 %291
      %v293 = vsel %vm239, %v282, 0.0
      %294 = vadd.xlane.f32.xlu0 %v293
      %v295 = vpop.xlane.xlu0 %294
      %v296 = vrcp.pop 16.0
      %v297 = vmul.f32 16.0, %v296
      %v298 = vsub.f32 1.0, %v297
      %v299 = vmul.f32 %v296, %v298
      %v300 = vadd.f32 %v296, %v299
      %vm301 = vweird.f32 %v296
      %v302 = vsel %vm301, %v296, %v300
      %v303 = vmul.f32 %v286, %v302
      %v304 = vmul.f32 %v289, %v302
      %v305 = vmul.f32 %v292, %v302
      %v306 = vmul.f32 %v295, %v302
      %v307 = vsub.f32 %v275, %v303
      %v308 = vsub.f32 %v277, %v304
      %v309 = vsub.f32 %v280, %v305
      %v310 = vsub.f32 %v282, %v306
      %v311 = vmul.f32 %v307, %v307
      %v312 = vmul.f32 %v308, %v308
      %v313 = vmul.f32 %v309, %v309
      %v314 = vmul.f32 %v310, %v310
      %v315 = vsel %vm239, %v311, 0.0
      %316 = vadd.xlane.f32.xlu0 %v315
      %v317 = vpop.xlane.xlu0 %316
      %v318 = vsel %vm239, %v312, 0.0
      %319 = vadd.xlane.f32.xlu0 %v318
      %v320 = vpop.xlane.xlu0 %319
      %v321 = vsel %vm239, %v313, 0.0
      %322 = vadd.xlane.f32.xlu0 %v321
      %v323 = vpop.xlane.xlu0 %322
      %v324 = vsel %vm239, %v314, 0.0
      %325 = vadd.xlane.f32.xlu0 %v324
      %v326 = vpop.xlane.xlu0 %325
      %v327 = vmul.f32 %v317, %v302
      %v328 = vmul.f32 %v320, %v302
      %v329 = vmul.f32 %v323, %v302
      %v330 = vmul.f32 %v326, %v302
      %v331 = vadd.f32 %v327, 1e-05
      %v332 = vadd.f32 %v328, 1e-05
      %v333 = vadd.f32 %v329, 1e-05
      %v334 = vadd.f32 %v330, 1e-05
      %v335 = vrsqrt.pop %v331
      %v336 = vmul.f32 %v335, %v331
      %v337 = vmul.f32 %v336, %v335
      %v338 = vmul.f32 0.5, %v337
      %v339 = vsub.f32 1.5, %v338
      %v340 = vmul.f32 %v335, %v339
      %vm341 = vweird.f32 %v331
      %vm342 = vweird.f32 %v335
      %vm343 = vmor %vm341, %vm342
      %v344 = vsel %vm343, %v335, %v340
      %v345 = vrsqrt.pop %v332
      %v346 = vmul.f32 %v345, %v332
      %v347 = vmul.f32 %v346, %v345
      %v348 = vmul.f32 0.5, %v347
      %v349 = vsub.f32 1.5, %v348
      %v350 = vmul.f32 %v345, %v349
      %vm351 = vweird.f32 %v332
      %vm352 = vweird.f32 %v345
      %vm353 = vmor %vm351, %vm352
      %v354 = vsel %vm353, %v345, %v350
      %v355 = vrsqrt.pop %v333
      %v356 = vmul.f32 %v355, %v333
      %v357 = vmul.f32 %v356, %v355
      %v358 = vmul.f32 0.5, %v357
      %v359 = vsub.f32 1.5, %v358
      %v360 = vmul.f32 %v355, %v359
      %vm361 = vweird.f32 %v333
      %vm362 = vweird.f32 %v355
      %vm363 = vmor %vm361, %vm362
      %v364 = vsel %vm363, %v355, %v360
      %v365 = vrsqrt.pop %v334
      %v366 = vmul.f32 %v365, %v334
      %v367 = vmul.f32 %v366, %v365
      %v368 = vmul.f32 0.5, %v367
      %v369 = vsub.f32 1.5, %v368
      %v370 = vmul.f32 %v365, %v369
      %vm371 = vweird.f32 %v334
      %vm372 = vweird.f32 %v365
      %vm373 = vmor %vm371, %vm372
      %v374 = vsel %vm373, %v365, %v370
      %v375 = vmul.f32 %v307, %v344
      %v376 = vmul.f32 %v308, %v354
      %v377 = vmul.f32 %v309, %v364
      %v378 = vmul.f32 %v310, %v374
      %v379 = vmax.f32 %v375, 0.0
      %v380 = vmax.f32 %v376, 0.0
      %v381 = vmax.f32 %v377, 0.0
      %v382 = vmax.f32 %v378, 0.0
      %383 = vst.msk [vmem:[%s143] sm:$0xff] %vm239, %v379
      %384 = vst.msk [vmem:[%s143 + $0x8] sm:$0xff] %vm239, %v380
      %385 = vst.msk [vmem:[%s143 + $0x10] sm:$0xff] %vm239, %v381
      %386 = vst.msk [vmem:[%s143 + $0x18] sm:$0xff] %vm239, %v382
      %p387 = scmp.lt.s32.totalorder %s13, 1
      %s388 = scalar_select %p387, %s13, 1
      %s389 = smul.addr %s388, 4
      %s390 = smul.addr %s389, 8
      %s391 = scalar_lea.vmem %s2, %s390
      // Predicated region
      $region29: #{forward.12} parent=27 // pred_check
        %p392 = pneg %p78
      $region30: #{forward.12} parent=27 // pred_check_branch
        %394 = sbr.rel (%p392) target = $region32
      $region31: #{forward.12} parent=27 // pred_region
        _
      $region32: #{forward.12} parent=27 // pred_fallthru
        _
    $region28: #{forward.12} parent=5 // pred_fallthru
      _
    %p395 = scmp.le.s32.totalorder 2, %s8
    // Predicated region
    $region33: #{forward.12} parent=5 // pred_check
      %p396 = pneg %p395
    $region34: #{forward.12} parent=5 // pred_check_branch
      %398 = sbr.rel (%p396) target = $region36
    $region35: #{forward.12} parent=5 // pred_region
      %s399 = ssub.s32 %s8, 2
      // Predicated region
      $region37: #{forward.12} parent=35 // pred_check
        %p400 = pneg %p84
      $region38: #{forward.12} parent=35 // pred_check_branch
        %402 = sbr.rel (%p400) target = $region40
      $region39: #{forward.12} parent=35 // pred_region
        %p403 = scmp.lt.s32.totalorder %s14, 1
        %s404 = scalar_select %p403, %s14, 1
        %s405 = smul.addr %s404, 4
        %s406 = smul.addr %s405, 8
        %s407 = scalar_lea.vmem %s2, %s406
      $region40: #{forward.12} parent=35 // pred_fallthru
        _
    $region36: #{forward.12} parent=5 // pred_fallthru
      _
  $region6: #{forward.12} parent=0 // loop_footer
    %s12 = sadd.s32 1, %s8
  $region7: #{forward.12} parent=0 // loop_footer_branch
    %7 = sbr.rel target = $region3
  $region8: #{forward.12} parent=0 // loop_exit
    _

// kernel: forward.13
$region0: #{forward.13}
  #allocation0 [shape = 'u32[]', space=smem, size = 0x4, offset = 0x4, fixed_abs, tag = 'smem constant byte address 0x4 - core index']
  #allocation1 [shape = 'u32[72,128]{1,0:T(1,128)}', space=vmem, size = 0x9000, scoped, tag = 'internal scratch']
  %s0 = inlined_call_operand.vmem [shape: bf16[32,288], index: 0, kind: input, shape index: {}]
  %s1 = inlined_call_operand.vmem [shape: bf16[2,288,16], index: 1, kind: input, shape index: {}]
  %s2 = inlined_call_operand.vmem [shape: f32[2,32,16], index: 2, kind: output, shape index: {}]
  %s3 = sld [smem:[#allocation0]]
  $region41: #{forward.13} parent=0
    _
  %s5 = ssub.s32 1, %s3
  %s6 = scalar_select 0, %s5, %s3
  loop: start=0, step=1, limit=4
  $region2: #{forward.13} parent=0 // loop_pre_header
    _
  $region3: #{forward.13} parent=0 // loop_header
    %s8 = sphi 0, %s12
    %p9 = scmp.ge.s32.totalorder %s8, 4
    %s16 = sphi 0, %s16
    %s18 = sphi 0, %s16
    %s19 = sphi 0, %s18
    %s33 = sphi 0, %s19
    %s39 = sphi 0, %s41
    %s42 = sphi 0, %s39
    %s43 = sphi 0, %s42
    %s59 = sphi 0, %s43
    %s65 = sphi 0, %s67
    %s68 = sphi 0, %s65
    %s69 = sphi 0, %s68
    %s85 = sphi 0, %s69
  $region4: #{forward.13} parent=0 // loop_header_branch
    %11 = sbr.rel (%p9) target = $region8
  $region5: #{forward.13} parent=0 // loop_body
    %s13 = ssub.s32 %s8, 1
    %s14 = ssub.s32 %s8, 2
    %s15 = sadd.s32 %s8, 1
    %s17 = sadd.s32 %s16, 1
    %p20 = scmp.eq.s32.totalorder %s8, 1
    %p21 = scmp.ne.s32.totalorder %s16, %s18
    %p22 = scmp.eq.s32.totalorder %s8, 0
    %p23 = por %p21, %p22
    %p24 = scmp.ne.s32.totalorder %s16, %s18
    %p25 = scmp.eq.s32.totalorder %s13, 1
    %p26 = por %p24, %p25
    %p27 = scmp.ne.s32.totalorder %s18, %s19
    %p28 = scmp.eq.s32.totalorder %s13, 0
    %p29 = por %p27, %p28
    %p30 = scmp.ne.s32.totalorder %s18, %s19
    %p31 = scmp.eq.s32.totalorder %s14, 1
    %p32 = por %p30, %p31
    %p34 = scmp.ne.s32.totalorder %s19, %s33
    %p35 = scmp.eq.s32.totalorder %s14, 0
    %p36 = por %p34, %p35
    %s37 = ssub.s32 %s8, %s15
    %p38 = scmp.eq.s32.totalorder %s37, 0
    %s40 = sadd.s32 %s39, 1
    %s41 = scalar_select %p38, %s39, %s40
    %p44 = pneg %p38
    %p45 = scmp.eq.s32.totalorder %s8, 1
    %p46 = por %p44, %p45
    %p47 = scmp.ne.s32.totalorder %s39, %s42
    %p48 = scmp.eq.s32.totalorder %s8, 0
    %p49 = por %p47, %p48
    %p50 = scmp.ne.s32.totalorder %s39, %s42
    %p51 = scmp.eq.s32.totalorder %s13, 1
    %p52 = por %p50, %p51
    %p53 = scmp.ne.s32.totalorder %s42, %s43
    %p54 = scmp.eq.s32.totalorder %s13, 0
    %p55 = por %p53, %p54
    %p56 = scmp.ne.s32.totalorder %s42, %s43
    %p57 = scmp.eq.s32.totalorder %s14, 1
    %p58 = por %p56, %p57
    %p60 = scmp.ne.s32.totalorder %s43, %s59
    %p61 = scmp.eq.s32.totalorder %s14, 0
    %p62 = por %p60, %p61
    %s63 = ssub.s32 %s8, %s15
    %p64 = scmp.eq.s32.totalorder %s63, 0
    %s66 = sadd.s32 %s65, 1
    %s67 = scalar_select %p64, %s65, %s66
    %p70 = pneg %p64
    %p71 = scmp.eq.s32.totalorder %s8, 1
    %p72 = por %p70, %p71
    %p73 = scmp.ne.s32.totalorder %s65, %s68
    %p74 = scmp.eq.s32.totalorder %s8, 0
    %p75 = por %p73, %p74
    %p76 = scmp.ne.s32.totalorder %s65, %s68
    %p77 = scmp.eq.s32.totalorder %s13, 1
    %p78 = por %p76, %p77
    %p79 = scmp.ne.s32.totalorder %s68, %s69
    %p80 = scmp.eq.s32.totalorder %s13, 0
    %p81 = por %p79, %p80
    %p82 = scmp.ne.s32.totalorder %s68, %s69
    %p83 = scmp.eq.s32.totalorder %s14, 1
    %p84 = por %p82, %p83
    %p86 = scmp.ne.s32.totalorder %s69, %s85
    %p87 = scmp.eq.s32.totalorder %s14, 0
    %p88 = por %p86, %p87
    %p89 = scmp.le.s32.totalorder 1, %s8
    %p90 = scmp.lt.s32.totalorder %s8, 3
    %p91 = pnand %p89, %p90
    %p92 = pneg %p91
    // Predicated region
    $region9: #{forward.13} parent=5 // pred_check
      _
    $region10: #{forward.13} parent=5 // pred_check_branch
      %94 = sbr.rel (%p91) target = $region12
    $region11: #{forward.13} parent=5 // pred_region
      %s95 = ssub.s32 %s8, 1
      // Predicated region
      $region13: #{forward.13} parent=11 // pred_check
        %p96 = pneg %p29
      $region14: #{forward.13} parent=11 // pred_check_branch
        %98 = sbr.rel (%p96) target = $region16
      $region15: #{forward.13} parent=11 // pred_region
        _
      $region16: #{forward.13} parent=11 // pred_fallthru
        _
    $region12: #{forward.13} parent=5 // pred_fallthru
      _
    %p99 = scmp.lt.s32.totalorder %s8, 2
    // Predicated region
    $region17: #{forward.13} parent=5 // pred_check
      %p100 = pneg %p99
    $region18: #{forward.13} parent=5 // pred_check_branch
      %102 = sbr.rel (%p100) target = $region20
    $region19: #{forward.13} parent=5 // pred_region
      // Predicated region
      $region21: #{forward.13} parent=19 // pred_check
        %p103 = pneg %p49
      $region22: #{forward.13} parent=19 // pred_check_branch
        %105 = sbr.rel (%p103) target = $region24
      $region23: #{forward.13} parent=19 // pred_region
        %p106 = scmp.lt.s32.totalorder %s8, 1
        %s107 = scalar_select %p106, %s8, 1
        %s108 = smul.addr %s107, 36
        %s109 = smul.addr %s108, 4
        %s110 = scalar_lea.vmem %s1, %s109
      $region24: #{forward.13} parent=19 // pred_fallthru
        _
    $region20: #{forward.13} parent=5 // pred_fallthru
      _
    %p111 = scmp.le.s32.totalorder 1, %s8
    %p112 = scmp.lt.s32.totalorder %s8, 3
    %p113 = pnand %p111, %p112
    %p114 = pneg %p113
    // Predicated region
    $region25: #{forward.13} parent=5 // pred_check
      _
    $region26: #{forward.13} parent=5 // pred_check_branch
      %116 = sbr.rel (%p113) target = $region28
    $region27: #{forward.13} parent=5 // pred_region
      %s117 = ssub.s32 %s8, 1
      %p118 = pneg %p29
      %p119 = pneg %p26
      %p120 = scmp.lt.s32.totalorder %s13, 1
      %s121 = scalar_select %p120, %s13, 1
      %s122 = smul.addr %s121, 36
      %s123 = smul.addr %s122, 4
      %s124 = scalar_lea.vmem %s1, %s123
      %p125 = pneg %p55
      %p126 = pneg %p52
      %p127 = pneg %p81
      %p128 = pneg %p78
      %p129 = scmp.lt.s32.totalorder %s13, 1
      %s130 = scalar_select %p129, %s13, 1
      %s131 = smul.addr %s130, 4
      %s132 = smul.addr %s131, 8
      %s133 = scalar_lea.vmem %s2, %s132
      %p134 = scmp.lt.s32.totalorder %s13, 1
      %s135 = scalar_select %p134, %s13, 1
      %s136 = smul.addr %s135, 36
      %s137 = smul.addr %s136, 4
      %s138 = scalar_lea.vmem %s1, %s137
      %p139 = scmp.lt.s32.totalorder %s13, 1
      %s140 = scalar_select %p139, %s13, 1
      %s141 = smul.addr %s140, 4
      %s142 = smul.addr %s141, 8
      %s143 = scalar_lea.vmem %s2, %s142
      %v145 = vld [vmem:[%s0] sm:$0xff]
      %v146 = vld [vmem:[%s0 + $0x8] sm:$0xf]
      %v147 = vld [vmem:[%s0 + $0xc] sm:$0xff]
      %v148 = vld [vmem:[%s0 + $0x14] sm:$0xf]
      %v149 = vld [vmem:[%s0 + $0x18] sm:$0xff]
      %v150 = vld [vmem:[%s0 + $0x20] sm:$0xf]
      %v151 = vld [vmem:[%s0 + $0x24] sm:$0xff]
      %v152 = vld [vmem:[%s0 + $0x2c] sm:$0xf]
      %v153 = vld [vmem:[%s138] sm:$0xf]
      %v154 = vld [vmem:[%s138 + $0x4] sm:$0xf]
      %v155 = vld [vmem:[%s138 + $0x8] sm:$0xf]
      %v156 = vld [vmem:[%s138 + $0xc] sm:$0xf]
      %v157 = vld [vmem:[%s138 + $0x10] sm:$0xf]
      %v158 = vld [vmem:[%s138 + $0x14] sm:$0xf]
      %v159 = vld [vmem:[%s138 + $0x18] sm:$0xf]
      %v160 = vld [vmem:[%s138 + $0x1c] sm:$0xf]
      %v161 = vld [vmem:[%s138 + $0x20] sm:$0xf]
      %v162 = vld [vmem:[%s138 + $0x24] sm:$0xf]
      %v163 = vld [vmem:[%s138 + $0x28] sm:$0xf]
      %v164 = vld [vmem:[%s138 + $0x2c] sm:$0xf]
      %v165 = vld [vmem:[%s138 + $0x30] sm:$0xf]
      %v166 = vld [vmem:[%s138 + $0x34] sm:$0xf]
      %v167 = vld [vmem:[%s138 + $0x38] sm:$0xf]
      %v168 = vld [vmem:[%s138 + $0x3c] sm:$0xf]
      %v169 = vld [vmem:[%s138 + $0x40] sm:$0xf]
      %v170 = vld [vmem:[%s138 + $0x44] sm:$0xf]
      %v171 = vld [vmem:[%s138 + $0x48] sm:$0xf]
      %v172 = vld [vmem:[%s138 + $0x4c] sm:$0xf]
      %v173 = vld [vmem:[%s138 + $0x50] sm:$0xf]
      %v174 = vld [vmem:[%s138 + $0x54] sm:$0xf]
      %v175 = vld [vmem:[%s138 + $0x58] sm:$0xf]
      %v176 = vld [vmem:[%s138 + $0x5c] sm:$0xf]
      %v177 = vld [vmem:[%s138 + $0x60] sm:$0xf]
      %v178 = vld [vmem:[%s138 + $0x64] sm:$0xf]
      %v179 = vld [vmem:[%s138 + $0x68] sm:$0xf]
      %v180 = vld [vmem:[%s138 + $0x6c] sm:$0xf]
      %v181 = vld [vmem:[%s138 + $0x70] sm:$0xf]
      %v182 = vld [vmem:[%s138 + $0x74] sm:$0xf]
      %v183 = vld [vmem:[%s138 + $0x78] sm:$0xf]
      %v184 = vld [vmem:[%s138 + $0x7c] sm:$0xf]
      %v185 = vld [vmem:[%s138 + $0x80] sm:$0xf]
      %v186 = vld [vmem:[%s138 + $0x84] sm:$0xf]
      %v187 = vld [vmem:[%s138 + $0x88] sm:$0xf]
      %v188 = vld [vmem:[%s138 + $0x8c] sm:$0xf]
      %v197 = vunpack.c.l.b16 %v145
      %v198 = vunpack.c.h.b16 %v145
      %v199 = vunpack.c.l.b16 %v146
      %v200 = vunpack.c.l.b16 %v147
      %v201 = vunpack.c.h.b16 %v147
      %v202 = vunpack.c.l.b16 %v148
      %v203 = vunpack.c.l.b16 %v149
      %v204 = vunpack.c.h.b16 %v149
      %v205 = vunpack.c.l.b16 %v150
      %v206 = vunpack.c.l.b16 %v151
      %v207 = vunpack.c.h.b16 %v151
      %v208 = vunpack.c.l.b16 %v152
      %v209 = vpack.c.b16 %v200, %v197
      %v210 = vpack.c.b16 %v201, %v198
      %v211 = vpack.c.b16 %v202, %v199
      %v212 = vpack.c.b16 %v206, %v203
      %v213 = vpack.c.b16 %v207, %v204
      %v214 = vpack.c.b16 %v208, %v205
      %v255 = vunpack.c.l.b16 %v153
      %v256 = vunpack.c.l.b16 %v154
      %v257 = vunpack.c.l.b16 %v155
      %v258 = vunpack.c.l.b16 %v156
      %v259 = vunpack.c.l.b16 %v157
      %v260 = vunpack.c.l.b16 %v158
      %v261 = vunpack.c.l.b16 %v159
      %v262 = vunpack.c.l.b16 %v160
      %v263 = vunpack.c.l.b16 %v161
      %v264 = vunpack.c.l.b16 %v162
      %v265 = vunpack.c.l.b16 %v163
      %v266 = vunpack.c.l.b16 %v164
      %v267 = vunpack.c.l.b16 %v165
      %v268 = vunpack.c.l.b16 %v166
      %v269 = vunpack.c.l.b16 %v167
      %v270 = vunpack.c.l.b16 %v168
      %v271 = vunpack.c.l.b16 %v169
      %v272 = vunpack.c.l.b16 %v170
      %v273 = vunpack.c.l.b16 %v171
      %v274 = vunpack.c.l.b16 %v172
      %v275 = vunpack.c.l.b16 %v173
      %v276 = vunpack.c.l.b16 %v174
      %v277 = vunpack.c.l.b16 %v175
      %v278 = vunpack.c.l.b16 %v176
      %v279 = vunpack.c.l.b16 %v177
      %v280 = vunpack.c.l.b16 %v178
      %v281 = vunpack.c.l.b16 %v179
      %v282 = vunpack.c.l.b16 %v180
      %v283 = vunpack.c.l.b16 %v181
      %v284 = vunpack.c.l.b16 %v182
      %v285 = vunpack.c.l.b16 %v183
      %v286 = vunpack.c.l.b16 %v184
      %v287 = vunpack.c.l.b16 %v185
      %v288 = vunpack.c.l.b16 %v186
      %v289 = vunpack.c.l.b16 %v187
      %v290 = vunpack.c.l.b16 %v188
      %v291 = vpack.c.b16 %v256, %v255
      %v292 = vpack.c.b16 %v258, %v257
      %v293 = vpack.c.b16 %v260, %v259
      %v294 = vpack.c.b16 %v262, %v261
      %v295 = vpack.c.b16 %v264, %v263
      %v296 = vpack.c.b16 %v266, %v265
      %v297 = vpack.c.b16 %v268, %v267
      %v298 = vpack.c.b16 %v270, %v269
      %v299 = vpack.c.b16 %v272, %v271
      %v300 = vpack.c.b16 %v274, %v273
      %v301 = vpack.c.b16 %v276, %v275
      %v302 = vpack.c.b16 %v278, %v277
      %v303 = vpack.c.b16 %v280, %v279
      %v304 = vpack.c.b16 %v282, %v281
      %v305 = vpack.c.b16 %v284, %v283
      %v306 = vpack.c.b16 %v286, %v285
      %v307 = vpack.c.b16 %v288, %v287
      %v308 = vpack.c.b16 %v290, %v289
      %vm327 = vcmask 261120
      %v329 = vsel %vm327, %v211, 0
      %v332 = vsel %vm327, %v214, 0
      %334 = vmatpush.bf16.msra.mxu0 %v298
      %335 = vmatpush.bf16.msra.mxu0 %v297
      %336 = vmatpush.bf16.msra.mxu0 %v296
      %337 = vmatpush.bf16.msra.mxu0 %v295
      %338 = vmatpush.bf16.msra.mxu0 %v294
      %339 = vmatpush.bf16.msra.mxu0 %v293
      %340 = vmatpush.bf16.msra.mxu0 %v292
      %341 = vmatpush.bf16.msra.mxu0 %v291
      %342 = vmatmul.bf16.gmra.mxu0 %v209
      %v343 = vpop.f32.mrf.mxu0
      %v344 = vadd.f32 0.0, %v343
      %v345 = vpop.f32.mrf.mxu0
      %v346 = vadd.f32 0.0, %v345
      %347 = vmatmul.bf16.gmra.mxu0 %v212
      %v348 = vpop.f32.mrf.mxu0
      %v349 = vadd.f32 0.0, %v348
      %v350 = vpop.f32.mrf.mxu0
      %v351 = vadd.f32 0.0, %v350
      %352 = vdwg.mxu0
      %353 = vmatpush.bf16.msra.mxu0 %v306
      %354 = vmatpush.bf16.msra.mxu0 %v305
      %355 = vmatpush.bf16.msra.mxu0 %v304
      %356 = vmatpush.bf16.msra.mxu0 %v303
      %357 = vmatpush.bf16.msra.mxu0 %v302
      %358 = vmatpush.bf16.msra.mxu0 %v301
      %359 = vmatpush.bf16.msra.mxu0 %v300
      %360 = vmatpush.bf16.msra.mxu0 %v299
      %361 = vmatmul.bf16.gmra.mxu0 %v210
      %v362 = vpop.f32.mrf.mxu0
      %v363 = vadd.f32 %v344, %v362
      %v364 = vpop.f32.mrf.mxu0
      %v365 = vadd.f32 %v346, %v364
      %366 = vmatmul.bf16.gmra.mxu0 %v213
      %v367 = vpop.f32.mrf.mxu0
      %v368 = vadd.f32 %v349, %v367
      %v369 = vpop.f32.mrf.mxu0
      %v370 = vadd.f32 %v351, %v369
      %371 = vdwg.mxu0
      %372 = vmatpush.bf16.msra.mxu0 0
      %373 = vmatpush.bf16.msra.mxu0 0
      %374 = vmatpush.bf16.msra.mxu0 0
      %375 = vmatpush.bf16.msra.mxu0 0
      %376 = vmatpush.bf16.msra.mxu0 0
      %377 = vmatpush.bf16.msra.mxu0 0
      %378 = vmatpush.bf16.msra.mxu0 %v308
      %379 = vmatpush.bf16.msra.mxu0 %v307
      %380 = vmatmul.bf16.gmra.mxu0 %v329
      %v381 = vpop.f32.mrf.mxu0
      %v382 = vadd.f32 %v363, %v381
      %v383 = vpop.f32.mrf.mxu0
      %v384 = vadd.f32 %v365, %v383
      %385 = vmatmul.bf16.gmra.mxu0 %v332
      %v386 = vpop.f32.mrf.mxu0
      %v387 = vadd.f32 %v368, %v386
      %v388 = vpop.f32.mrf.mxu0
      %v389 = vadd.f32 %v370, %v388
      %390 = vdwg.mxu0
      %vm391 = vcmask 130048
      %v392 = vsel %vm391, %v382, 0.0
      %393 = vadd.xlane.f32.xlu0 %v392
      %v394 = vpop.xlane.xlu0 %393
      %v395 = vsel %vm391, %v384, 0.0
      %396 = vadd.xlane.f32.xlu0 %v395
      %v397 = vpop.xlane.xlu0 %396
      %v398 = vsel %vm391, %v387, 0.0
      %399 = vadd.xlane.f32.xlu0 %v398
      %v400 = vpop.xlane.xlu0 %399
      %v401 = vsel %vm391, %v389, 0.0
      %402 = vadd.xlane.f32.xlu0 %v401
      %v403 = vpop.xlane.xlu0 %402
      %v404 = vrcp.pop 16.0
      %v405 = vmul.f32 16.0, %v404
      %v406 = vsub.f32 1.0, %v405
      %v407 = vmul.f32 %v404, %v406
      %v408 = vadd.f32 %v404, %v407
      %vm409 = vweird.f32 %v404
      %v410 = vsel %vm409, %v404, %v408
      %v411 = vmul.f32 %v394, %v410
      %v412 = vmul.f32 %v397, %v410
      %v413 = vmul.f32 %v400, %v410
      %v414 = vmul.f32 %v403, %v410
      %v415 = vsub.f32 %v382, %v411
      %v416 = vsub.f32 %v384, %v412
      %v417 = vsub.f32 %v387, %v413
      %v418 = vsub.f32 %v389, %v414
      %v419 = vmul.f32 %v415, %v415
      %v420 = vmul.f32 %v416, %v416
      %v421 = vmul.f32 %v417, %v417
      %v422 = vmul.f32 %v418, %v418
      %v423 = vsel %vm391, %v419, 0.0
      %424 = vadd.xlane.f32.xlu0 %v423
      %v425 = vpop.xlane.xlu0 %424
      %v426 = vsel %vm391, %v420, 0.0
      %427 = vadd.xlane.f32.xlu0 %v426
      %v428 = vpop.xlane.xlu0 %427
      %v429 = vsel %vm391, %v421, 0.0
      %430 = vadd.xlane.f32.xlu0 %v429
      %v431 = vpop.xlane.xlu0 %430
      %v432 = vsel %vm391, %v422, 0.0
      %433 = vadd.xlane.f32.xlu0 %v432
      %v434 = vpop.xlane.xlu0 %433
      %v435 = vmul.f32 %v425, %v410
      %v436 = vmul.f32 %v428, %v410
      %v437 = vmul.f32 %v431, %v410
      %v438 = vmul.f32 %v434, %v410
      %v439 = vadd.f32 %v435, 1e-05
      %v440 = vadd.f32 %v436, 1e-05
      %v441 = vadd.f32 %v437, 1e-05
      %v442 = vadd.f32 %v438, 1e-05
      %v443 = vrsqrt.pop %v439
      %v444 = vmul.f32 %v443, %v439
      %v445 = vmul.f32 %v444, %v443
      %v446 = vmul.f32 0.5, %v445
      %v447 = vsub.f32 1.5, %v446
      %v448 = vmul.f32 %v443, %v447
      %vm449 = vweird.f32 %v439
      %vm450 = vweird.f32 %v443
      %vm451 = vmor %vm449, %vm450
      %v452 = vsel %vm451, %v443, %v448
      %v453 = vrsqrt.pop %v440
      %v454 = vmul.f32 %v453, %v440
      %v455 = vmul.f32 %v454, %v453
      %v456 = vmul.f32 0.5, %v455
      %v457 = vsub.f32 1.5, %v456
      %v458 = vmul.f32 %v453, %v457
      %vm459 = vweird.f32 %v440
      %vm460 = vweird.f32 %v453
      %vm461 = vmor %vm459, %vm460
      %v462 = vsel %vm461, %v453, %v458
      %v463 = vrsqrt.pop %v441
      %v464 = vmul.f32 %v463, %v441
      %v465 = vmul.f32 %v464, %v463
      %v466 = vmul.f32 0.5, %v465
      %v467 = vsub.f32 1.5, %v466
      %v468 = vmul.f32 %v463, %v467
      %vm469 = vweird.f32 %v441
      %vm470 = vweird.f32 %v463
      %vm471 = vmor %vm469, %vm470
      %v472 = vsel %vm471, %v463, %v468
      %v473 = vrsqrt.pop %v442
      %v474 = vmul.f32 %v473, %v442
      %v475 = vmul.f32 %v474, %v473
      %v476 = vmul.f32 0.5, %v475
      %v477 = vsub.f32 1.5, %v476
      %v478 = vmul.f32 %v473, %v477
      %vm479 = vweird.f32 %v442
      %vm480 = vweird.f32 %v473
      %vm481 = vmor %vm479, %vm480
      %v482 = vsel %vm481, %v473, %v478
      %v483 = vmul.f32 %v415, %v452
      %v484 = vmul.f32 %v416, %v462
      %v485 = vmul.f32 %v417, %v472
      %v486 = vmul.f32 %v418, %v482
      %v487 = vmax.f32 %v483, 0.0
      %v488 = vmax.f32 %v484, 0.0
      %v489 = vmax.f32 %v485, 0.0
      %v490 = vmax.f32 %v486, 0.0
      %491 = vst.msk [vmem:[%s143] sm:$0xff] %vm391, %v487
      %492 = vst.msk [vmem:[%s143 + $0x8] sm:$0xff] %vm391, %v488
      %493 = vst.msk [vmem:[%s143 + $0x10] sm:$0xff] %vm391, %v489
      %494 = vst.msk [vmem:[%s143 + $0x18] sm:$0xff] %vm391, %v490
      %p495 = scmp.lt.s32.totalorder %s13, 1
      %s496 = scalar_select %p495, %s13, 1
      %s497 = smul.addr %s496, 4
      %s498 = smul.addr %s497, 8
      %s499 = scalar_lea.vmem %s2, %s498
      // Predicated region
      $region29: #{forward.13} parent=27 // pred_check
        %p500 = pneg %p78
      $region30: #{forward.13} parent=27 // pred_check_branch
        %502 = sbr.rel (%p500) target = $region32
      $region31: #{forward.13} parent=27 // pred_region
        _
      $region32: #{forward.13} parent=27 // pred_fallthru
        _
    $region28: #{forward.13} parent=5 // pred_fallthru
      _
    %p503 = scmp.le.s32.totalorder 2, %s8
    // Predicated region
    $region33: #{forward.13} parent=5 // pred_check
      %p504 = pneg %p503
    $region34: #{forward.13} parent=5 // pred_check_branch
      %506 = sbr.rel (%p504) target = $region36
    $region35: #{forward.13} parent=5 // pred_region
      %s507 = ssub.s32 %s8, 2
      // Predicated region
      $region37: #{forward.13} parent=35 // pred_check
        %p508 = pneg %p84
      $region38: #{forward.13} parent=35 // pred_check_branch
        %510 = sbr.rel (%p508) target = $region40
      $region39: #{forward.13} parent=35 // pred_region
        %p511 = scmp.lt.s32.totalorder %s14, 1
        %s512 = scalar_select %p511, %s14, 1
        %s513 = smul.addr %s512, 4
        %s514 = smul.addr %s513, 8
        %s515 = scalar_lea.vmem %s2, %s514
      $region40: #{forward.13} parent=35 // pred_fallthru
        _
    $region36: #{forward.13} parent=5 // pred_fallthru
      _
  $region6: #{forward.13} parent=0 // loop_footer
    %s12 = sadd.s32 1, %s8
  $region7: #{forward.13} parent=0 // loop_footer_branch
    %7 = sbr.rel target = $region3
  $region8: #{forward.13} parent=0 // loop_exit
    _

// kernel: forward.14
$region0: #{forward.14}
  #allocation0 [shape = 'u32[]', space=smem, size = 0x4, offset = 0x4, fixed_abs, tag = 'smem constant byte address 0x4 - core index']
  #allocation1 [shape = 'u32[72,128]{1,0:T(1,128)}', space=vmem, size = 0x9000, scoped, tag = 'internal scratch']
  %s0 = inlined_call_operand.vmem [shape: bf16[32,288], index: 0, kind: input, shape index: {}]
  %s1 = inlined_call_operand.vmem [shape: bf16[2,288,16], index: 1, kind: input, shape index: {}]
  %s2 = inlined_call_operand.vmem [shape: f32[2,32,16], index: 2, kind: input, shape index: {}]
  %s3 = inlined_call_operand.vmem [shape: f32[2,32,16], index: 3, kind: output, shape index: {}]
  %s4 = sld [smem:[#allocation0]]
  $region45: #{forward.14} parent=0
    _
  %s6 = ssub.s32 1, %s4
  %s7 = scalar_select 0, %s6, %s4
  loop: start=0, step=1, limit=4
  $region2: #{forward.14} parent=0 // loop_pre_header
    _
  $region3: #{forward.14} parent=0 // loop_header
    %s9 = sphi 0, %s13
    %p10 = scmp.ge.s32.totalorder %s9, 4
    %s17 = sphi 0, %s17
    %s19 = sphi 0, %s17
    %s20 = sphi 0, %s19
    %s34 = sphi 0, %s20
    %s40 = sphi 0, %s42
    %s43 = sphi 0, %s40
    %s44 = sphi 0, %s43
    %s60 = sphi 0, %s44
    %s66 = sphi 0, %s68
    %s69 = sphi 0, %s66
    %s70 = sphi 0, %s69
    %s86 = sphi 0, %s70
    %s92 = sphi 0, %s94
    %s95 = sphi 0, %s92
    %s96 = sphi 0, %s95
    %s112 = sphi 0, %s96
  $region4: #{forward.14} parent=0 // loop_header_branch
    %12 = sbr.rel (%p10) target = $region8
  $region5: #{forward.14} parent=0 // loop_body
    %s14 = ssub.s32 %s9, 1
    %s15 = ssub.s32 %s9, 2
    %s16 = sadd.s32 %s9, 1
    %s18 = sadd.s32 %s17, 1
    %p21 = scmp.eq.s32.totalorder %s9, 1
    %p22 = scmp.ne.s32.totalorder %s17, %s19
    %p23 = scmp.eq.s32.totalorder %s9, 0
    %p24 = por %p22, %p23
    %p25 = scmp.ne.s32.totalorder %s17, %s19
    %p26 = scmp.eq.s32.totalorder %s14, 1
    %p27 = por %p25, %p26
    %p28 = scmp.ne.s32.totalorder %s19, %s20
    %p29 = scmp.eq.s32.totalorder %s14, 0
    %p30 = por %p28, %p29
    %p31 = scmp.ne.s32.totalorder %s19, %s20
    %p32 = scmp.eq.s32.totalorder %s15, 1
    %p33 = por %p31, %p32
    %p35 = scmp.ne.s32.totalorder %s20, %s34
    %p36 = scmp.eq.s32.totalorder %s15, 0
    %p37 = por %p35, %p36
    %s38 = ssub.s32 %s9, %s16
    %p39 = scmp.eq.s32.totalorder %s38, 0
    %s41 = sadd.s32 %s40, 1
    %s42 = scalar_select %p39, %s40, %s41
    %p45 = pneg %p39
    %p46 = scmp.eq.s32.totalorder %s9, 1
    %p47 = por %p45, %p46
    %p48 = scmp.ne.s32.totalorder %s40, %s43
    %p49 = scmp.eq.s32.totalorder %s9, 0
    %p50 = por %p48, %p49
    %p51 = scmp.ne.s32.totalorder %s40, %s43
    %p52 = scmp.eq.s32.totalorder %s14, 1
    %p53 = por %p51, %p52
    %p54 = scmp.ne.s32.totalorder %s43, %s44
    %p55 = scmp.eq.s32.totalorder %s14, 0
    %p56 = por %p54, %p55
    %p57 = scmp.ne.s32.totalorder %s43, %s44
    %p58 = scmp.eq.s32.totalorder %s15, 1
    %p59 = por %p57, %p58
    %p61 = scmp.ne.s32.totalorder %s44, %s60
    %p62 = scmp.eq.s32.totalorder %s15, 0
    %p63 = por %p61, %p62
    %s64 = ssub.s32 %s9, %s16
    %p65 = scmp.eq.s32.totalorder %s64, 0
    %s67 = sadd.s32 %s66, 1
    %s68 = scalar_select %p65, %s66, %s67
    %p71 = pneg %p65
    %p72 = scmp.eq.s32.totalorder %s9, 1
    %p73 = por %p71, %p72
    %p74 = scmp.ne.s32.totalorder %s66, %s69
    %p75 = scmp.eq.s32.totalorder %s9, 0
    %p76 = por %p74, %p75
    %p77 = scmp.ne.s32.totalorder %s66, %s69
    %p78 = scmp.eq.s32.totalorder %s14, 1
    %p79 = por %p77, %p78
    %p80 = scmp.ne.s32.totalorder %s69, %s70
    %p81 = scmp.eq.s32.totalorder %s14, 0
    %p82 = por %p80, %p81
    %p83 = scmp.ne.s32.totalorder %s69, %s70
    %p84 = scmp.eq.s32.totalorder %s15, 1
    %p85 = por %p83, %p84
    %p87 = scmp.ne.s32.totalorder %s70, %s86
    %p88 = scmp.eq.s32.totalorder %s15, 0
    %p89 = por %p87, %p88
    %s90 = ssub.s32 %s9, %s16
    %p91 = scmp.eq.s32.totalorder %s90, 0
    %s93 = sadd.s32 %s92, 1
    %s94 = scalar_select %p91, %s92, %s93
    %p97 = pneg %p91
    %p98 = scmp.eq.s32.totalorder %s9, 1
    %p99 = por %p97, %p98
    %p100 = scmp.ne.s32.totalorder %s92, %s95
    %p101 = scmp.eq.s32.totalorder %s9, 0
    %p102 = por %p100, %p101
    %p103 = scmp.ne.s32.totalorder %s92, %s95
    %p104 = scmp.eq.s32.totalorder %s14, 1
    %p105 = por %p103, %p104
    %p106 = scmp.ne.s32.totalorder %s95, %s96
    %p107 = scmp.eq.s32.totalorder %s14, 0
    %p108 = por %p106, %p107
    %p109 = scmp.ne.s32.totalorder %s95, %s96
    %p110 = scmp.eq.s32.totalorder %s15, 1
    %p111 = por %p109, %p110
    %p113 = scmp.ne.s32.totalorder %s96, %s112
    %p114 = scmp.eq.s32.totalorder %s15, 0
    %p115 = por %p113, %p114
    %p116 = scmp.le.s32.totalorder 1, %s9
    %p117 = scmp.lt.s32.totalorder %s9, 3
    %p118 = pnand %p116, %p117
    %p119 = pneg %p118
    // Predicated region
    $region9: #{forward.14} parent=5 // pred_check
      _
    $region10: #{forward.14} parent=5 // pred_check_branch
      %121 = sbr.rel (%p118) target = $region12
    $region11: #{forward.14} parent=5 // pred_region
      %s122 = ssub.s32 %s9, 1
      // Predicated region
      $region13: #{forward.14} parent=11 // pred_check
        %p123 = pneg %p30
      $region14: #{forward.14} parent=11 // pred_check_branch
        %125 = sbr.rel (%p123) target = $region16
      $region15: #{forward.14} parent=11 // pred_region
        _
      $region16: #{forward.14} parent=11 // pred_fallthru
        _
    $region12: #{forward.14} parent=5 // pred_fallthru
      _
    %p126 = scmp.lt.s32.totalorder %s9, 2
    // Predicated region
    $region17: #{forward.14} parent=5 // pred_check
      %p127 = pneg %p126
    $region18: #{forward.14} parent=5 // pred_check_branch
      %129 = sbr.rel (%p127) target = $region20
    $region19: #{forward.14} parent=5 // pred_region
      // Predicated region
      $region21: #{forward.14} parent=19 // pred_check
        %p130 = pneg %p50
      $region22: #{forward.14} parent=19 // pred_check_branch
        %132 = sbr.rel (%p130) target = $region24
      $region23: #{forward.14} parent=19 // pred_region
        %p133 = scmp.lt.s32.totalorder %s9, 1
        %s134 = scalar_select %p133, %s9, 1
        %s135 = smul.addr %s134, 36
        %s136 = smul.addr %s135, 4
        %s137 = scalar_lea.vmem %s1, %s136
      $region24: #{forward.14} parent=19 // pred_fallthru
        _
      // Predicated region
      $region25: #{forward.14} parent=19 // pred_check
        %p138 = pneg %p76
      $region26: #{forward.14} parent=19 // pred_check_branch
        %140 = sbr.rel (%p138) target = $region28
      $region27: #{forward.14} parent=19 // pred_region
        %p141 = scmp.lt.s32.totalorder %s9, 1
        %s142 = scalar_select %p141, %s9, 1
        %s143 = smul.addr %s142, 4
        %s144 = smul.addr %s143, 8
        %s145 = scalar_lea.vmem %s2, %s144
      $region28: #{forward.14} parent=19 // pred_fallthru
        _
    $region20: #{forward.14} parent=5 // pred_fallthru
      _
    %p146 = scmp.le.s32.totalorder 1, %s9
    %p147 = scmp.lt.s32.totalorder %s9, 3
    %p148 = pnand %p146, %p147
    %p149 = pneg %p148
    // Predicated region
    $region29: #{forward.14} parent=5 // pred_check
      _
    $region30: #{forward.14} parent=5 // pred_check_branch
      %151 = sbr.rel (%p148) target = $region32
    $region31: #{forward.14} parent=5 // pred_region
      %s152 = ssub.s32 %s9, 1
      %p153 = pneg %p30
      %p154 = pneg %p27
      %p155 = scmp.lt.s32.totalorder %s14, 1
      %s156 = scalar_select %p155, %s14, 1
      %s157 = smul.addr %s156, 36
      %s158 = smul.addr %s157, 4
      %s159 = scalar_lea.vmem %s1, %s158
      %p160 = pneg %p56
      %p161 = pneg %p53
      %p162 = scmp.lt.s32.totalorder %s14, 1
      %s163 = scalar_select %p162, %s14, 1
      %s164 = smul.addr %s163, 4
      %s165 = smul.addr %s164, 8
      %s166 = scalar_lea.vmem %s2, %s165
      %p167 = pneg %p82
      %p168 = pneg %p79
      %p169 = pneg %p108
      %p170 = pneg %p105
      %p171 = scmp.lt.s32.totalorder %s14, 1
      %s172 = scalar_select %p171, %s14, 1
      %s173 = smul.addr %s172, 4
      %s174 = smul.addr %s173, 8
      %s175 = scalar_lea.vmem %s3, %s174
      %p176 = scmp.lt.s32.totalorder %s14, 1
      %s177 = scalar_select %p176, %s14, 1
      %s178 = smul.addr %s177, 36
      %s179 = smul.addr %s178, 4
      %s180 = scalar_lea.vmem %s1, %s179
      %p181 = scmp.lt.s32.totalorder %s14, 1
      %s182 = scalar_select %p181, %s14, 1
      %s183 = smul.addr %s182, 4
      %s184 = smul.addr %s183, 8
      %s185 = scalar_lea.vmem %s2, %s184
      %p186 = scmp.lt.s32.totalorder %s14, 1
      %s187 = scalar_select %p186, %s14, 1
      %s188 = smul.addr %s187, 4
      %s189 = smul.addr %s188, 8
      %s190 = scalar_lea.vmem %s3, %s189
      %v192 = vld [vmem:[%s0] sm:$0xff]
      %v193 = vld [vmem:[%s0 + $0x8] sm:$0xf]
      %v194 = vld [vmem:[%s0 + $0xc] sm:$0xff]
      %v195 = vld [vmem:[%s0 + $0x14] sm:$0xf]
      %v196 = vld [vmem:[%s0 + $0x18] sm:$0xff]
      %v197 = vld [vmem:[%s0 + $0x20] sm:$0xf]
      %v198 = vld [vmem:[%s0 + $0x24] sm:$0xff]
      %v199 = vld [vmem:[%s0 + $0x2c] sm:$0xf]
      %v200 = vld [vmem:[%s180] sm:$0xf]
      %v201 = vld [vmem:[%s180 + $0x4] sm:$0xf]
      %v202 = vld [vmem:[%s180 + $0x8] sm:$0xf]
      %v203 = vld [vmem:[%s180 + $0xc] sm:$0xf]
      %v204 = vld [vmem:[%s180 + $0x10] sm:$0xf]
      %v205 = vld [vmem:[%s180 + $0x14] sm:$0xf]
      %v206 = vld [vmem:[%s180 + $0x18] sm:$0xf]
      %v207 = vld [vmem:[%s180 + $0x1c] sm:$0xf]
      %v208 = vld [vmem:[%s180 + $0x20] sm:$0xf]
      %v209 = vld [vmem:[%s180 + $0x24] sm:$0xf]
      %v210 = vld [vmem:[%s180 + $0x28] sm:$0xf]
      %v211 = vld [vmem:[%s180 + $0x2c] sm:$0xf]
      %v212 = vld [vmem:[%s180 + $0x30] sm:$0xf]
      %v213 = vld [vmem:[%s180 + $0x34] sm:$0xf]
      %v214 = vld [vmem:[%s180 + $0x38] sm:$0xf]
      %v215 = vld [vmem:[%s180 + $0x3c] sm:$0xf]
      %v216 = vld [vmem:[%s180 + $0x40] sm:$0xf]
      %v217 = vld [vmem:[%s180 + $0x44] sm:$0xf]
      %v218 = vld [vmem:[%s180 + $0x48] sm:$0xf]
      %v219 = vld [vmem:[%s180 + $0x4c] sm:$0xf]
      %v220 = vld [vmem:[%s180 + $0x50] sm:$0xf]
      %v221 = vld [vmem:[%s180 + $0x54] sm:$0xf]
      %v222 = vld [vmem:[%s180 + $0x58] sm:$0xf]
      %v223 = vld [vmem:[%s180 + $0x5c] sm:$0xf]
      %v224 = vld [vmem:[%s180 + $0x60] sm:$0xf]
      %v225 = vld [vmem:[%s180 + $0x64] sm:$0xf]
      %v226 = vld [vmem:[%s180 + $0x68] sm:$0xf]
      %v227 = vld [vmem:[%s180 + $0x6c] sm:$0xf]
      %v228 = vld [vmem:[%s180 + $0x70] sm:$0xf]
      %v229 = vld [vmem:[%s180 + $0x74] sm:$0xf]
      %v230 = vld [vmem:[%s180 + $0x78] sm:$0xf]
      %v231 = vld [vmem:[%s180 + $0x7c] sm:$0xf]
      %v232 = vld [vmem:[%s180 + $0x80] sm:$0xf]
      %v233 = vld [vmem:[%s180 + $0x84] sm:$0xf]
      %v234 = vld [vmem:[%s180 + $0x88] sm:$0xf]
      %v235 = vld [vmem:[%s180 + $0x8c] sm:$0xf]
      %v244 = vunpack.c.l.b16 %v192
      %v245 = vunpack.c.h.b16 %v192
      %v246 = vunpack.c.l.b16 %v193
      %v247 = vunpack.c.l.b16 %v194
      %v248 = vunpack.c.h.b16 %v194
      %v249 = vunpack.c.l.b16 %v195
      %v250 = vunpack.c.l.b16 %v196
      %v251 = vunpack.c.h.b16 %v196
      %v252 = vunpack.c.l.b16 %v197
      %v253 = vunpack.c.l.b16 %v198
      %v254 = vunpack.c.h.b16 %v198
      %v255 = vunpack.c.l.b16 %v199
      %v256 = vpack.c.b16 %v247, %v244
      %v257 = vpack.c.b16 %v248, %v245
      %v258 = vpack.c.b16 %v249, %v246
      %v259 = vpack.c.b16 %v253, %v250
      %v260 = vpack.c.b16 %v254, %v251
      %v261 = vpack.c.b16 %v255, %v252
      %v302 = vunpack.c.l.b16 %v200
      %v303 = vunpack.c.l.b16 %v201
      %v304 = vunpack.c.l.b16 %v202
      %v305 = vunpack.c.l.b16 %v203
      %v306 = vunpack.c.l.b16 %v204
      %v307 = vunpack.c.l.b16 %v205
      %v308 = vunpack.c.l.b16 %v206
      %v309 = vunpack.c.l.b16 %v207
      %v310 = vunpack.c.l.b16 %v208
      %v311 = vunpack.c.l.b16 %v209
      %v312 = vunpack.c.l.b16 %v210
      %v313 = vunpack.c.l.b16 %v211
      %v314 = vunpack.c.l.b16 %v212
      %v315 = vunpack.c.l.b16 %v213
      %v316 = vunpack.c.l.b16 %v214
      %v317 = vunpack.c.l.b16 %v215
      %v318 = vunpack.c.l.b16 %v216
      %v319 = vunpack.c.l.b16 %v217
      %v320 = vunpack.c.l.b16 %v218
      %v321 = vunpack.c.l.b16 %v219
      %v322 = vunpack.c.l.b16 %v220
      %v323 = vunpack.c.l.b16 %v221
      %v324 = vunpack.c.l.b16 %v222
      %v325 = vunpack.c.l.b16 %v223
      %v326 = vunpack.c.l.b16 %v224
      %v327 = vunpack.c.l.b16 %v225
      %v328 = vunpack.c.l.b16 %v226
      %v329 = vunpack.c.l.b16 %v227
      %v330 = vunpack.c.l.b16 %v228
      %v331 = vunpack.c.l.b16 %v229
      %v332 = vunpack.c.l.b16 %v230
      %v333 = vunpack.c.l.b16 %v231
      %v334 = vunpack.c.l.b16 %v232
      %v335 = vunpack.c.l.b16 %v233
      %v336 = vunpack.c.l.b16 %v234
      %v337 = vunpack.c.l.b16 %v235
      %v338 = vpack.c.b16 %v303, %v302
      %v339 = vpack.c.b16 %v305, %v304
      %v340 = vpack.c.b16 %v307, %v306
      %v341 = vpack.c.b16 %v309, %v308
      %v342 = vpack.c.b16 %v311, %v310
      %v343 = vpack.c.b16 %v313, %v312
      %v344 = vpack.c.b16 %v315, %v314
      %v345 = vpack.c.b16 %v317, %v316
      %v346 = vpack.c.b16 %v319, %v318
      %v347 = vpack.c.b16 %v321, %v320
      %v348 = vpack.c.b16 %v323, %v322
      %v349 = vpack.c.b16 %v325, %v324
      %v350 = vpack.c.b16 %v327, %v326
      %v351 = vpack.c.b16 %v329, %v328
      %v352 = vpack.c.b16 %v331, %v330
      %v353 = vpack.c.b16 %v333, %v332
      %v354 = vpack.c.b16 %v335, %v334
      %v355 = vpack.c.b16 %v337, %v336
      %vm374 = vcmask 261120
      %v376 = vsel %vm374, %v258, 0
      %v379 = vsel %vm374, %v261, 0
      %381 = vmatpush.bf16.msra.mxu0 %v345
      %382 = vmatpush.bf16.msra.mxu0 %v344
      %383 = vmatpush.bf16.msra.mxu0 %v343
      %384 = vmatpush.bf16.msra.mxu0 %v342
      %385 = vmatpush.bf16.msra.mxu0 %v341
      %386 = vmatpush.bf16.msra.mxu0 %v340
      %387 = vmatpush.bf16.msra.mxu0 %v339
      %388 = vmatpush.bf16.msra.mxu0 %v338
      %389 = vmatmul.bf16.gmra.mxu0 %v256
      %v390 = vpop.f32.mrf.mxu0
      %v391 = vadd.f32 0.0, %v390
      %v392 = vpop.f32.mrf.mxu0
      %v393 = vadd.f32 0.0, %v392
      %394 = vmatmul.bf16.gmra.mxu0 %v259
      %v395 = vpop.f32.mrf.mxu0
      %v396 = vadd.f32 0.0, %v395
      %v397 = vpop.f32.mrf.mxu0
      %v398 = vadd.f32 0.0, %v397
      %399 = vdwg.mxu0
      %400 = vmatpush.bf16.msra.mxu0 %v353
      %401 = vmatpush.bf16.msra.mxu0 %v352
      %402 = vmatpush.bf16.msra.mxu0 %v351
      %403 = vmatpush.bf16.msra.mxu0 %v350
      %404 = vmatpush.bf16.msra.mxu0 %v349
      %405 = vmatpush.bf16.msra.mxu0 %v348
      %406 = vmatpush.bf16.msra.mxu0 %v347
      %407 = vmatpush.bf16.msra.mxu0 %v346
      %408 = vmatmul.bf16.gmra.mxu0 %v257
      %v409 = vpop.f32.mrf.mxu0
      %v410 = vadd.f32 %v391, %v409
      %v411 = vpop.f32.mrf.mxu0
      %v412 = vadd.f32 %v393, %v411
      %413 = vmatmul.bf16.gmra.mxu0 %v260
      %v414 = vpop.f32.mrf.mxu0
      %v415 = vadd.f32 %v396, %v414
      %v416 = vpop.f32.mrf.mxu0
      %v417 = vadd.f32 %v398, %v416
      %418 = vdwg.mxu0
      %419 = vmatpush.bf16.msra.mxu0 0
      %420 = vmatpush.bf16.msra.mxu0 0
      %421 = vmatpush.bf16.msra.mxu0 0
      %422 = vmatpush.bf16.msra.mxu0 0
      %423 = vmatpush.bf16.msra.mxu0 0
      %424 = vmatpush.bf16.msra.mxu0 0
      %425 = vmatpush.bf16.msra.mxu0 %v355
      %426 = vmatpush.bf16.msra.mxu0 %v354
      %427 = vmatmul.bf16.gmra.mxu0 %v376
      %v428 = vpop.f32.mrf.mxu0
      %v429 = vadd.f32 %v410, %v428
      %v430 = vpop.f32.mrf.mxu0
      %v431 = vadd.f32 %v412, %v430
      %432 = vmatmul.bf16.gmra.mxu0 %v379
      %v433 = vpop.f32.mrf.mxu0
      %v434 = vadd.f32 %v415, %v433
      %v435 = vpop.f32.mrf.mxu0
      %v436 = vadd.f32 %v417, %v435
      %437 = vdwg.mxu0
      %vm438 = vcmask 130048
      %v439 = vsel %vm438, %v429, 0.0
      %440 = vadd.xlane.f32.xlu0 %v439
      %v441 = vpop.xlane.xlu0 %440
      %v442 = vsel %vm438, %v431, 0.0
      %443 = vadd.xlane.f32.xlu0 %v442
      %v444 = vpop.xlane.xlu0 %443
      %v445 = vsel %vm438, %v434, 0.0
      %446 = vadd.xlane.f32.xlu0 %v445
      %v447 = vpop.xlane.xlu0 %446
      %v448 = vsel %vm438, %v436, 0.0
      %449 = vadd.xlane.f32.xlu0 %v448
      %v450 = vpop.xlane.xlu0 %449
      %v451 = vrcp.pop 16.0
      %v452 = vmul.f32 16.0, %v451
      %v453 = vsub.f32 1.0, %v452
      %v454 = vmul.f32 %v451, %v453
      %v455 = vadd.f32 %v451, %v454
      %vm456 = vweird.f32 %v451
      %v457 = vsel %vm456, %v451, %v455
      %v458 = vmul.f32 %v441, %v457
      %v459 = vmul.f32 %v444, %v457
      %v460 = vmul.f32 %v447, %v457
      %v461 = vmul.f32 %v450, %v457
      %v462 = vsub.f32 %v429, %v458
      %v463 = vsub.f32 %v431, %v459
      %v464 = vsub.f32 %v434, %v460
      %v465 = vsub.f32 %v436, %v461
      %v466 = vmul.f32 %v462, %v462
      %v467 = vmul.f32 %v463, %v463
      %v468 = vmul.f32 %v464, %v464
      %v469 = vmul.f32 %v465, %v465
      %v470 = vsel %vm438, %v466, 0.0
      %471 = vadd.xlane.f32.xlu0 %v470
      %v472 = vpop.xlane.xlu0 %471
      %v473 = vsel %vm438, %v467, 0.0
      %474 = vadd.xlane.f32.xlu0 %v473
      %v475 = vpop.xlane.xlu0 %474
      %v476 = vsel %vm438, %v468, 0.0
      %477 = vadd.xlane.f32.xlu0 %v476
      %v478 = vpop.xlane.xlu0 %477
      %v479 = vsel %vm438, %v469, 0.0
      %480 = vadd.xlane.f32.xlu0 %v479
      %v481 = vpop.xlane.xlu0 %480
      %v482 = vmul.f32 %v472, %v457
      %v483 = vmul.f32 %v475, %v457
      %v484 = vmul.f32 %v478, %v457
      %v485 = vmul.f32 %v481, %v457
      %v486 = vld [vmem:[%s185] sm:$0xff]
      %v487 = vld [vmem:[%s185 + $0x8] sm:$0xff]
      %v488 = vld [vmem:[%s185 + $0x10] sm:$0xff]
      %v489 = vld [vmem:[%s185 + $0x18] sm:$0xff]
      %v490 = vadd.f32 %v482, 1e-05
      %v491 = vadd.f32 %v483, 1e-05
      %v492 = vadd.f32 %v484, 1e-05
      %v493 = vadd.f32 %v485, 1e-05
      %v494 = vrsqrt.pop %v490
      %v495 = vmul.f32 %v494, %v490
      %v496 = vmul.f32 %v495, %v494
      %v497 = vmul.f32 0.5, %v496
      %v498 = vsub.f32 1.5, %v497
      %v499 = vmul.f32 %v494, %v498
      %vm500 = vweird.f32 %v490
      %vm501 = vweird.f32 %v494
      %vm502 = vmor %vm500, %vm501
      %v503 = vsel %vm502, %v494, %v499
      %v504 = vrsqrt.pop %v491
      %v505 = vmul.f32 %v504, %v491
      %v506 = vmul.f32 %v505, %v504
      %v507 = vmul.f32 0.5, %v506
      %v508 = vsub.f32 1.5, %v507
      %v509 = vmul.f32 %v504, %v508
      %vm510 = vweird.f32 %v491
      %vm511 = vweird.f32 %v504
      %vm512 = vmor %vm510, %vm511
      %v513 = vsel %vm512, %v504, %v509
      %v514 = vrsqrt.pop %v492
      %v515 = vmul.f32 %v514, %v492
      %v516 = vmul.f32 %v515, %v514
      %v517 = vmul.f32 0.5, %v516
      %v518 = vsub.f32 1.5, %v517
      %v519 = vmul.f32 %v514, %v518
      %vm520 = vweird.f32 %v492
      %vm521 = vweird.f32 %v514
      %vm522 = vmor %vm520, %vm521
      %v523 = vsel %vm522, %v514, %v519
      %v524 = vrsqrt.pop %v493
      %v525 = vmul.f32 %v524, %v493
      %v526 = vmul.f32 %v525, %v524
      %v527 = vmul.f32 0.5, %v526
      %v528 = vsub.f32 1.5, %v527
      %v529 = vmul.f32 %v524, %v528
      %vm530 = vweird.f32 %v493
      %vm531 = vweird.f32 %v524
      %vm532 = vmor %vm530, %vm531
      %v533 = vsel %vm532, %v524, %v529
      %v534 = vmul.f32 %v462, %v503
      %v535 = vmul.f32 %v463, %v513
      %v536 = vmul.f32 %v464, %v523
      %v537 = vmul.f32 %v465, %v533
      %v538 = vmax.f32 %v534, 0.0
      %v539 = vmax.f32 %v535, 0.0
      %v540 = vmax.f32 %v536, 0.0
      %v541 = vmax.f32 %v537, 0.0
      %v542 = vadd.f32 %v486, %v538
      %v543 = vadd.f32 %v487, %v539
      %v544 = vadd.f32 %v488, %v540
      %v545 = vadd.f32 %v489, %v541
      %546 = vst.msk [vmem:[%s190] sm:$0xff] %vm438, %v542
      %547 = vst.msk [vmem:[%s190 + $0x8] sm:$0xff] %vm438, %v543
      %548 = vst.msk [vmem:[%s190 + $0x10] sm:$0xff] %vm438, %v544
      %549 = vst.msk [vmem:[%s190 + $0x18] sm:$0xff] %vm438, %v545
      %p550 = scmp.lt.s32.totalorder %s14, 1
      %s551 = scalar_select %p550, %s14, 1
      %s552 = smul.addr %s551, 4
      %s553 = smul.addr %s552, 8
      %s554 = scalar_lea.vmem %s3, %s553
      // Predicated region
      $region33: #{forward.14} parent=31 // pred_check
        %p555 = pneg %p105
      $region34: #{forward.14} parent=31 // pred_check_branch
        %557 = sbr.rel (%p555) target = $region36
      $region35: #{forward.14} parent=31 // pred_region
        _
      $region36: #{forward.14} parent=31 // pred_fallthru
        _
    $region32: #{forward.14} parent=5 // pred_fallthru
      _
    %p558 = scmp.le.s32.totalorder 2, %s9
    // Predicated region
    $region37: #{forward.14} parent=5 // pred_check
      %p559 = pneg %p558
    $region38: #{forward.14} parent=5 // pred_check_branch
      %561 = sbr.rel (%p559) target = $region40
    $region39: #{forward.14} parent=5 // pred_region
      %s562 = ssub.s32 %s9, 2
      // Predicated region
      $region41: #{forward.14} parent=39 // pred_check
        %p563 = pneg %p111
      $region42: #{forward.14} parent=39 // pred_check_branch
        %565 = sbr.rel (%p563) target = $region44
      $region43: #{forward.14} parent=39 // pred_region
        %p566 = scmp.lt.s32.totalorder %s15, 1
        %s567 = scalar_select %p566, %s15, 1
        %s568 = smul.addr %s567, 4
        %s569 = smul.addr %s568, 8
        %s570 = scalar_lea.vmem %s3, %s569
      $region44: #{forward.14} parent=39 // pred_fallthru
        _
    $region40: #{forward.14} parent=5 // pred_fallthru
      _
  $region6: #{forward.14} parent=0 // loop_footer
    %s13 = sadd.s32 1, %s9
  $region7: #{forward.14} parent=0 // loop_footer_branch
    %8 = sbr.rel target = $region3
  $region8: #{forward.14} parent=0 // loop_exit
    _

// kernel: forward.17
$region0: #{forward.17}
  #allocation0 [shape = 'u32[]', space=smem, size = 0x4, offset = 0x4, fixed_abs, tag = 'smem constant byte address 0x4 - core index']
  #allocation1 [shape = 'u32[72,128]{1,0:T(1,128)}', space=vmem, size = 0x9000, scoped, tag = 'internal scratch']
  %s0 = inlined_call_operand.vmem [shape: bf16[128,128], index: 0, kind: input, shape index: {}]
  %s1 = inlined_call_operand.vmem [shape: bf16[2,128,16], index: 1, kind: input, shape index: {}]
  %s2 = inlined_call_operand.vmem [shape: f32[2,128,16], index: 2, kind: output, shape index: {}]
  %s3 = sld [smem:[#allocation0]]
  $region41: #{forward.17} parent=0
    _
  %s5 = ssub.s32 1, %s3
  %s6 = scalar_select 0, %s5, %s3
  loop: start=0, step=1, limit=4
  $region2: #{forward.17} parent=0 // loop_pre_header
    _
  $region3: #{forward.17} parent=0 // loop_header
    %s8 = sphi 0, %s12
    %p9 = scmp.ge.s32.totalorder %s8, 4
    %s16 = sphi 0, %s16
    %s18 = sphi 0, %s16
    %s19 = sphi 0, %s18
    %s33 = sphi 0, %s19
    %s39 = sphi 0, %s41
    %s42 = sphi 0, %s39
    %s43 = sphi 0, %s42
    %s59 = sphi 0, %s43
    %s65 = sphi 0, %s67
    %s68 = sphi 0, %s65
    %s69 = sphi 0, %s68
    %s85 = sphi 0, %s69
  $region4: #{forward.17} parent=0 // loop_header_branch
    %11 = sbr.rel (%p9) target = $region8
  $region5: #{forward.17} parent=0 // loop_body
    %s13 = ssub.s32 %s8, 1
    %s14 = ssub.s32 %s8, 2
    %s15 = sadd.s32 %s8, 1
    %s17 = sadd.s32 %s16, 1
    %p20 = scmp.eq.s32.totalorder %s8, 1
    %p21 = scmp.ne.s32.totalorder %s16, %s18
    %p22 = scmp.eq.s32.totalorder %s8, 0
    %p23 = por %p21, %p22
    %p24 = scmp.ne.s32.totalorder %s16, %s18
    %p25 = scmp.eq.s32.totalorder %s13, 1
    %p26 = por %p24, %p25
    %p27 = scmp.ne.s32.totalorder %s18, %s19
    %p28 = scmp.eq.s32.totalorder %s13, 0
    %p29 = por %p27, %p28
    %p30 = scmp.ne.s32.totalorder %s18, %s19
    %p31 = scmp.eq.s32.totalorder %s14, 1
    %p32 = por %p30, %p31
    %p34 = scmp.ne.s32.totalorder %s19, %s33
    %p35 = scmp.eq.s32.totalorder %s14, 0
    %p36 = por %p34, %p35
    %s37 = ssub.s32 %s8, %s15
    %p38 = scmp.eq.s32.totalorder %s37, 0
    %s40 = sadd.s32 %s39, 1
    %s41 = scalar_select %p38, %s39, %s40
    %p44 = pneg %p38
    %p45 = scmp.eq.s32.totalorder %s8, 1
    %p46 = por %p44, %p45
    %p47 = scmp.ne.s32.totalorder %s39, %s42
    %p48 = scmp.eq.s32.totalorder %s8, 0
    %p49 = por %p47, %p48
    %p50 = scmp.ne.s32.totalorder %s39, %s42
    %p51 = scmp.eq.s32.totalorder %s13, 1
    %p52 = por %p50, %p51
    %p53 = scmp.ne.s32.totalorder %s42, %s43
    %p54 = scmp.eq.s32.totalorder %s13, 0
    %p55 = por %p53, %p54
    %p56 = scmp.ne.s32.totalorder %s42, %s43
    %p57 = scmp.eq.s32.totalorder %s14, 1
    %p58 = por %p56, %p57
    %p60 = scmp.ne.s32.totalorder %s43, %s59
    %p61 = scmp.eq.s32.totalorder %s14, 0
    %p62 = por %p60, %p61
    %s63 = ssub.s32 %s8, %s15
    %p64 = scmp.eq.s32.totalorder %s63, 0
    %s66 = sadd.s32 %s65, 1
    %s67 = scalar_select %p64, %s65, %s66
    %p70 = pneg %p64
    %p71 = scmp.eq.s32.totalorder %s8, 1
    %p72 = por %p70, %p71
    %p73 = scmp.ne.s32.totalorder %s65, %s68
    %p74 = scmp.eq.s32.totalorder %s8, 0
    %p75 = por %p73, %p74
    %p76 = scmp.ne.s32.totalorder %s65, %s68
    %p77 = scmp.eq.s32.totalorder %s13, 1
    %p78 = por %p76, %p77
    %p79 = scmp.ne.s32.totalorder %s68, %s69
    %p80 = scmp.eq.s32.totalorder %s13, 0
    %p81 = por %p79, %p80
    %p82 = scmp.ne.s32.totalorder %s68, %s69
    %p83 = scmp.eq.s32.totalorder %s14, 1
    %p84 = por %p82, %p83
    %p86 = scmp.ne.s32.totalorder %s69, %s85
    %p87 = scmp.eq.s32.totalorder %s14, 0
    %p88 = por %p86, %p87
    %p89 = scmp.le.s32.totalorder 1, %s8
    %p90 = scmp.lt.s32.totalorder %s8, 3
    %p91 = pnand %p89, %p90
    %p92 = pneg %p91
    // Predicated region
    $region9: #{forward.17} parent=5 // pred_check
      _
    $region10: #{forward.17} parent=5 // pred_check_branch
      %94 = sbr.rel (%p91) target = $region12
    $region11: #{forward.17} parent=5 // pred_region
      %s95 = ssub.s32 %s8, 1
      // Predicated region
      $region13: #{forward.17} parent=11 // pred_check
        %p96 = pneg %p29
      $region14: #{forward.17} parent=11 // pred_check_branch
        %98 = sbr.rel (%p96) target = $region16
      $region15: #{forward.17} parent=11 // pred_region
        _
      $region16: #{forward.17} parent=11 // pred_fallthru
        _
    $region12: #{forward.17} parent=5 // pred_fallthru
      _
    %p99 = scmp.lt.s32.totalorder %s8, 2
    // Predicated region
    $region17: #{forward.17} parent=5 // pred_check
      %p100 = pneg %p99
    $region18: #{forward.17} parent=5 // pred_check_branch
      %102 = sbr.rel (%p100) target = $region20
    $region19: #{forward.17} parent=5 // pred_region
      // Predicated region
      $region21: #{forward.17} parent=19 // pred_check
        %p103 = pneg %p49
      $region22: #{forward.17} parent=19 // pred_check_branch
        %105 = sbr.rel (%p103) target = $region24
      $region23: #{forward.17} parent=19 // pred_region
        %p106 = scmp.lt.s32.totalorder %s8, 1
        %s107 = scalar_select %p106, %s8, 1
        %s108 = smul.addr %s107, 16
        %s109 = smul.addr %s108, 4
        %s110 = scalar_lea.vmem %s1, %s109
      $region24: #{forward.17} parent=19 // pred_fallthru
        _
    $region20: #{forward.17} parent=5 // pred_fallthru
      _
    %p111 = scmp.le.s32.totalorder 1, %s8
    %p112 = scmp.lt.s32.totalorder %s8, 3
    %p113 = pnand %p111, %p112
    %p114 = pneg %p113
    // Predicated region
    $region25: #{forward.17} parent=5 // pred_check
      _
    $region26: #{forward.17} parent=5 // pred_check_branch
      %116 = sbr.rel (%p113) target = $region28
    $region27: #{forward.17} parent=5 // pred_region
      %s117 = ssub.s32 %s8, 1
      %p118 = pneg %p29
      %p119 = pneg %p26
      %p120 = scmp.lt.s32.totalorder %s13, 1
      %s121 = scalar_select %p120, %s13, 1
      %s122 = smul.addr %s121, 16
      %s123 = smul.addr %s122, 4
      %s124 = scalar_lea.vmem %s1, %s123
      %p125 = pneg %p55
      %p126 = pneg %p52
      %p127 = pneg %p81
      %p128 = pneg %p78
      %p129 = scmp.lt.s32.totalorder %s13, 1
      %s130 = scalar_select %p129, %s13, 1
      %s131 = smul.addr %s130, 16
      %s132 = smul.addr %s131, 8
      %s133 = scalar_lea.vmem %s2, %s132
      %p134 = scmp.lt.s32.totalorder %s13, 1
      %s135 = scalar_select %p134, %s13, 1
      %s136 = smul.addr %s135, 16
      %s137 = smul.addr %s136, 4
      %s138 = scalar_lea.vmem %s1, %s137
      %p139 = scmp.lt.s32.totalorder %s13, 1
      %s140 = scalar_select %p139, %s13, 1
      %s141 = smul.addr %s140, 16
      %s142 = smul.addr %s141, 8
      %s143 = scalar_lea.vmem %s2, %s142
      %v144 = vld [vmem:[%s0] sm:$0xf]
      %v145 = vld [vmem:[%s0 + $0x4] sm:$0xf]
      %v146 = vld [vmem:[%s0 + $0x8] sm:$0xf]
      %v147 = vld [vmem:[%s0 + $0xc] sm:$0xf]
      %v148 = vld [vmem:[%s0 + $0x10] sm:$0xf]
      %v149 = vld [vmem:[%s0 + $0x14] sm:$0xf]
      %v150 = vld [vmem:[%s0 + $0x18] sm:$0xf]
      %v151 = vld [vmem:[%s0 + $0x1c] sm:$0xf]
      %v152 = vld [vmem:[%s0 + $0x20] sm:$0xf]
      %v153 = vld [vmem:[%s0 + $0x24] sm:$0xf]
      %v154 = vld [vmem:[%s0 + $0x28] sm:$0xf]
      %v155 = vld [vmem:[%s0 + $0x2c] sm:$0xf]
      %v156 = vld [vmem:[%s0 + $0x30] sm:$0xf]
      %v157 = vld [vmem:[%s0 + $0x34] sm:$0xf]
      %v158 = vld [vmem:[%s0 + $0x38] sm:$0xf]
      %v159 = vld [vmem:[%s0 + $0x3c] sm:$0xf]
      %v160 = vld [vmem:[%s138] sm:$0xf]
      %v161 = vld [vmem:[%s138 + $0x4] sm:$0xf]
      %v162 = vld [vmem:[%s138 + $0x8] sm:$0xf]
      %v163 = vld [vmem:[%s138 + $0xc] sm:$0xf]
      %v164 = vld [vmem:[%s138 + $0x10] sm:$0xf]
      %v165 = vld [vmem:[%s138 + $0x14] sm:$0xf]
      %v166 = vld [vmem:[%s138 + $0x18] sm:$0xf]
      %v167 = vld [vmem:[%s138 + $0x1c] sm:$0xf]
      %v168 = vld [vmem:[%s138 + $0x20] sm:$0xf]
      %v169 = vld [vmem:[%s138 + $0x24] sm:$0xf]
      %v170 = vld [vmem:[%s138 + $0x28] sm:$0xf]
      %v171 = vld [vmem:[%s138 + $0x2c] sm:$0xf]
      %v172 = vld [vmem:[%s138 + $0x30] sm:$0xf]
      %v173 = vld [vmem:[%s138 + $0x34] sm:$0xf]
      %v174 = vld [vmem:[%s138 + $0x38] sm:$0xf]
      %v175 = vld [vmem:[%s138 + $0x3c] sm:$0xf]
      %v192 = vunpack.c.l.b16 %v144
      %v193 = vunpack.c.l.b16 %v145
      %v194 = vunpack.c.l.b16 %v146
      %v195 = vunpack.c.l.b16 %v147
      %v196 = vunpack.c.l.b16 %v148
      %v197 = vunpack.c.l.b16 %v149
      %v198 = vunpack.c.l.b16 %v150
      %v199 = vunpack.c.l.b16 %v151
      %v200 = vunpack.c.l.b16 %v152
      %v201 = vunpack.c.l.b16 %v153
      %v202 = vunpack.c.l.b16 %v154
      %v203 = vunpack.c.l.b16 %v155
      %v204 = vunpack.c.l.b16 %v156
      %v205 = vunpack.c.l.b16 %v157
      %v206 = vunpack.c.l.b16 %v158
      %v207 = vunpack.c.l.b16 %v159
      %v208 = vpack.c.b16 %v193, %v192
      %v209 = vpack.c.b16 %v195, %v194
      %v210 = vpack.c.b16 %v197, %v196
      %v211 = vpack.c.b16 %v199, %v198
      %v212 = vpack.c.b16 %v201, %v200
      %v213 = vpack.c.b16 %v203, %v202
      %v214 = vpack.c.b16 %v205, %v204
      %v215 = vpack.c.b16 %v207, %v206
      %v240 = vunpack.c.l.b16 %v160
      %v241 = vunpack.c.l.b16 %v161
      %v242 = vunpack.c.l.b16 %v162
      %v243 = vunpack.c.l.b16 %v163
      %v244 = vunpack.c.l.b16 %v164
      %v245 = vunpack.c.l.b16 %v165
      %v246 = vunpack.c.l.b16 %v166
      %v247 = vunpack.c.l.b16 %v167
      %v248 = vunpack.c.l.b16 %v168
      %v249 = vunpack.c.l.b16 %v169
      %v250 = vunpack.c.l.b16 %v170
      %v251 = vunpack.c.l.b16 %v171
      %v252 = vunpack.c.l.b16 %v172
      %v253 = vunpack.c.l.b16 %v173
      %v254 = vunpack.c.l.b16 %v174
      %v255 = vunpack.c.l.b16 %v175
      %v256 = vpack.c.b16 %v241, %v240
      %v257 = vpack.c.b16 %v243, %v242
      %v258 = vpack.c.b16 %v245, %v244
      %v259 = vpack.c.b16 %v247, %v246
      %v260 = vpack.c.b16 %v249, %v248
      %v261 = vpack.c.b16 %v251, %v250
      %v262 = vpack.c.b16 %v253, %v252
      %v263 = vpack.c.b16 %v255, %v254
      %272 = vmatpush.bf16.msra.mxu0 %v263
      %273 = vmatpush.bf16.msra.mxu0 %v262
      %274 = vmatpush.bf16.msra.mxu0 %v261
      %275 = vmatpush.bf16.msra.mxu0 %v260
      %276 = vmatpush.bf16.msra.mxu0 %v259
      %277 = vmatpush.bf16.msra.mxu0 %v258
      %278 = vmatpush.bf16.msra.mxu0 %v257
      %279 = vmatpush.bf16.msra.mxu0 %v256
      %280 = vmatmul.bf16.gmra.mxu0 %v208
      %v281 = vpop.f32.mrf.mxu0
      %v282 = vadd.f32 0.0, %v281
      %v283 = vpop.f32.mrf.mxu0
      %v284 = vadd.f32 0.0, %v283
      %285 = vmatmul.bf16.gmra.mxu0 %v209
      %v286 = vpop.f32.mrf.mxu0
      %v287 = vadd.f32 0.0, %v286
      %v288 = vpop.f32.mrf.mxu0
      %v289 = vadd.f32 0.0, %v288
      %290 = vmatmul.bf16.gmra.mxu0 %v210
      %v291 = vpop.f32.mrf.mxu0
      %v292 = vadd.f32 0.0, %v291
      %v293 = vpop.f32.mrf.mxu0
      %v294 = vadd.f32 0.0, %v293
      %295 = vmatmul.bf16.gmra.mxu0 %v211
      %v296 = vpop.f32.mrf.mxu0
      %v297 = vadd.f32 0.0, %v296
      %v298 = vpop.f32.mrf.mxu0
      %v299 = vadd.f32 0.0, %v298
      %300 = vmatmul.bf16.gmra.mxu0 %v212
      %v301 = vpop.f32.mrf.mxu0
      %v302 = vadd.f32 0.0, %v301
      %v303 = vpop.f32.mrf.mxu0
      %v304 = vadd.f32 0.0, %v303
      %305 = vmatmul.bf16.gmra.mxu0 %v213
      %v306 = vpop.f32.mrf.mxu0
      %v307 = vadd.f32 0.0, %v306
      %v308 = vpop.f32.mrf.mxu0
      %v309 = vadd.f32 0.0, %v308
      %310 = vmatmul.bf16.gmra.mxu0 %v214
      %v311 = vpop.f32.mrf.mxu0
      %v312 = vadd.f32 0.0, %v311
      %v313 = vpop.f32.mrf.mxu0
      %v314 = vadd.f32 0.0, %v313
      %315 = vmatmul.bf16.gmra.mxu0 %v215
      %v316 = vpop.f32.mrf.mxu0
      %v317 = vadd.f32 0.0, %v316
      %v318 = vpop.f32.mrf.mxu0
      %v319 = vadd.f32 0.0, %v318
      %320 = vdwg.mxu0
      %v321 = vadd.f32 %v282, %v292
      %v322 = vadd.f32 %v284, %v294
      %v323 = vadd.f32 %v287, %v297
      %v324 = vadd.f32 %v289, %v299
      %v325 = vadd.f32 %v321, %v302
      %v326 = vadd.f32 %v322, %v304
      %v327 = vadd.f32 %v323, %v307
      %v328 = vadd.f32 %v324, %v309
      %v329 = vadd.f32 %v325, %v312
      %v330 = vadd.f32 %v326, %v314
      %v331 = vadd.f32 %v327, %v317
      %v332 = vadd.f32 %v328, %v319
      %vm333 = vcmask 130048
      %v334 = vsel %vm333, %v329, 0.0
      %335 = vadd.xlane.f32.xlu0 %v334
      %v336 = vpop.xlane.xlu0 %335
      %v337 = vsel %vm333, %v330, 0.0
      %338 = vadd.xlane.f32.xlu0 %v337
      %v339 = vpop.xlane.xlu0 %338
      %v340 = vsel %vm333, %v331, 0.0
      %341 = vadd.xlane.f32.xlu0 %v340
      %v342 = vpop.xlane.xlu0 %341
      %v343 = vsel %vm333, %v332, 0.0
      %344 = vadd.xlane.f32.xlu0 %v343
      %v345 = vpop.xlane.xlu0 %344
      %v346 = vrcp.pop 16.0
      %v347 = vmul.f32 16.0, %v346
      %v348 = vsub.f32 1.0, %v347
      %v349 = vmul.f32 %v346, %v348
      %v350 = vadd.f32 %v346, %v349
      %vm351 = vweird.f32 %v346
      %v352 = vsel %vm351, %v346, %v350
      %v353 = vmul.f32 %v336, %v352
      %v354 = vmul.f32 %v339, %v352
      %v355 = vmul.f32 %v342, %v352
      %v356 = vmul.f32 %v345, %v352
      %v357 = vmul.f32 %v353, 0.25
      %v358 = vmul.f32 %v354, 0.25
      %v359 = vmul.f32 %v355, 0.25
      %v360 = vmul.f32 %v356, 0.25
      %v361 = vsub.f32 %v282, %v357
      %v362 = vsub.f32 %v284, %v358
      %v363 = vsub.f32 %v287, %v359
      %v364 = vsub.f32 %v289, %v360
      %v365 = vmul.f32 %v361, %v361
      %v366 = vmul.f32 %v362, %v362
      %v367 = vmul.f32 %v363, %v363
      %v368 = vmul.f32 %v364, %v364
      %v369 = vsel %vm333, %v365, 0.0
      %370 = vadd.xlane.f32.xlu0 %v369
      %v371 = vpop.xlane.xlu0 %370
      %v372 = vsel %vm333, %v366, 0.0
      %373 = vadd.xlane.f32.xlu0 %v372
      %v374 = vpop.xlane.xlu0 %373
      %v375 = vsel %vm333, %v367, 0.0
      %376 = vadd.xlane.f32.xlu0 %v375
      %v377 = vpop.xlane.xlu0 %376
      %v378 = vsel %vm333, %v368, 0.0
      %379 = vadd.xlane.f32.xlu0 %v378
      %v380 = vpop.xlane.xlu0 %379
      %v381 = vmul.f32 %v371, %v352
      %v382 = vmul.f32 %v374, %v352
      %v383 = vmul.f32 %v377, %v352
      %v384 = vmul.f32 %v380, %v352
      %v385 = vadd.f32 %v381, 0.0
      %v386 = vadd.f32 %v382, 0.0
      %v387 = vadd.f32 %v383, 0.0
      %v388 = vadd.f32 %v384, 0.0
      %v389 = vsub.f32 %v292, %v357
      %v390 = vsub.f32 %v294, %v358
      %v391 = vsub.f32 %v297, %v359
      %v392 = vsub.f32 %v299, %v360
      %v393 = vmul.f32 %v389, %v389
      %v394 = vmul.f32 %v390, %v390
      %v395 = vmul.f32 %v391, %v391
      %v396 = vmul.f32 %v392, %v392
      %v397 = vsel %vm333, %v393, 0.0
      %398 = vadd.xlane.f32.xlu0 %v397
      %v399 = vpop.xlane.xlu0 %398
      %v400 = vsel %vm333, %v394, 0.0
      %401 = vadd.xlane.f32.xlu0 %v400
      %v402 = vpop.xlane.xlu0 %401
      %v403 = vsel %vm333, %v395, 0.0
      %404 = vadd.xlane.f32.xlu0 %v403
      %v405 = vpop.xlane.xlu0 %404
      %v406 = vsel %vm333, %v396, 0.0
      %407 = vadd.xlane.f32.xlu0 %v406
      %v408 = vpop.xlane.xlu0 %407
      %v409 = vmul.f32 %v399, %v352
      %v410 = vmul.f32 %v402, %v352
      %v411 = vmul.f32 %v405, %v352
      %v412 = vmul.f32 %v408, %v352
      %v413 = vadd.f32 %v385, %v409
      %v414 = vadd.f32 %v386, %v410
      %v415 = vadd.f32 %v387, %v411
      %v416 = vadd.f32 %v388, %v412
      %v417 = vsub.f32 %v302, %v357
      %v418 = vsub.f32 %v304, %v358
      %v419 = vsub.f32 %v307, %v359
      %v420 = vsub.f32 %v309, %v360
      %v421 = vmul.f32 %v417, %v417
      %v422 = vmul.f32 %v418, %v418
      %v423 = vmul.f32 %v419, %v419
      %v424 = vmul.f32 %v420, %v420
      %v425 = vsel %vm333, %v421, 0.0
      %426 = vadd.xlane.f32.xlu0 %v425
      %v427 = vpop.xlane.xlu0 %426
      %v428 = vsel %vm333, %v422, 0.0
      %429 = vadd.xlane.f32.xlu0 %v428
      %v430 = vpop.xlane.xlu0 %429
      %v431 = vsel %vm333, %v423, 0.0
      %432 = vadd.xlane.f32.xlu0 %v431
      %v433 = vpop.xlane.xlu0 %432
      %v434 = vsel %vm333, %v424, 0.0
      %435 = vadd.xlane.f32.xlu0 %v434
      %v436 = vpop.xlane.xlu0 %435
      %v437 = vmul.f32 %v427, %v352
      %v438 = vmul.f32 %v430, %v352
      %v439 = vmul.f32 %v433, %v352
      %v440 = vmul.f32 %v436, %v352
      %v441 = vadd.f32 %v413, %v437
      %v442 = vadd.f32 %v414, %v438
      %v443 = vadd.f32 %v415, %v439
      %v444 = vadd.f32 %v416, %v440
      %v445 = vsub.f32 %v312, %v357
      %v446 = vsub.f32 %v314, %v358
      %v447 = vsub.f32 %v317, %v359
      %v448 = vsub.f32 %v319, %v360
      %v449 = vmul.f32 %v445, %v445
      %v450 = vmul.f32 %v446, %v446
      %v451 = vmul.f32 %v447, %v447
      %v452 = vmul.f32 %v448, %v448
      %v453 = vsel %vm333, %v449, 0.0
      %454 = vadd.xlane.f32.xlu0 %v453
      %v455 = vpop.xlane.xlu0 %454
      %v456 = vsel %vm333, %v450, 0.0
      %457 = vadd.xlane.f32.xlu0 %v456
      %v458 = vpop.xlane.xlu0 %457
      %v459 = vsel %vm333, %v451, 0.0
      %460 = vadd.xlane.f32.xlu0 %v459
      %v461 = vpop.xlane.xlu0 %460
      %v462 = vsel %vm333, %v452, 0.0
      %463 = vadd.xlane.f32.xlu0 %v462
      %v464 = vpop.xlane.xlu0 %463
      %v465 = vmul.f32 %v455, %v352
      %v466 = vmul.f32 %v458, %v352
      %v467 = vmul.f32 %v461, %v352
      %v468 = vmul.f32 %v464, %v352
      %v469 = vadd.f32 %v441, %v465
      %v470 = vadd.f32 %v442, %v466
      %v471 = vadd.f32 %v443, %v467
      %v472 = vadd.f32 %v444, %v468
      %v473 = vmul.f32 %v469, 0.25
      %v474 = vmul.f32 %v470, 0.25
      %v475 = vmul.f32 %v471, 0.25
      %v476 = vmul.f32 %v472, 0.25
      %v477 = vadd.f32 %v473, 1e-05
      %v478 = vadd.f32 %v474, 1e-05
      %v479 = vadd.f32 %v475, 1e-05
      %v480 = vadd.f32 %v476, 1e-05
      %v481 = vrsqrt.pop %v477
      %v482 = vmul.f32 %v481, %v477
      %v483 = vmul.f32 %v482, %v481
      %v484 = vmul.f32 0.5, %v483
      %v485 = vsub.f32 1.5, %v484
      %v486 = vmul.f32 %v481, %v485
      %vm487 = vweird.f32 %v477
      %vm488 = vweird.f32 %v481
      %vm489 = vmor %vm487, %vm488
      %v490 = vsel %vm489, %v481, %v486
      %v491 = vrsqrt.pop %v478
      %v492 = vmul.f32 %v491, %v478
      %v493 = vmul.f32 %v492, %v491
      %v494 = vmul.f32 0.5, %v493
      %v495 = vsub.f32 1.5, %v494
      %v496 = vmul.f32 %v491, %v495
      %vm497 = vweird.f32 %v478
      %vm498 = vweird.f32 %v491
      %vm499 = vmor %vm497, %vm498
      %v500 = vsel %vm499, %v491, %v496
      %v501 = vrsqrt.pop %v479
      %v502 = vmul.f32 %v501, %v479
      %v503 = vmul.f32 %v502, %v501
      %v504 = vmul.f32 0.5, %v503
      %v505 = vsub.f32 1.5, %v504
      %v506 = vmul.f32 %v501, %v505
      %vm507 = vweird.f32 %v479
      %vm508 = vweird.f32 %v501
      %vm509 = vmor %vm507, %vm508
      %v510 = vsel %vm509, %v501, %v506
      %v511 = vrsqrt.pop %v480
      %v512 = vmul.f32 %v511, %v480
      %v513 = vmul.f32 %v512, %v511
      %v514 = vmul.f32 0.5, %v513
      %v515 = vsub.f32 1.5, %v514
      %v516 = vmul.f32 %v511, %v515
      %vm517 = vweird.f32 %v480
      %vm518 = vweird.f32 %v511
      %vm519 = vmor %vm517, %vm518
      %v520 = vsel %vm519, %v511, %v516
      %v521 = vmul.f32 %v361, %v490
      %v522 = vmul.f32 %v362, %v500
      %v523 = vmul.f32 %v363, %v510
      %v524 = vmul.f32 %v364, %v520
      %v525 = vmax.f32 %v521, 0.0
      %v526 = vmax.f32 %v522, 0.0
      %v527 = vmax.f32 %v523, 0.0
      %v528 = vmax.f32 %v524, 0.0
      %529 = vst.msk [vmem:[%s143] sm:$0xff] %vm333, %v525
      %530 = vst.msk [vmem:[%s143 + $0x8] sm:$0xff] %vm333, %v526
      %531 = vst.msk [vmem:[%s143 + $0x10] sm:$0xff] %vm333, %v527
      %532 = vst.msk [vmem:[%s143 + $0x18] sm:$0xff] %vm333, %v528
      %v533 = vmul.f32 %v389, %v490
      %v534 = vmul.f32 %v390, %v500
      %v535 = vmul.f32 %v391, %v510
      %v536 = vmul.f32 %v392, %v520
      %v537 = vmax.f32 %v533, 0.0
      %v538 = vmax.f32 %v534, 0.0
      %v539 = vmax.f32 %v535, 0.0
      %v540 = vmax.f32 %v536, 0.0
      %541 = vst.msk [vmem:[%s143 + $0x20] sm:$0xff] %vm333, %v537
      %542 = vst.msk [vmem:[%s143 + $0x28] sm:$0xff] %vm333, %v538
      %543 = vst.msk [vmem:[%s143 + $0x30] sm:$0xff] %vm333, %v539
      %544 = vst.msk [vmem:[%s143 + $0x38] sm:$0xff] %vm333, %v540
      %v545 = vmul.f32 %v417, %v490
      %v546 = vmul.f32 %v418, %v500
      %v547 = vmul.f32 %v419, %v510
      %v548 = vmul.f32 %v420, %v520
      %v549 = vmax.f32 %v545, 0.0
      %v550 = vmax.f32 %v546, 0.0
      %v551 = vmax.f32 %v547, 0.0
      %v552 = vmax.f32 %v548, 0.0
      %553 = vst.msk [vmem:[%s143 + $0x40] sm:$0xff] %vm333, %v549
      %554 = vst.msk [vmem:[%s143 + $0x48] sm:$0xff] %vm333, %v550
      %555 = vst.msk [vmem:[%s143 + $0x50] sm:$0xff] %vm333, %v551
      %556 = vst.msk [vmem:[%s143 + $0x58] sm:$0xff] %vm333, %v552
      %v557 = vmul.f32 %v445, %v490
      %v558 = vmul.f32 %v446, %v500
      %v559 = vmul.f32 %v447, %v510
      %v560 = vmul.f32 %v448, %v520
      %v561 = vmax.f32 %v557, 0.0
      %v562 = vmax.f32 %v558, 0.0
      %v563 = vmax.f32 %v559, 0.0
      %v564 = vmax.f32 %v560, 0.0
      %565 = vst.msk [vmem:[%s143 + $0x60] sm:$0xff] %vm333, %v561
      %566 = vst.msk [vmem:[%s143 + $0x68] sm:$0xff] %vm333, %v562
      %567 = vst.msk [vmem:[%s143 + $0x70] sm:$0xff] %vm333, %v563
      %568 = vst.msk [vmem:[%s143 + $0x78] sm:$0xff] %vm333, %v564
      %p569 = scmp.lt.s32.totalorder %s13, 1
      %s570 = scalar_select %p569, %s13, 1
      %s571 = smul.addr %s570, 16
      %s572 = smul.addr %s571, 8
      %s573 = scalar_lea.vmem %s2, %s572
      // Predicated region
      $region29: #{forward.17} parent=27 // pred_check
        %p574 = pneg %p78
      $region30: #{forward.17} parent=27 // pred_check_branch
        %576 = sbr.rel (%p574) target = $region32
      $region31: #{forward.17} parent=27 // pred_region
        _
      $region32: #{forward.17} parent=27 // pred_fallthru
        _
    $region28: #{forward.17} parent=5 // pred_fallthru
      _
    %p577 = scmp.le.s32.totalorder 2, %s8
    // Predicated region
    $region33: #{forward.17} parent=5 // pred_check
      %p578 = pneg %p577
    $region34: #{forward.17} parent=5 // pred_check_branch
      %580 = sbr.rel (%p578) target = $region36
    $region35: #{forward.17} parent=5 // pred_region
      %s581 = ssub.s32 %s8, 2
      // Predicated region
      $region37: #{forward.17} parent=35 // pred_check
        %p582 = pneg %p84
      $region38: #{forward.17} parent=35 // pred_check_branch
        %584 = sbr.rel (%p582) target = $region40
      $region39: #{forward.17} parent=35 // pred_region
        %p585 = scmp.lt.s32.totalorder %s14, 1
        %s586 = scalar_select %p585, %s14, 1
        %s587 = smul.addr %s586, 16
        %s588 = smul.addr %s587, 8
        %s589 = scalar_lea.vmem %s2, %s588
      $region40: #{forward.17} parent=35 // pred_fallthru
        _
    $region36: #{forward.17} parent=5 // pred_fallthru
      _
  $region6: #{forward.17} parent=0 // loop_footer
    %s12 = sadd.s32 1, %s8
  $region7: #{forward.17} parent=0 // loop_footer_branch
    %7 = sbr.rel target = $region3
  $region8: #{forward.17} parent=0 // loop_exit
    _

// kernel: forward.18
$region0: #{forward.18}
  #allocation0 [shape = 'u32[]', space=smem, size = 0x4, offset = 0x4, fixed_abs, tag = 'smem constant byte address 0x4 - core index']
  #allocation1 [shape = 'u32[72,128]{1,0:T(1,128)}', space=vmem, size = 0x9000, scoped, tag = 'internal scratch']
  %s0 = inlined_call_operand.vmem [shape: bf16[64,128], index: 0, kind: input, shape index: {}]
  %s1 = inlined_call_operand.vmem [shape: bf16[2,128,64], index: 1, kind: input, shape index: {}]
  %s2 = inlined_call_operand.vmem [shape: f32[2,64,64], index: 2, kind: output, shape index: {}]
  %s3 = sld [smem:[#allocation0]]
  $region41: #{forward.18} parent=0
    _
  %s5 = ssub.s32 1, %s3
  %s6 = scalar_select 0, %s5, %s3
  loop: start=0, step=1, limit=4
  $region2: #{forward.18} parent=0 // loop_pre_header
    _
  $region3: #{forward.18} parent=0 // loop_header
    %s8 = sphi 0, %s12
    %p9 = scmp.ge.s32.totalorder %s8, 4
    %s16 = sphi 0, %s16
    %s18 = sphi 0, %s16
    %s19 = sphi 0, %s18
    %s33 = sphi 0, %s19
    %s39 = sphi 0, %s41
    %s42 = sphi 0, %s39
    %s43 = sphi 0, %s42
    %s59 = sphi 0, %s43
    %s65 = sphi 0, %s67
    %s68 = sphi 0, %s65
    %s69 = sphi 0, %s68
    %s85 = sphi 0, %s69
  $region4: #{forward.18} parent=0 // loop_header_branch
    %11 = sbr.rel (%p9) target = $region8
  $region5: #{forward.18} parent=0 // loop_body
    %s13 = ssub.s32 %s8, 1
    %s14 = ssub.s32 %s8, 2
    %s15 = sadd.s32 %s8, 1
    %s17 = sadd.s32 %s16, 1
    %p20 = scmp.eq.s32.totalorder %s8, 1
    %p21 = scmp.ne.s32.totalorder %s16, %s18
    %p22 = scmp.eq.s32.totalorder %s8, 0
    %p23 = por %p21, %p22
    %p24 = scmp.ne.s32.totalorder %s16, %s18
    %p25 = scmp.eq.s32.totalorder %s13, 1
    %p26 = por %p24, %p25
    %p27 = scmp.ne.s32.totalorder %s18, %s19
    %p28 = scmp.eq.s32.totalorder %s13, 0
    %p29 = por %p27, %p28
    %p30 = scmp.ne.s32.totalorder %s18, %s19
    %p31 = scmp.eq.s32.totalorder %s14, 1
    %p32 = por %p30, %p31
    %p34 = scmp.ne.s32.totalorder %s19, %s33
    %p35 = scmp.eq.s32.totalorder %s14, 0
    %p36 = por %p34, %p35
    %s37 = ssub.s32 %s8, %s15
    %p38 = scmp.eq.s32.totalorder %s37, 0
    %s40 = sadd.s32 %s39, 1
    %s41 = scalar_select %p38, %s39, %s40
    %p44 = pneg %p38
    %p45 = scmp.eq.s32.totalorder %s8, 1
    %p46 = por %p44, %p45
    %p47 = scmp.ne.s32.totalorder %s39, %s42
    %p48 = scmp.eq.s32.totalorder %s8, 0
    %p49 = por %p47, %p48
    %p50 = scmp.ne.s32.totalorder %s39, %s42
    %p51 = scmp.eq.s32.totalorder %s13, 1
    %p52 = por %p50, %p51
    %p53 = scmp.ne.s32.totalorder %s42, %s43
    %p54 = scmp.eq.s32.totalorder %s13, 0
    %p55 = por %p53, %p54
    %p56 = scmp.ne.s32.totalorder %s42, %s43
    %p57 = scmp.eq.s32.totalorder %s14, 1
    %p58 = por %p56, %p57
    %p60 = scmp.ne.s32.totalorder %s43, %s59
    %p61 = scmp.eq.s32.totalorder %s14, 0
    %p62 = por %p60, %p61
    %s63 = ssub.s32 %s8, %s15
    %p64 = scmp.eq.s32.totalorder %s63, 0
    %s66 = sadd.s32 %s65, 1
    %s67 = scalar_select %p64, %s65, %s66
    %p70 = pneg %p64
    %p71 = scmp.eq.s32.totalorder %s8, 1
    %p72 = por %p70, %p71
    %p73 = scmp.ne.s32.totalorder %s65, %s68
    %p74 = scmp.eq.s32.totalorder %s8, 0
    %p75 = por %p73, %p74
    %p76 = scmp.ne.s32.totalorder %s65, %s68
    %p77 = scmp.eq.s32.totalorder %s13, 1
    %p78 = por %p76, %p77
    %p79 = scmp.ne.s32.totalorder %s68, %s69
    %p80 = scmp.eq.s32.totalorder %s13, 0
    %p81 = por %p79, %p80
    %p82 = scmp.ne.s32.totalorder %s68, %s69
    %p83 = scmp.eq.s32.totalorder %s14, 1
    %p84 = por %p82, %p83
    %p86 = scmp.ne.s32.totalorder %s69, %s85
    %p87 = scmp.eq.s32.totalorder %s14, 0
    %p88 = por %p86, %p87
    %p89 = scmp.le.s32.totalorder 1, %s8
    %p90 = scmp.lt.s32.totalorder %s8, 3
    %p91 = pnand %p89, %p90
    %p92 = pneg %p91
    // Predicated region
    $region9: #{forward.18} parent=5 // pred_check
      _
    $region10: #{forward.18} parent=5 // pred_check_branch
      %94 = sbr.rel (%p91) target = $region12
    $region11: #{forward.18} parent=5 // pred_region
      %s95 = ssub.s32 %s8, 1
      // Predicated region
      $region13: #{forward.18} parent=11 // pred_check
        %p96 = pneg %p29
      $region14: #{forward.18} parent=11 // pred_check_branch
        %98 = sbr.rel (%p96) target = $region16
      $region15: #{forward.18} parent=11 // pred_region
        _
      $region16: #{forward.18} parent=11 // pred_fallthru
        _
    $region12: #{forward.18} parent=5 // pred_fallthru
      _
    %p99 = scmp.lt.s32.totalorder %s8, 2
    // Predicated region
    $region17: #{forward.18} parent=5 // pred_check
      %p100 = pneg %p99
    $region18: #{forward.18} parent=5 // pred_check_branch
      %102 = sbr.rel (%p100) target = $region20
    $region19: #{forward.18} parent=5 // pred_region
      // Predicated region
      $region21: #{forward.18} parent=19 // pred_check
        %p103 = pneg %p49
      $region22: #{forward.18} parent=19 // pred_check_branch
        %105 = sbr.rel (%p103) target = $region24
      $region23: #{forward.18} parent=19 // pred_region
        %p106 = scmp.lt.s32.totalorder %s8, 1
        %s107 = scalar_select %p106, %s8, 1
        %s108 = smul.addr %s107, 16
        %s109 = smul.addr %s108, 4
        %s110 = scalar_lea.vmem %s1, %s109
      $region24: #{forward.18} parent=19 // pred_fallthru
        _
    $region20: #{forward.18} parent=5 // pred_fallthru
      _
    %p111 = scmp.le.s32.totalorder 1, %s8
    %p112 = scmp.lt.s32.totalorder %s8, 3
    %p113 = pnand %p111, %p112
    %p114 = pneg %p113
    // Predicated region
    $region25: #{forward.18} parent=5 // pred_check
      _
    $region26: #{forward.18} parent=5 // pred_check_branch
      %116 = sbr.rel (%p113) target = $region28
    $region27: #{forward.18} parent=5 // pred_region
      %s117 = ssub.s32 %s8, 1
      %p118 = pneg %p29
      %p119 = pneg %p26
      %p120 = scmp.lt.s32.totalorder %s13, 1
      %s121 = scalar_select %p120, %s13, 1
      %s122 = smul.addr %s121, 16
      %s123 = smul.addr %s122, 4
      %s124 = scalar_lea.vmem %s1, %s123
      %p125 = pneg %p55
      %p126 = pneg %p52
      %p127 = pneg %p81
      %p128 = pneg %p78
      %p129 = scmp.lt.s32.totalorder %s13, 1
      %s130 = scalar_select %p129, %s13, 1
      %s131 = smul.addr %s130, 8
      %s132 = smul.addr %s131, 8
      %s133 = scalar_lea.vmem %s2, %s132
      %p134 = scmp.lt.s32.totalorder %s13, 1
      %s135 = scalar_select %p134, %s13, 1
      %s136 = smul.addr %s135, 16
      %s137 = smul.addr %s136, 4
      %s138 = scalar_lea.vmem %s1, %s137
      %p139 = scmp.lt.s32.totalorder %s13, 1
      %s140 = scalar_select %p139, %s13, 1
      %s141 = smul.addr %s140, 8
      %s142 = smul.addr %s141, 8
      %s143 = scalar_lea.vmem %s2, %s142
      %v144 = vld [vmem:[%s0] sm:$0xf]
      %v145 = vld [vmem:[%s0 + $0x4] sm:$0xf]
      %v146 = vld [vmem:[%s0 + $0x8] sm:$0xf]
      %v147 = vld [vmem:[%s0 + $0xc] sm:$0xf]
      %v148 = vld [vmem:[%s0 + $0x10] sm:$0xf]
      %v149 = vld [vmem:[%s0 + $0x14] sm:$0xf]
      %v150 = vld [vmem:[%s0 + $0x18] sm:$0xf]
      %v151 = vld [vmem:[%s0 + $0x1c] sm:$0xf]
      %v152 = vld [vmem:[%s138] sm:$0xf]
      %v153 = vld [vmem:[%s138 + $0x4] sm:$0xf]
      %v154 = vld [vmem:[%s138 + $0x8] sm:$0xf]
      %v155 = vld [vmem:[%s138 + $0xc] sm:$0xf]
      %v156 = vld [vmem:[%s138 + $0x10] sm:$0xf]
      %v157 = vld [vmem:[%s138 + $0x14] sm:$0xf]
      %v158 = vld [vmem:[%s138 + $0x18] sm:$0xf]
      %v159 = vld [vmem:[%s138 + $0x1c] sm:$0xf]
      %v160 = vld [vmem:[%s138 + $0x20] sm:$0xf]
      %v161 = vld [vmem:[%s138 + $0x24] sm:$0xf]
      %v162 = vld [vmem:[%s138 + $0x28] sm:$0xf]
      %v163 = vld [vmem:[%s138 + $0x2c] sm:$0xf]
      %v164 = vld [vmem:[%s138 + $0x30] sm:$0xf]
      %v165 = vld [vmem:[%s138 + $0x34] sm:$0xf]
      %v166 = vld [vmem:[%s138 + $0x38] sm:$0xf]
      %v167 = vld [vmem:[%s138 + $0x3c] sm:$0xf]
      %v176 = vunpack.c.l.b16 %v144
      %v177 = vunpack.c.l.b16 %v145
      %v178 = vunpack.c.l.b16 %v146
      %v179 = vunpack.c.l.b16 %v147
      %v180 = vunpack.c.l.b16 %v148
      %v181 = vunpack.c.l.b16 %v149
      %v182 = vunpack.c.l.b16 %v150
      %v183 = vunpack.c.l.b16 %v151
      %v184 = vpack.c.b16 %v177, %v176
      %v185 = vpack.c.b16 %v179, %v178
      %v186 = vpack.c.b16 %v181, %v180
      %v187 = vpack.c.b16 %v183, %v182
      %v208 = vunpack.c.l.b16 %v152
      %v209 = vunpack.c.l.b16 %v153
      %v210 = vunpack.c.l.b16 %v154
      %v211 = vunpack.c.l.b16 %v155
      %v212 = vunpack.c.l.b16 %v156
      %v213 = vunpack.c.l.b16 %v157
      %v214 = vunpack.c.l.b16 %v158
      %v215 = vunpack.c.l.b16 %v159
      %v216 = vunpack.c.l.b16 %v160
      %v217 = vunpack.c.l.b16 %v161
      %v218 = vunpack.c.l.b16 %v162
      %v219 = vunpack.c.l.b16 %v163
      %v220 = vunpack.c.l.b16 %v164
      %v221 = vunpack.c.l.b16 %v165
      %v222 = vunpack.c.l.b16 %v166
      %v223 = vunpack.c.l.b16 %v167
      %v224 = vpack.c.b16 %v209, %v208
      %v225 = vpack.c.b16 %v211, %v210
      %v226 = vpack.c.b16 %v213, %v212
      %v227 = vpack.c.b16 %v215, %v214
      %v228 = vpack.c.b16 %v217, %v216
      %v229 = vpack.c.b16 %v219, %v218
      %v230 = vpack.c.b16 %v221, %v220
      %v231 = vpack.c.b16 %v223, %v222
      %240 = vmatpush.bf16.msra.mxu0 %v231
      %241 = vmatpush.bf16.msra.mxu0 %v230
      %242 = vmatpush.bf16.msra.mxu0 %v229
      %243 = vmatpush.bf16.msra.mxu0 %v228
      %244 = vmatpush.bf16.msra.mxu0 %v227
      %245 = vmatpush.bf16.msra.mxu0 %v226
      %246 = vmatpush.bf16.msra.mxu0 %v225
      %247 = vmatpush.bf16.msra.mxu0 %v224
      %248 = vmatmul.bf16.gmra.mxu0 %v184
      %v249 = vpop.f32.mrf.mxu0
      %v250 = vadd.f32 0.0, %v249
      %v251 = vpop.f32.mrf.mxu0
      %v252 = vadd.f32 0.0, %v251
      %253 = vmatmul.bf16.gmra.mxu0 %v185
      %v254 = vpop.f32.mrf.mxu0
      %v255 = vadd.f32 0.0, %v254
      %v256 = vpop.f32.mrf.mxu0
      %v257 = vadd.f32 0.0, %v256
      %258 = vmatmul.bf16.gmra.mxu0 %v186
      %v259 = vpop.f32.mrf.mxu0
      %v260 = vadd.f32 0.0, %v259
      %v261 = vpop.f32.mrf.mxu0
      %v262 = vadd.f32 0.0, %v261
      %263 = vmatmul.bf16.gmra.mxu0 %v187
      %v264 = vpop.f32.mrf.mxu0
      %v265 = vadd.f32 0.0, %v264
      %v266 = vpop.f32.mrf.mxu0
      %v267 = vadd.f32 0.0, %v266
      %268 = vdwg.mxu0
      %v269 = vadd.f32 %v250, %v255
      %v270 = vadd.f32 %v252, %v257
      %v271 = vadd.f32 %v269, %v260
      %v272 = vadd.f32 %v270, %v262
      %v273 = vadd.f32 %v271, %v265
      %v274 = vadd.f32 %v272, %v267
      %vm275 = vcmask 523264
      %v276 = vsel %vm275, %v273, 0.0
      %277 = vadd.xlane.f32.xlu0 %v276
      %v278 = vpop.xlane.xlu0 %277
      %v279 = vsel %vm275, %v274, 0.0
      %280 = vadd.xlane.f32.xlu0 %v279
      %v281 = vpop.xlane.xlu0 %280
      %v282 = vrcp.pop 64.0
      %v283 = vmul.f32 64.0, %v282
      %v284 = vsub.f32 1.0, %v283
      %v285 = vmul.f32 %v282, %v284
      %v286 = vadd.f32 %v282, %v285
      %vm287 = vweird.f32 %v282
      %v288 = vsel %vm287, %v282, %v286
      %v289 = vmul.f32 %v278, %v288
      %v290 = vmul.f32 %v281, %v288
      %v291 = vmul.f32 %v289, 0.25
      %v292 = vmul.f32 %v290, 0.25
      %v293 = vsub.f32 %v250, %v291
      %v294 = vsub.f32 %v252, %v292
      %v295 = vmul.f32 %v293, %v293
      %v296 = vmul.f32 %v294, %v294
      %v297 = vsel %vm275, %v295, 0.0
      %298 = vadd.xlane.f32.xlu0 %v297
      %v299 = vpop.xlane.xlu0 %298
      %v300 = vsel %vm275, %v296, 0.0
      %301 = vadd.xlane.f32.xlu0 %v300
      %v302 = vpop.xlane.xlu0 %301
      %v303 = vmul.f32 %v299, %v288
      %v304 = vmul.f32 %v302, %v288
      %v305 = vadd.f32 %v303, 0.0
      %v306 = vadd.f32 %v304, 0.0
      %v307 = vsub.f32 %v255, %v291
      %v308 = vsub.f32 %v257, %v292
      %v309 = vmul.f32 %v307, %v307
      %v310 = vmul.f32 %v308, %v308
      %v311 = vsel %vm275, %v309, 0.0
      %312 = vadd.xlane.f32.xlu0 %v311
      %v313 = vpop.xlane.xlu0 %312
      %v314 = vsel %vm275, %v310, 0.0
      %315 = vadd.xlane.f32.xlu0 %v314
      %v316 = vpop.xlane.xlu0 %315
      %v317 = vmul.f32 %v313, %v288
      %v318 = vmul.f32 %v316, %v288
      %v319 = vadd.f32 %v305, %v317
      %v320 = vadd.f32 %v306, %v318
      %v321 = vsub.f32 %v260, %v291
      %v322 = vsub.f32 %v262, %v292
      %v323 = vmul.f32 %v321, %v321
      %v324 = vmul.f32 %v322, %v322
      %v325 = vsel %vm275, %v323, 0.0
      %326 = vadd.xlane.f32.xlu0 %v325
      %v327 = vpop.xlane.xlu0 %326
      %v328 = vsel %vm275, %v324, 0.0
      %329 = vadd.xlane.f32.xlu0 %v328
      %v330 = vpop.xlane.xlu0 %329
      %v331 = vmul.f32 %v327, %v288
      %v332 = vmul.f32 %v330, %v288
      %v333 = vadd.f32 %v319, %v331
      %v334 = vadd.f32 %v320, %v332
      %v335 = vsub.f32 %v265, %v291
      %v336 = vsub.f32 %v267, %v292
      %v337 = vmul.f32 %v335, %v335
      %v338 = vmul.f32 %v336, %v336
      %v339 = vsel %vm275, %v337, 0.0
      %340 = vadd.xlane.f32.xlu0 %v339
      %v341 = vpop.xlane.xlu0 %340
      %v342 = vsel %vm275, %v338, 0.0
      %343 = vadd.xlane.f32.xlu0 %v342
      %v344 = vpop.xlane.xlu0 %343
      %v345 = vmul.f32 %v341, %v288
      %v346 = vmul.f32 %v344, %v288
      %v347 = vadd.f32 %v333, %v345
      %v348 = vadd.f32 %v334, %v346
      %v349 = vmul.f32 %v347, 0.25
      %v350 = vmul.f32 %v348, 0.25
      %v351 = vadd.f32 %v349, 1e-05
      %v352 = vadd.f32 %v350, 1e-05
      %v353 = vrsqrt.pop %v351
      %v354 = vmul.f32 %v353, %v351
      %v355 = vmul.f32 %v354, %v353
      %v356 = vmul.f32 0.5, %v355
      %v357 = vsub.f32 1.5, %v356
      %v358 = vmul.f32 %v353, %v357
      %vm359 = vweird.f32 %v351
      %vm360 = vweird.f32 %v353
      %vm361 = vmor %vm359, %vm360
      %v362 = vsel %vm361, %v353, %v358
      %v363 = vrsqrt.pop %v352
      %v364 = vmul.f32 %v363, %v352
      %v365 = vmul.f32 %v364, %v363
      %v366 = vmul.f32 0.5, %v365
      %v367 = vsub.f32 1.5, %v366
      %v368 = vmul.f32 %v363, %v367
      %vm369 = vweird.f32 %v352
      %vm370 = vweird.f32 %v363
      %vm371 = vmor %vm369, %vm370
      %v372 = vsel %vm371, %v363, %v368
      %v373 = vmul.f32 %v293, %v362
      %v374 = vmul.f32 %v294, %v372
      %v375 = vmax.f32 %v373, 0.0
      %v376 = vmax.f32 %v374, 0.0
      %377 = vst.msk [vmem:[%s143] sm:$0xff] %vm275, %v375
      %378 = vst.msk [vmem:[%s143 + $0x8] sm:$0xff] %vm275, %v376
      %v379 = vmul.f32 %v307, %v362
      %v380 = vmul.f32 %v308, %v372
      %v381 = vmax.f32 %v379, 0.0
      %v382 = vmax.f32 %v380, 0.0
      %383 = vst.msk [vmem:[%s143 + $0x10] sm:$0xff] %vm275, %v381
      %384 = vst.msk [vmem:[%s143 + $0x18] sm:$0xff] %vm275, %v382
      %v385 = vmul.f32 %v321, %v362
      %v386 = vmul.f32 %v322, %v372
      %v387 = vmax.f32 %v385, 0.0
      %v388 = vmax.f32 %v386, 0.0
      %389 = vst.msk [vmem:[%s143 + $0x20] sm:$0xff] %vm275, %v387
      %390 = vst.msk [vmem:[%s143 + $0x28] sm:$0xff] %vm275, %v388
      %v391 = vmul.f32 %v335, %v362
      %v392 = vmul.f32 %v336, %v372
      %v393 = vmax.f32 %v391, 0.0
      %v394 = vmax.f32 %v392, 0.0
      %395 = vst.msk [vmem:[%s143 + $0x30] sm:$0xff] %vm275, %v393
      %396 = vst.msk [vmem:[%s143 + $0x38] sm:$0xff] %vm275, %v394
      %p397 = scmp.lt.s32.totalorder %s13, 1
      %s398 = scalar_select %p397, %s13, 1
      %s399 = smul.addr %s398, 8
      %s400 = smul.addr %s399, 8
      %s401 = scalar_lea.vmem %s2, %s400
      // Predicated region
      $region29: #{forward.18} parent=27 // pred_check
        %p402 = pneg %p78
      $region30: #{forward.18} parent=27 // pred_check_branch
        %404 = sbr.rel (%p402) target = $region32
      $region31: #{forward.18} parent=27 // pred_region
        _
      $region32: #{forward.18} parent=27 // pred_fallthru
        _
    $region28: #{forward.18} parent=5 // pred_fallthru
      _
    %p405 = scmp.le.s32.totalorder 2, %s8
    // Predicated region
    $region33: #{forward.18} parent=5 // pred_check
      %p406 = pneg %p405
    $region34: #{forward.18} parent=5 // pred_check_branch
      %408 = sbr.rel (%p406) target = $region36
    $region35: #{forward.18} parent=5 // pred_region
      %s409 = ssub.s32 %s8, 2
      // Predicated region
      $region37: #{forward.18} parent=35 // pred_check
        %p410 = pneg %p84
      $region38: #{forward.18} parent=35 // pred_check_branch
        %412 = sbr.rel (%p410) target = $region40
      $region39: #{forward.18} parent=35 // pred_region
        %p413 = scmp.lt.s32.totalorder %s14, 1
        %s414 = scalar_select %p413, %s14, 1
        %s415 = smul.addr %s414, 8
        %s416 = smul.addr %s415, 8
        %s417 = scalar_lea.vmem %s2, %s416
      $region40: #{forward.18} parent=35 // pred_fallthru
        _
    $region36: #{forward.18} parent=5 // pred_fallthru
      _
  $region6: #{forward.18} parent=0 // loop_footer
    %s12 = sadd.s32 1, %s8
  $region7: #{forward.18} parent=0 // loop_footer_branch
    %7 = sbr.rel target = $region3
  $region8: #{forward.18} parent=0 // loop_exit
    _

// kernel: forward.19
$region0: #{forward.19}
  #allocation0 [shape = 'u32[]', space=smem, size = 0x4, offset = 0x4, fixed_abs, tag = 'smem constant byte address 0x4 - core index']
  #allocation1 [shape = 'u32[72,128]{1,0:T(1,128)}', space=vmem, size = 0x9000, scoped, tag = 'internal scratch']
  %s0 = inlined_call_operand.vmem [shape: bf16[27,392], index: 0, kind: input, shape index: {}]
  %s1 = inlined_call_operand.vmem [shape: f32[27,1], index: 1, kind: input, shape index: {}]
  %s2 = inlined_call_operand.vmem [shape: bf16[10,8], index: 2, kind: input, shape index: {}]
  %s3 = inlined_call_operand.vmem [shape: f32[10,1], index: 3, kind: input, shape index: {}]
  %s4 = inlined_call_operand.vmem [shape: bf16[2,392,256], index: 4, kind: input, shape index: {}]
  %s5 = inlined_call_operand.vmem [shape: bf16[2,8,256], index: 5, kind: input, shape index: {}]
  %s6 = inlined_call_operand.vmem [shape: f32[2,3,256], index: 6, kind: input, shape index: {}]
  %s7 = inlined_call_operand.vmem [shape: f32[2,3,256], index: 7, kind: output, shape index: {0}]
  %s8 = inlined_call_operand.vmem [shape: f32[2,10,3,256], index: 8, kind: output, shape index: {1}]
  %s9 = inlined_call_operand.vmem [shape: f32[2,10,3,256], index: 9, kind: output, shape index: {2}]
  %s10 = inlined_call_operand.vmem [shape: f32[2,27,256], index: 10, kind: output, shape index: {3}]
  %11 = xla_tuple %s7, %s8, %s9, %s10
  %s12 = sld [smem:[#allocation0]]
  $region85: #{forward.19} parent=0
    _
  %s14 = ssub.s32 1, %s12
  %s15 = scalar_select 0, %s14, %s12
  loop: start=0, step=1, limit=4
  $region2: #{forward.19} parent=0 // loop_pre_header
    _
  $region3: #{forward.19} parent=0 // loop_header
    %s17 = sphi 0, %s21
    %p18 = scmp.ge.s32.totalorder %s17, 4
    %s25 = sphi 0, %s25
    %s27 = sphi 0, %s25
    %s28 = sphi 0, %s27
    %s42 = sphi 0, %s28
    %s46 = sphi 0, %s46
    %s48 = sphi 0, %s46
    %s49 = sphi 0, %s48
    %s63 = sphi 0, %s49
    %s67 = sphi 0, %s67
    %s69 = sphi 0, %s67
    %s70 = sphi 0, %s69
    %s84 = sphi 0, %s70
    %s88 = sphi 0, %s88
    %s90 = sphi 0, %s88
    %s91 = sphi 0, %s90
    %s105 = sphi 0, %s91
    %s111 = sphi 0, %s113
    %s114 = sphi 0, %s111
    %s115 = sphi 0, %s114
    %s131 = sphi 0, %s115
    %s137 = sphi 0, %s139
    %s140 = sphi 0, %s137
    %s141 = sphi 0, %s140
    %s157 = sphi 0, %s141
    %s163 = sphi 0, %s165
    %s166 = sphi 0, %s163
    %s167 = sphi 0, %s166
    %s183 = sphi 0, %s167
    %s189 = sphi 0, %s191
    %s192 = sphi 0, %s189
    %s193 = sphi 0, %s192
    %s209 = sphi 0, %s193
    %s215 = sphi 0, %s217
    %s218 = sphi 0, %s215
    %s219 = sphi 0, %s218
    %s235 = sphi 0, %s219
    %s241 = sphi 0, %s243
    %s244 = sphi 0, %s241
    %s245 = sphi 0, %s244
    %s261 = sphi 0, %s245
    %s267 = sphi 0, %s269
    %s270 = sphi 0, %s267
    %s271 = sphi 0, %s270
    %s287 = sphi 0, %s271
  $region4: #{forward.19} parent=0 // loop_header_branch
    %20 = sbr.rel (%p18) target = $region8
  $region5: #{forward.19} parent=0 // loop_body
    %s22 = ssub.s32 %s17, 1
    %s23 = ssub.s32 %s17, 2
    %s24 = sadd.s32 %s17, 1
    %s26 = sadd.s32 %s25, 1
    %p29 = scmp.eq.s32.totalorder %s17, 1
    %p30 = scmp.ne.s32.totalorder %s25, %s27
    %p31 = scmp.eq.s32.totalorder %s17, 0
    %p32 = por %p30, %p31
    %p33 = scmp.ne.s32.totalorder %s25, %s27
    %p34 = scmp.eq.s32.totalorder %s22, 1
    %p35 = por %p33, %p34
    %p36 = scmp.ne.s32.totalorder %s27, %s28
    %p37 = scmp.eq.s32.totalorder %s22, 0
    %p38 = por %p36, %p37
    %p39 = scmp.ne.s32.totalorder %s27, %s28
    %p40 = scmp.eq.s32.totalorder %s23, 1
    %p41 = por %p39, %p40
    %p43 = scmp.ne.s32.totalorder %s28, %s42
    %p44 = scmp.eq.s32.totalorder %s23, 0
    %p45 = por %p43, %p44
    %s47 = sadd.s32 %s46, 1
    %p50 = scmp.eq.s32.totalorder %s17, 1
    %p51 = scmp.ne.s32.totalorder %s46, %s48
    %p52 = scmp.eq.s32.totalorder %s17, 0
    %p53 = por %p51, %p52
    %p54 = scmp.ne.s32.totalorder %s46, %s48
    %p55 = scmp.eq.s32.totalorder %s22, 1
    %p56 = por %p54, %p55
    %p57 = scmp.ne.s32.totalorder %s48, %s49
    %p58 = scmp.eq.s32.totalorder %s22, 0
    %p59 = por %p57, %p58
    %p60 = scmp.ne.s32.totalorder %s48, %s49
    %p61 = scmp.eq.s32.totalorder %s23, 1
    %p62 = por %p60, %p61
    %p64 = scmp.ne.s32.totalorder %s49, %s63
    %p65 = scmp.eq.s32.totalorder %s23, 0
    %p66 = por %p64, %p65
    %s68 = sadd.s32 %s67, 1
    %p71 = scmp.eq.s32.totalorder %s17, 1
    %p72 = scmp.ne.s32.totalorder %s67, %s69
    %p73 = scmp.eq.s32.totalorder %s17, 0
    %p74 = por %p72, %p73
    %p75 = scmp.ne.s32.totalorder %s67, %s69
    %p76 = scmp.eq.s32.totalorder %s22, 1
    %p77 = por %p75, %p76
    %p78 = scmp.ne.s32.totalorder %s69, %s70
    %p79 = scmp.eq.s32.totalorder %s22, 0
    %p80 = por %p78, %p79
    %p81 = scmp.ne.s32.totalorder %s69, %s70
    %p82 = scmp.eq.s32.totalorder %s23, 1
    %p83 = por %p81, %p82
    %p85 = scmp.ne.s32.totalorder %s70, %s84
    %p86 = scmp.eq.s32.totalorder %s23, 0
    %p87 = por %p85, %p86
    %s89 = sadd.s32 %s88, 1
    %p92 = scmp.eq.s32.totalorder %s17, 1
    %p93 = scmp.ne.s32.totalorder %s88, %s90
    %p94 = scmp.eq.s32.totalorder %s17, 0
    %p95 = por %p93, %p94
    %p96 = scmp.ne.s32.totalorder %s88, %s90
    %p97 = scmp.eq.s32.totalorder %s22, 1
    %p98 = por %p96, %p97
    %p99 = scmp.ne.s32.totalorder %s90, %s91
    %p100 = scmp.eq.s32.totalorder %s22, 0
    %p101 = por %p99, %p100
    %p102 = scmp.ne.s32.totalorder %s90, %s91
    %p103 = scmp.eq.s32.totalorder %s23, 1
    %p104 = por %p102, %p103
    %p106 = scmp.ne.s32.totalorder %s91, %s105
    %p107 = scmp.eq.s32.totalorder %s23, 0
    %p108 = por %p106, %p107
    %s109 = ssub.s32 %s17, %s24
    %p110 = scmp.eq.s32.totalorder %s109, 0
    %s112 = sadd.s32 %s111, 1
    %s113 = scalar_select %p110, %s111, %s112
    %p116 = pneg %p110
    %p117 = scmp.eq.s32.totalorder %s17, 1
    %p118 = por %p116, %p117
    %p119 = scmp.ne.s32.totalorder %s111, %s114
    %p120 = scmp.eq.s32.totalorder %s17, 0
    %p121 = por %p119, %p120
    %p122 = scmp.ne.s32.totalorder %s111, %s114
    %p123 = scmp.eq.s32.totalorder %s22, 1
    %p124 = por %p122, %p123
    %p125 = scmp.ne.s32.totalorder %s114, %s115
    %p126 = scmp.eq.s32.totalorder %s22, 0
    %p127 = por %p125, %p126
    %p128 = scmp.ne.s32.totalorder %s114, %s115
    %p129 = scmp.eq.s32.totalorder %s23, 1
    %p130 = por %p128, %p129
    %p132 = scmp.ne.s32.totalorder %s115, %s131
    %p133 = scmp.eq.s32.totalorder %s23, 0
    %p134 = por %p132, %p133
    %s135 = ssub.s32 %s17, %s24
    %p136 = scmp.eq.s32.totalorder %s135, 0
    %s138 = sadd.s32 %s137, 1
    %s139 = scalar_select %p136, %s137, %s138
    %p142 = pneg %p136
    %p143 = scmp.eq.s32.totalorder %s17, 1
    %p144 = por %p142, %p143
    %p145 = scmp.ne.s32.totalorder %s137, %s140
    %p146 = scmp.eq.s32.totalorder %s17, 0
    %p147 = por %p145, %p146
    %p148 = scmp.ne.s32.totalorder %s137, %s140
    %p149 = scmp.eq.s32.totalorder %s22, 1
    %p150 = por %p148, %p149
    %p151 = scmp.ne.s32.totalorder %s140, %s141
    %p152 = scmp.eq.s32.totalorder %s22, 0
    %p153 = por %p151, %p152
    %p154 = scmp.ne.s32.totalorder %s140, %s141
    %p155 = scmp.eq.s32.totalorder %s23, 1
    %p156 = por %p154, %p155
    %p158 = scmp.ne.s32.totalorder %s141, %s157
    %p159 = scmp.eq.s32.totalorder %s23, 0
    %p160 = por %p158, %p159
    %s161 = ssub.s32 %s17, %s24
    %p162 = scmp.eq.s32.totalorder %s161, 0
    %s164 = sadd.s32 %s163, 1
    %s165 = scalar_select %p162, %s163, %s164
    %p168 = pneg %p162
    %p169 = scmp.eq.s32.totalorder %s17, 1
    %p170 = por %p168, %p169
    %p171 = scmp.ne.s32.totalorder %s163, %s166
    %p172 = scmp.eq.s32.totalorder %s17, 0
    %p173 = por %p171, %p172
    %p174 = scmp.ne.s32.totalorder %s163, %s166
    %p175 = scmp.eq.s32.totalorder %s22, 1
    %p176 = por %p174, %p175
    %p177 = scmp.ne.s32.totalorder %s166, %s167
    %p178 = scmp.eq.s32.totalorder %s22, 0
    %p179 = por %p177, %p178
    %p180 = scmp.ne.s32.totalorder %s166, %s167
    %p181 = scmp.eq.s32.totalorder %s23, 1
    %p182 = por %p180, %p181
    %p184 = scmp.ne.s32.totalorder %s167, %s183
    %p185 = scmp.eq.s32.totalorder %s23, 0
    %p186 = por %p184, %p185
    %s187 = ssub.s32 %s17, %s24
    %p188 = scmp.eq.s32.totalorder %s187, 0
    %s190 = sadd.s32 %s189, 1
    %s191 = scalar_select %p188, %s189, %s190
    %p194 = pneg %p188
    %p195 = scmp.eq.s32.totalorder %s17, 1
    %p196 = por %p194, %p195
    %p197 = scmp.ne.s32.totalorder %s189, %s192
    %p198 = scmp.eq.s32.totalorder %s17, 0
    %p199 = por %p197, %p198
    %p200 = scmp.ne.s32.totalorder %s189, %s192
    %p201 = scmp.eq.s32.totalorder %s22, 1
    %p202 = por %p200, %p201
    %p203 = scmp.ne.s32.totalorder %s192, %s193
    %p204 = scmp.eq.s32.totalorder %s22, 0
    %p205 = por %p203, %p204
    %p206 = scmp.ne.s32.totalorder %s192, %s193
    %p207 = scmp.eq.s32.totalorder %s23, 1
    %p208 = por %p206, %p207
    %p210 = scmp.ne.s32.totalorder %s193, %s209
    %p211 = scmp.eq.s32.totalorder %s23, 0
    %p212 = por %p210, %p211
    %s213 = ssub.s32 %s17, %s24
    %p214 = scmp.eq.s32.totalorder %s213, 0
    %s216 = sadd.s32 %s215, 1
    %s217 = scalar_select %p214, %s215, %s216
    %p220 = pneg %p214
    %p221 = scmp.eq.s32.totalorder %s17, 1
    %p222 = por %p220, %p221
    %p223 = scmp.ne.s32.totalorder %s215, %s218
    %p224 = scmp.eq.s32.totalorder %s17, 0
    %p225 = por %p223, %p224
    %p226 = scmp.ne.s32.totalorder %s215, %s218
    %p227 = scmp.eq.s32.totalorder %s22, 1
    %p228 = por %p226, %p227
    %p229 = scmp.ne.s32.totalorder %s218, %s219
    %p230 = scmp.eq.s32.totalorder %s22, 0
    %p231 = por %p229, %p230
    %p232 = scmp.ne.s32.totalorder %s218, %s219
    %p233 = scmp.eq.s32.totalorder %s23, 1
    %p234 = por %p232, %p233
    %p236 = scmp.ne.s32.totalorder %s219, %s235
    %p237 = scmp.eq.s32.totalorder %s23, 0
    %p238 = por %p236, %p237
    %s239 = ssub.s32 %s17, %s24
    %p240 = scmp.eq.s32.totalorder %s239, 0
    %s242 = sadd.s32 %s241, 1
    %s243 = scalar_select %p240, %s241, %s242
    %p246 = pneg %p240
    %p247 = scmp.eq.s32.totalorder %s17, 1
    %p248 = por %p246, %p247
    %p249 = scmp.ne.s32.totalorder %s241, %s244
    %p250 = scmp.eq.s32.totalorder %s17, 0
    %p251 = por %p249, %p250
    %p252 = scmp.ne.s32.totalorder %s241, %s244
    %p253 = scmp.eq.s32.totalorder %s22, 1
    %p254 = por %p252, %p253
    %p255 = scmp.ne.s32.totalorder %s244, %s245
    %p256 = scmp.eq.s32.totalorder %s22, 0
    %p257 = por %p255, %p256
    %p258 = scmp.ne.s32.totalorder %s244, %s245
    %p259 = scmp.eq.s32.totalorder %s23, 1
    %p260 = por %p258, %p259
    %p262 = scmp.ne.s32.totalorder %s245, %s261
    %p263 = scmp.eq.s32.totalorder %s23, 0
    %p264 = por %p262, %p263
    %s265 = ssub.s32 %s17, %s24
    %p266 = scmp.eq.s32.totalorder %s265, 0
    %s268 = sadd.s32 %s267, 1
    %s269 = scalar_select %p266, %s267, %s268
    %p272 = pneg %p266
    %p273 = scmp.eq.s32.totalorder %s17, 1
    %p274 = por %p272, %p273
    %p275 = scmp.ne.s32.totalorder %s267, %s270
    %p276 = scmp.eq.s32.totalorder %s17, 0
    %p277 = por %p275, %p276
    %p278 = scmp.ne.s32.totalorder %s267, %s270
    %p279 = scmp.eq.s32.totalorder %s22, 1
    %p280 = por %p278, %p279
    %p281 = scmp.ne.s32.totalorder %s270, %s271
    %p282 = scmp.eq.s32.totalorder %s22, 0
    %p283 = por %p281, %p282
    %p284 = scmp.ne.s32.totalorder %s270, %s271
    %p285 = scmp.eq.s32.totalorder %s23, 1
    %p286 = por %p284, %p285
    %p288 = scmp.ne.s32.totalorder %s271, %s287
    %p289 = scmp.eq.s32.totalorder %s23, 0
    %p290 = por %p288, %p289
    %p291 = scmp.le.s32.totalorder 1, %s17
    %p292 = scmp.lt.s32.totalorder %s17, 3
    %p293 = pnand %p291, %p292
    %p294 = pneg %p293
    // Predicated region
    $region9: #{forward.19} parent=5 // pred_check
      _
    $region10: #{forward.19} parent=5 // pred_check_branch
      %296 = sbr.rel (%p293) target = $region12
    $region11: #{forward.19} parent=5 // pred_region
      %s297 = ssub.s32 %s17, 1
      // Predicated region
      $region13: #{forward.19} parent=11 // pred_check
        %p298 = pneg %p38
      $region14: #{forward.19} parent=11 // pred_check_branch
        %300 = sbr.rel (%p298) target = $region16
      $region15: #{forward.19} parent=11 // pred_region
        _
      $region16: #{forward.19} parent=11 // pred_fallthru
        _
      // Predicated region
      $region17: #{forward.19} parent=11 // pred_check
        %p301 = pneg %p59
      $region18: #{forward.19} parent=11 // pred_check_branch
        %303 = sbr.rel (%p301) target = $region20
      $region19: #{forward.19} parent=11 // pred_region
        _
      $region20: #{forward.19} parent=11 // pred_fallthru
        _
      // Predicated region
      $region21: #{forward.19} parent=11 // pred_check
        %p304 = pneg %p80
      $region22: #{forward.19} parent=11 // pred_check_branch
        %306 = sbr.rel (%p304) target = $region24
      $region23: #{forward.19} parent=11 // pred_region
        _
      $region24: #{forward.19} parent=11 // pred_fallthru
        _
      // Predicated region
      $region25: #{forward.19} parent=11 // pred_check
        %p307 = pneg %p101
      $region26: #{forward.19} parent=11 // pred_check_branch
        %309 = sbr.rel (%p307) target = $region28
      $region27: #{forward.19} parent=11 // pred_region
        _
      $region28: #{forward.19} parent=11 // pred_fallthru
        _
    $region12: #{forward.19} parent=5 // pred_fallthru
      _
    %p310 = scmp.lt.s32.totalorder %s17, 2
    // Predicated region
    $region29: #{forward.19} parent=5 // pred_check
      %p311 = pneg %p310
    $region30: #{forward.19} parent=5 // pred_check_branch
      %313 = sbr.rel (%p311) target = $region32
    $region31: #{forward.19} parent=5 // pred_region
      // Predicated region
      $region33: #{forward.19} parent=31 // pred_check
        %p314 = pneg %p121
      $region34: #{forward.19} parent=31 // pred_check_branch
        %316 = sbr.rel (%p314) target = $region36
      $region35: #{forward.19} parent=31 // pred_region
        %p317 = scmp.lt.s32.totalorder %s17, 1
        %s318 = scalar_select %p317, %s17, 1
        %s319 = smul.addr %s318, 98
        %s320 = smul.addr %s319, 4
        %s321 = scalar_lea.vmem %s4, %s320
      $region36: #{forward.19} parent=31 // pred_fallthru
        _
      // Predicated region
      $region37: #{forward.19} parent=31 // pred_check
        %p322 = pneg %p147
      $region38: #{forward.19} parent=31 // pred_check_branch
        %324 = sbr.rel (%p322) target = $region40
      $region39: #{forward.19} parent=31 // pred_region
        %p325 = scmp.lt.s32.totalorder %s17, 1
        %s326 = scalar_select %p325, %s17, 1
        %s327 = smul.addr %s326, 2
        %s328 = smul.addr %s327, 4
        %s329 = scalar_lea.vmem %s5, %s328
      $region40: #{forward.19} parent=31 // pred_fallthru
        _
      // Predicated region
      $region41: #{forward.19} parent=31 // pred_check
        %p330 = pneg %p173
      $region42: #{forward.19} parent=31 // pred_check_branch
        %332 = sbr.rel (%p330) target = $region44
      $region43: #{forward.19} parent=31 // pred_region
        %p333 = scmp.lt.s32.totalorder %s17, 1
        %s334 = scalar_select %p333, %s17, 1
        %s335 = smul.addr %s334, 2
        %s336 = smul.addr %s335, 4
        %s337 = scalar_lea.vmem %s6, %s336
      $region44: #{forward.19} parent=31 // pred_fallthru
        _
    $region32: #{forward.19} parent=5 // pred_fallthru
      _
    %p338 = scmp.le.s32.totalorder 1, %s17
    %p339 = scmp.lt.s32.totalorder %s17, 3
    %p340 = pnand %p338, %p339
    %p341 = pneg %p340
    // Predicated region
    $region45: #{forward.19} parent=5 // pred_check
      _
    $region46: #{forward.19} parent=5 // pred_check_branch
      %343 = sbr.rel (%p340) target = $region48
    $region47: #{forward.19} parent=5 // pred_region
      %s344 = ssub.s32 %s17, 1
      %p345 = pneg %p38
      %p346 = pneg %p35
      %p347 = pneg %p59
      %p348 = pneg %p56
      %p349 = pneg %p80
      %p350 = pneg %p77
      %p351 = pneg %p101
      %p352 = pneg %p98
      %p353 = scmp.lt.s32.totalorder %s22, 1
      %s354 = scalar_select %p353, %s22, 1
      %s355 = smul.addr %s354, 98
      %s356 = smul.addr %s355, 4
      %s357 = scalar_lea.vmem %s4, %s356
      %p358 = pneg %p127
      %p359 = pneg %p124
      %p360 = scmp.lt.s32.totalorder %s22, 1
      %s361 = scalar_select %p360, %s22, 1
      %s362 = smul.addr %s361, 2
      %s363 = smul.addr %s362, 4
      %s364 = scalar_lea.vmem %s5, %s363
      %p365 = pneg %p153
      %p366 = pneg %p150
      %p367 = scmp.lt.s32.totalorder %s22, 1
      %s368 = scalar_select %p367, %s22, 1
      %s369 = smul.addr %s368, 2
      %s370 = smul.addr %s369, 4
      %s371 = scalar_lea.vmem %s6, %s370
      %p372 = pneg %p179
      %p373 = pneg %p176
      %p374 = pneg %p205
      %p375 = pneg %p202
      %p376 = scmp.lt.s32.totalorder %s22, 1
      %s377 = scalar_select %p376, %s22, 1
      %s378 = smul.addr %s377, 2
      %s379 = smul.addr %s378, 4
      %s380 = scalar_lea.vmem %s7, %s379
      %p381 = pneg %p231
      %p382 = pneg %p228
      %p383 = scmp.lt.s32.totalorder %s22, 1
      %s384 = scalar_select %p383, %s22, 1
      %s385 = smul.addr %s384, 20
      %s386 = smul.addr %s385, 4
      %s387 = scalar_lea.vmem %s8, %s386
      %p388 = pneg %p257
      %p389 = pneg %p254
      %p390 = scmp.lt.s32.totalorder %s22, 1
      %s391 = scalar_select %p390, %s22, 1
      %s392 = smul.addr %s391, 20
      %s393 = smul.addr %s392, 4
      %s394 = scalar_lea.vmem %s9, %s393
      %p395 = pneg %p283
      %p396 = pneg %p280
      %p397 = scmp.lt.s32.totalorder %s22, 1
      %s398 = scalar_select %p397, %s22, 1
      %s399 = smul.addr %s398, 8
      %s400 = smul.addr %s399, 8
      %s401 = scalar_lea.vmem %s10, %s400
      %p402 = scmp.lt.s32.totalorder %s22, 1
      %s403 = scalar_select %p402, %s22, 1
      %s404 = smul.addr %s403, 98
      %s405 = smul.addr %s404, 4
      %s406 = scalar_lea.vmem %s4, %s405
      %p407 = scmp.lt.s32.totalorder %s22, 1
      %s408 = scalar_select %p407, %s22, 1
      %s409 = smul.addr %s408, 2
      %s410 = smul.addr %s409, 4
      %s411 = scalar_lea.vmem %s5, %s410
      %p412 = scmp.lt.s32.totalorder %s22, 1
      %s413 = scalar_select %p412, %s22, 1
      %s414 = smul.addr %s413, 2
      %s415 = smul.addr %s414, 4
      %s416 = scalar_lea.vmem %s6, %s415
      %p417 = scmp.lt.s32.totalorder %s22, 1
      %s418 = scalar_select %p417, %s22, 1
      %s419 = smul.addr %s418, 2
      %s420 = smul.addr %s419, 4
      %s421 = scalar_lea.vmem %s7, %s420
      %p422 = scmp.lt.s32.totalorder %s22, 1
      %s423 = scalar_select %p422, %s22, 1
      %s424 = smul.addr %s423, 20
      %s425 = smul.addr %s424, 4
      %s426 = scalar_lea.vmem %s8, %s425
      %p427 = scmp.lt.s32.totalorder %s22, 1
      %s428 = scalar_select %p427, %s22, 1
      %s429 = smul.addr %s428, 20
      %s430 = smul.addr %s429, 4
      %s431 = scalar_lea.vmem %s9, %s430
      %p432 = scmp.lt.s32.totalorder %s22, 1
      %s433 = scalar_select %p432, %s22, 1
      %s434 = smul.addr %s433, 8
      %s435 = smul.addr %s434, 8
      %s436 = scalar_lea.vmem %s10, %s435
      %v438 = vld [vmem:[%s0] sm:$0xff]
      %v439 = vld [vmem:[%s0 + $0x8] sm:$0xff]
      %v440 = vld [vmem:[%s0 + $0x10] sm:$0xff]
      %v441 = vld [vmem:[%s0 + $0x18] sm:$0xff]
      %v442 = vld [vmem:[%s0 + $0x20] sm:$0xff]
      %v443 = vld [vmem:[%s0 + $0x28] sm:$0xff]
      %v444 = vld [vmem:[%s0 + $0x30] sm:$0x33]
      %v445 = vld [vmem:[%s0 + $0x38] sm:$0x33]
      %v446 = vld [vmem:[%s406] sm:$0xff]
      %v447 = vld [vmem:[%s406 + $0x8] sm:$0xff]
      %v448 = vld [vmem:[%s406 + $0x10] sm:$0xff]
      %v449 = vld [vmem:[%s406 + $0x18] sm:$0xff]
      %v450 = vld [vmem:[%s406 + $0x20] sm:$0xff]
      %v451 = vld [vmem:[%s406 + $0x28] sm:$0xff]
      %v452 = vld [vmem:[%s406 + $0x30] sm:$0xff]
      %v453 = vld [vmem:[%s406 + $0x38] sm:$0xff]
      %v454 = vld [vmem:[%s406 + $0x40] sm:$0xff]
      %v455 = vld [vmem:[%s406 + $0x48] sm:$0xff]
      %v456 = vld [vmem:[%s406 + $0x50] sm:$0xff]
      %v457 = vld [vmem:[%s406 + $0x58] sm:$0xff]
      %v458 = vld [vmem:[%s406 + $0x60] sm:$0xff]
      %v459 = vld [vmem:[%s406 + $0x68] sm:$0xff]
      %v460 = vld [vmem:[%s406 + $0x70] sm:$0xff]
      %v461 = vld [vmem:[%s406 + $0x78] sm:$0xff]
      %v462 = vld [vmem:[%s406 + $0x80] sm:$0xff]
      %v463 = vld [vmem:[%s406 + $0x88] sm:$0xff]
      %v464 = vld [vmem:[%s406 + $0x90] sm:$0xff]
      %v465 = vld [vmem:[%s406 + $0x98] sm:$0xff]
      %v466 = vld [vmem:[%s406 + $0xa0] sm:$0xff]
      %v467 = vld [vmem:[%s406 + $0xa8] sm:$0xff]
      %v468 = vld [vmem:[%s406 + $0xb0] sm:$0xff]
      %v469 = vld [vmem:[%s406 + $0xb8] sm:$0xff]
      %v470 = vld [vmem:[%s406 + $0xc0] sm:$0xff]
      %v471 = vld [vmem:[%s406 + $0xc8] sm:$0xff]
      %v472 = vld [vmem:[%s406 + $0xd0] sm:$0xff]
      %v473 = vld [vmem:[%s406 + $0xd8] sm:$0xff]
      %v474 = vld [vmem:[%s406 + $0xe0] sm:$0xff]
      %v475 = vld [vmem:[%s406 + $0xe8] sm:$0xff]
      %v476 = vld [vmem:[%s406 + $0xf0] sm:$0xff]
      %v477 = vld [vmem:[%s406 + $0xf8] sm:$0xff]
      %v478 = vld [vmem:[%s406 + $0x100] sm:$0xff]
      %v479 = vld [vmem:[%s406 + $0x108] sm:$0xff]
      %v480 = vld [vmem:[%s406 + $0x110] sm:$0xff]
      %v481 = vld [vmem:[%s406 + $0x118] sm:$0xff]
      %v482 = vld [vmem:[%s406 + $0x120] sm:$0xff]
      %v483 = vld [vmem:[%s406 + $0x128] sm:$0xff]
      %v484 = vld [vmem:[%s406 + $0x130] sm:$0xff]
      %v485 = vld [vmem:[%s406 + $0x138] sm:$0xff]
      %v486 = vld [vmem:[%s406 + $0x140] sm:$0xff]
      %v487 = vld [vmem:[%s406 + $0x148] sm:$0xff]
      %v488 = vld [vmem:[%s406 + $0x150] sm:$0xff]
      %v489 = vld [vmem:[%s406 + $0x158] sm:$0xff]
      %v490 = vld [vmem:[%s406 + $0x160] sm:$0xff]
      %v491 = vld [vmem:[%s406 + $0x168] sm:$0xff]
      %v492 = vld [vmem:[%s406 + $0x170] sm:$0xff]
      %v493 = vld [vmem:[%s406 + $0x178] sm:$0xff]
      %v494 = vld [vmem:[%s406 + $0x180] sm:$0xff]
      %v495 = vld [vmem:[%s1] sm:$0xff]
      %v496 = vld [vmem:[%s1 + $0x8] sm:$0xff]
      %v497 = vld [vmem:[%s1 + $0x10] sm:$0xff]
      %v498 = vld [vmem:[%s1 + $0x18] sm:$0x7]
      %500 = vset.pattern.permute.xlu0 0
      %501 = vperm.xlu0 %500, %v495
      %v502 = vpop.permute.xlu0 %501
      %505 = vset.pattern.permute.xlu0 0
      %506 = vperm.xlu0 %505, %v496
      %v507 = vpop.permute.xlu0 %506
      %510 = vset.pattern.permute.xlu0 0
      %511 = vperm.xlu0 %510, %v497
      %v512 = vpop.permute.xlu0 %511
      %515 = vset.pattern.permute.xlu0 0
      %516 = vperm.xlu0 %515, %v498
      %v517 = vpop.permute.xlu0 %516
      %v527 = vunpack.c.l.b16 %v438
      %v528 = vunpack.c.h.b16 %v438
      %v529 = vunpack.c.l.b16 %v439
      %v530 = vunpack.c.h.b16 %v439
      %v531 = vunpack.c.l.b16 %v440
      %v532 = vunpack.c.h.b16 %v440
      %v533 = vunpack.c.l.b16 %v441
      %v534 = vunpack.c.h.b16 %v441
      %v535 = vunpack.c.l.b16 %v442
      %v536 = vunpack.c.h.b16 %v442
      %v537 = vunpack.c.l.b16 %v443
      %v538 = vunpack.c.h.b16 %v443
      %v539 = vunpack.c.l.b16 %v444
      %v540 = vunpack.c.h.b16 %v444
      %v541 = vunpack.c.l.b16 %v445
      %v542 = vunpack.c.h.b16 %v445
      %v543 = vpack.c.b16 %v531, %v527
      %v544 = vpack.c.b16 %v532, %v528
      %v545 = vpack.c.b16 %v533, %v529
      %v546 = vpack.c.b16 %v534, %v530
      %v547 = vpack.c.b16 %v539, %v535
      %v548 = vpack.c.b16 %v540, %v536
      %v549 = vpack.c.b16 %v541, %v537
      %v550 = vpack.c.b16 %v542, %v538
      %v606 = vunpack.c.l.b16 %v446
      %v607 = vunpack.c.h.b16 %v446
      %v608 = vunpack.c.l.b16 %v447
      %v609 = vunpack.c.h.b16 %v447
      %v610 = vunpack.c.l.b16 %v448
      %v611 = vunpack.c.h.b16 %v448
      %v612 = vunpack.c.l.b16 %v449
      %v613 = vunpack.c.h.b16 %v449
      %v614 = vunpack.c.l.b16 %v450
      %v615 = vunpack.c.h.b16 %v450
      %v616 = vunpack.c.l.b16 %v451
      %v617 = vunpack.c.h.b16 %v451
      %v618 = vunpack.c.l.b16 %v452
      %v619 = vunpack.c.h.b16 %v452
      %v620 = vunpack.c.l.b16 %v453
      %v621 = vunpack.c.h.b16 %v453
      %v622 = vunpack.c.l.b16 %v454
      %v623 = vunpack.c.h.b16 %v454
      %v624 = vunpack.c.l.b16 %v455
      %v625 = vunpack.c.h.b16 %v455
      %v626 = vunpack.c.l.b16 %v456
      %v627 = vunpack.c.h.b16 %v456
      %v628 = vunpack.c.l.b16 %v457
      %v629 = vunpack.c.h.b16 %v457
      %v630 = vunpack.c.l.b16 %v458
      %v631 = vunpack.c.h.b16 %v458
      %v632 = vunpack.c.l.b16 %v459
      %v633 = vunpack.c.h.b16 %v459
      %v634 = vunpack.c.l.b16 %v460
      %v635 = vunpack.c.h.b16 %v460
      %v636 = vunpack.c.l.b16 %v461
      %v637 = vunpack.c.h.b16 %v461
      %v638 = vunpack.c.l.b16 %v462
      %v639 = vunpack.c.h.b16 %v462
      %v640 = vunpack.c.l.b16 %v463
      %v641 = vunpack.c.h.b16 %v463
      %v642 = vunpack.c.l.b16 %v464
      %v643 = vunpack.c.h.b16 %v464
      %v644 = vunpack.c.l.b16 %v465
      %v645 = vunpack.c.h.b16 %v465
      %v646 = vunpack.c.l.b16 %v466
      %v647 = vunpack.c.h.b16 %v466
      %v648 = vunpack.c.l.b16 %v467
      %v649 = vunpack.c.h.b16 %v467
      %v650 = vunpack.c.l.b16 %v468
      %v651 = vunpack.c.h.b16 %v468
      %v652 = vunpack.c.l.b16 %v469
      %v653 = vunpack.c.h.b16 %v469
      %v654 = vunpack.c.l.b16 %v470
      %v655 = vunpack.c.h.b16 %v470
      %v656 = vunpack.c.l.b16 %v471
      %v657 = vunpack.c.h.b16 %v471
      %v658 = vunpack.c.l.b16 %v472
      %v659 = vunpack.c.h.b16 %v472
      %v660 = vunpack.c.l.b16 %v473
      %v661 = vunpack.c.h.b16 %v473
      %v662 = vunpack.c.l.b16 %v474
      %v663 = vunpack.c.h.b16 %v474
      %v664 = vunpack.c.l.b16 %v475
      %v665 = vunpack.c.h.b16 %v475
      %v666 = vunpack.c.l.b16 %v476
      %v667 = vunpack.c.h.b16 %v476
      %v668 = vunpack.c.l.b16 %v477
      %v669 = vunpack.c.h.b16 %v477
      %v670 = vunpack.c.l.b16 %v478
      %v671 = vunpack.c.h.b16 %v478
      %v672 = vunpack.c.l.b16 %v479
      %v673 = vunpack.c.h.b16 %v479
      %v674 = vunpack.c.l.b16 %v480
      %v675 = vunpack.c.h.b16 %v480
      %v676 = vunpack.c.l.b16 %v481
      %v677 = vunpack.c.h.b16 %v481
      %v678 = vunpack.c.l.b16 %v482
      %v679 = vunpack.c.h.b16 %v482
      %v680 = vunpack.c.l.b16 %v483
      %v681 = vunpack.c.h.b16 %v483
      %v682 = vunpack.c.l.b16 %v484
      %v683 = vunpack.c.h.b16 %v484
      %v684 = vunpack.c.l.b16 %v485
      %v685 = vunpack.c.h.b16 %v485
      %v686 = vunpack.c.l.b16 %v486
      %v687 = vunpack.c.h.b16 %v486
      %v688 = vunpack.c.l.b16 %v487
      %v689 = vunpack.c.h.b16 %v487
      %v690 = vunpack.c.l.b16 %v488
      %v691 = vunpack.c.h.b16 %v488
      %v692 = vunpack.c.l.b16 %v489
      %v693 = vunpack.c.h.b16 %v489
      %v694 = vunpack.c.l.b16 %v490
      %v695 = vunpack.c.h.b16 %v490
      %v696 = vunpack.c.l.b16 %v491
      %v697 = vunpack.c.h.b16 %v491
      %v698 = vunpack.c.l.b16 %v492
      %v699 = vunpack.c.h.b16 %v492
      %v700 = vunpack.c.l.b16 %v493
      %v701 = vunpack.c.h.b16 %v493
      %v702 = vunpack.c.l.b16 %v494
      %v703 = vunpack.c.h.b16 %v494
      %v704 = vpack.c.b16 %v608, %v606
      %v705 = vpack.c.b16 %v609, %v607
      %v706 = vpack.c.b16 %v612, %v610
      %v707 = vpack.c.b16 %v613, %v611
      %v708 = vpack.c.b16 %v616, %v614
      %v709 = vpack.c.b16 %v617, %v615
      %v710 = vpack.c.b16 %v620, %v618
      %v711 = vpack.c.b16 %v621, %v619
      %v712 = vpack.c.b16 %v624, %v622
      %v713 = vpack.c.b16 %v625, %v623
      %v714 = vpack.c.b16 %v628, %v626
      %v715 = vpack.c.b16 %v629, %v627
      %v716 = vpack.c.b16 %v632, %v630
      %v717 = vpack.c.b16 %v633, %v631
      %v718 = vpack.c.b16 %v636, %v634
      %v719 = vpack.c.b16 %v637, %v635
      %v720 = vpack.c.b16 %v640, %v638
      %v721 = vpack.c.b16 %v641, %v639
      %v722 = vpack.c.b16 %v644, %v642
      %v723 = vpack.c.b16 %v645, %v643
      %v724 = vpack.c.b16 %v648, %v646
      %v725 = vpack.c.b16 %v649, %v647
      %v726 = vpack.c.b16 %v652, %v650
      %v727 = vpack.c.b16 %v653, %v651
      %v728 = vpack.c.b16 %v656, %v654
      %v729 = vpack.c.b16 %v657, %v655
      %v730 = vpack.c.b16 %v660, %v658
      %v731 = vpack.c.b16 %v661, %v659
      %v732 = vpack.c.b16 %v664, %v662
      %v733 = vpack.c.b16 %v665, %v663
      %v734 = vpack.c.b16 %v668, %v666
      %v735 = vpack.c.b16 %v669, %v667
      %v736 = vpack.c.b16 %v672, %v670
      %v737 = vpack.c.b16 %v673, %v671
      %v738 = vpack.c.b16 %v676, %v674
      %v739 = vpack.c.b16 %v677, %v675
      %v740 = vpack.c.b16 %v680, %v678
      %v741 = vpack.c.b16 %v681, %v679
      %v742 = vpack.c.b16 %v684, %v682
      %v743 = vpack.c.b16 %v685, %v683
      %v744 = vpack.c.b16 %v688, %v686
      %v745 = vpack.c.b16 %v689, %v687
      %v746 = vpack.c.b16 %v692, %v690
      %v747 = vpack.c.b16 %v693, %v691
      %v748 = vpack.c.b16 %v696, %v694
      %v749 = vpack.c.b16 %v697, %v695
      %v750 = vpack.c.b16 %v700, %v698
      %v751 = vpack.c.b16 %v701, %v699
      %v752 = vpack.c.b16 %v702, %v702
      %v753 = vpack.c.b16 %v703, %v703
      %vm802 = vcmask 64512
      %v804 = vsel %vm802, %v546, 0
      %v807 = vsel %vm802, %v550, 0
      %vm809 = vcmask 1043456
      %v811 = vsel %vm809, %v752, 0
      %v814 = vsel %vm809, %v753, 0
      %816 = vmatpush.bf16.msra.mxu0 %v718
      %817 = vmatpush.bf16.msra.mxu0 %v716
      %818 = vmatpush.bf16.msra.mxu0 %v714
      %819 = vmatpush.bf16.msra.mxu0 %v712
      %820 = vmatpush.bf16.msra.mxu0 %v710
      %821 = vmatpush.bf16.msra.mxu0 %v708
      %822 = vmatpush.bf16.msra.mxu0 %v706
      %823 = vmatpush.bf16.msra.mxu0 %v704
      %824 = vmatmul.bf16.gmra.mxu0 %v543
      %v825 = vpop.f32.mrf.mxu0
      %v826 = vadd.f32 %v502, %v825
      %v827 = vpop.f32.mrf.mxu0
      %v828 = vadd.f32 %v507, %v827
      %829 = vmatmul.bf16.gmra.mxu0 %v547
      %v830 = vpop.f32.mrf.mxu0
      %v831 = vadd.f32 %v512, %v830
      %v832 = vpop.f32.mrf.mxu0
      %v833 = vadd.f32 %v517, %v832
      %834 = vdwg.mxu0
      %835 = vmatpush.bf16.msra.mxu0 %v734
      %836 = vmatpush.bf16.msra.mxu0 %v732
      %837 = vmatpush.bf16.msra.mxu0 %v730
      %838 = vmatpush.bf16.msra.mxu0 %v728
      %839 = vmatpush.bf16.msra.mxu0 %v726
      %840 = vmatpush.bf16.msra.mxu0 %v724
      %841 = vmatpush.bf16.msra.mxu0 %v722
      %842 = vmatpush.bf16.msra.mxu0 %v720
      %843 = vmatmul.bf16.gmra.mxu0 %v544
      %v844 = vpop.f32.mrf.mxu0
      %v845 = vadd.f32 %v826, %v844
      %v846 = vpop.f32.mrf.mxu0
      %v847 = vadd.f32 %v828, %v846
      %848 = vmatmul.bf16.gmra.mxu0 %v548
      %v849 = vpop.f32.mrf.mxu0
      %v850 = vadd.f32 %v831, %v849
      %v851 = vpop.f32.mrf.mxu0
      %v852 = vadd.f32 %v833, %v851
      %853 = vdwg.mxu0
      %854 = vmatpush.bf16.msra.mxu0 %v750
      %855 = vmatpush.bf16.msra.mxu0 %v748
      %856 = vmatpush.bf16.msra.mxu0 %v746
      %857 = vmatpush.bf16.msra.mxu0 %v744
      %858 = vmatpush.bf16.msra.mxu0 %v742
      %859 = vmatpush.bf16.msra.mxu0 %v740
      %860 = vmatpush.bf16.msra.mxu0 %v738
      %861 = vmatpush.bf16.msra.mxu0 %v736
      %862 = vmatmul.bf16.gmra.mxu0 %v545
      %v863 = vpop.f32.mrf.mxu0
      %v864 = vadd.f32 %v845, %v863
      %v865 = vpop.f32.mrf.mxu0
      %v866 = vadd.f32 %v847, %v865
      %867 = vmatmul.bf16.gmra.mxu0 %v549
      %v868 = vpop.f32.mrf.mxu0
      %v869 = vadd.f32 %v850, %v868
      %v870 = vpop.f32.mrf.mxu0
      %v871 = vadd.f32 %v852, %v870
      %872 = vdwg.mxu0
      %873 = vmatpush.bf16.msra.mxu0 0
      %874 = vmatpush.bf16.msra.mxu0 0
      %875 = vmatpush.bf16.msra.mxu0 0
      %876 = vmatpush.bf16.msra.mxu0 0
      %877 = vmatpush.bf16.msra.mxu0 0
      %878 = vmatpush.bf16.msra.mxu0 0
      %879 = vmatpush.bf16.msra.mxu0 0
      %880 = vmatpush.bf16.msra.mxu0 %v811
      %881 = vmatmul.bf16.gmra.mxu0 %v804
      %v882 = vpop.f32.mrf.mxu0
      %v883 = vadd.f32 %v864, %v882
      %v884 = vpop.f32.mrf.mxu0
      %v885 = vadd.f32 %v866, %v884
      %886 = vmatmul.bf16.gmra.mxu0 %v807
      %v887 = vpop.f32.mrf.mxu0
      %v888 = vadd.f32 %v869, %v887
      %v889 = vpop.f32.mrf.mxu0
      %v890 = vadd.f32 %v871, %v889
      %891 = vdwg.mxu0
      %892 = vmatpush.bf16.msra.mxu0 %v719
      %893 = vmatpush.bf16.msra.mxu0 %v717
      %894 = vmatpush.bf16.msra.mxu0 %v715
      %895 = vmatpush.bf16.msra.mxu0 %v713
      %896 = vmatpush.bf16.msra.mxu0 %v711
      %897 = vmatpush.bf16.msra.mxu0 %v709
      %898 = vmatpush.bf16.msra.mxu0 %v707
      %899 = vmatpush.bf16.msra.mxu0 %v705
      %900 = vmatmul.bf16.gmra.mxu0 %v543
      %v901 = vpop.f32.mrf.mxu0
      %v902 = vadd.f32 %v502, %v901
      %v903 = vpop.f32.mrf.mxu0
      %v904 = vadd.f32 %v507, %v903
      %905 = vmatmul.bf16.gmra.mxu0 %v547
      %v906 = vpop.f32.mrf.mxu0
      %v907 = vadd.f32 %v512, %v906
      %v908 = vpop.f32.mrf.mxu0
      %v909 = vadd.f32 %v517, %v908
      %910 = vdwg.mxu0
      %911 = vmatpush.bf16.msra.mxu0 %v735
      %912 = vmatpush.bf16.msra.mxu0 %v733
      %913 = vmatpush.bf16.msra.mxu0 %v731
      %914 = vmatpush.bf16.msra.mxu0 %v729
      %915 = vmatpush.bf16.msra.mxu0 %v727
      %916 = vmatpush.bf16.msra.mxu0 %v725
      %917 = vmatpush.bf16.msra.mxu0 %v723
      %918 = vmatpush.bf16.msra.mxu0 %v721
      %919 = vmatmul.bf16.gmra.mxu0 %v544
      %v920 = vpop.f32.mrf.mxu0
      %v921 = vadd.f32 %v902, %v920
      %v922 = vpop.f32.mrf.mxu0
      %v923 = vadd.f32 %v904, %v922
      %924 = vmatmul.bf16.gmra.mxu0 %v548
      %v925 = vpop.f32.mrf.mxu0
      %v926 = vadd.f32 %v907, %v925
      %v927 = vpop.f32.mrf.mxu0
      %v928 = vadd.f32 %v909, %v927
      %929 = vdwg.mxu0
      %930 = vmatpush.bf16.msra.mxu0 %v751
      %931 = vmatpush.bf16.msra.mxu0 %v749
      %932 = vmatpush.bf16.msra.mxu0 %v747
      %933 = vmatpush.bf16.msra.mxu0 %v745
      %934 = vmatpush.bf16.msra.mxu0 %v743
      %935 = vmatpush.bf16.msra.mxu0 %v741
      %936 = vmatpush.bf16.msra.mxu0 %v739
      %937 = vmatpush.bf16.msra.mxu0 %v737
      %938 = vmatmul.bf16.gmra.mxu0 %v545
      %v939 = vpop.f32.mrf.mxu0
      %v940 = vadd.f32 %v921, %v939
      %v941 = vpop.f32.mrf.mxu0
      %v942 = vadd.f32 %v923, %v941
      %943 = vmatmul.bf16.gmra.mxu0 %v549
      %v944 = vpop.f32.mrf.mxu0
      %v945 = vadd.f32 %v926, %v944
      %v946 = vpop.f32.mrf.mxu0
      %v947 = vadd.f32 %v928, %v946
      %948 = vdwg.mxu0
      %949 = vmatpush.bf16.msra.mxu0 0
      %950 = vmatpush.bf16.msra.mxu0 0
      %951 = vmatpush.bf16.msra.mxu0 0
      %952 = vmatpush.bf16.msra.mxu0 0
      %953 = vmatpush.bf16.msra.mxu0 0
      %954 = vmatpush.bf16.msra.mxu0 0
      %955 = vmatpush.bf16.msra.mxu0 0
      %956 = vmatpush.bf16.msra.mxu0 %v814
      %957 = vmatmul.bf16.gmra.mxu0 %v804
      %v958 = vpop.f32.mrf.mxu0
      %v959 = vadd.f32 %v940, %v958
      %v960 = vpop.f32.mrf.mxu0
      %v961 = vadd.f32 %v942, %v960
      %962 = vmatmul.bf16.gmra.mxu0 %v807
      %v963 = vpop.f32.mrf.mxu0
      %v964 = vadd.f32 %v945, %v963
      %v965 = vpop.f32.mrf.mxu0
      %v966 = vadd.f32 %v947, %v965
      %967 = vdwg.mxu0
      %v968 = vtanh.pop %v883
      %v969 = vtanh.pop %v959
      %v970 = vtanh.pop %v885
      %v971 = vtanh.pop %v961
      %v972 = vtanh.pop %v888
      %v973 = vtanh.pop %v964
      %v974 = vtanh.pop %v890
      %v975 = vtanh.pop %v966
      %v976 = vld [vmem:[%s2] sm:$0xf]
      %v977 = vld [vmem:[%s2 + $0x4] sm:$0x1]
      %v978 = vld [vmem:[%s411] sm:$0xff]
      %v979 = vld [vmem:[%s3] sm:$0xff]
      %v980 = vld [vmem:[%s3 + $0x8] sm:$0x3]
      %982 = vset.pattern.permute.xlu0 0
      %983 = vperm.xlu0 %982, %v979
      %v984 = vpop.permute.xlu0 %983
      %987 = vset.pattern.permute.xlu0 0
      %988 = vperm.xlu0 %987, %v980
      %v989 = vpop.permute.xlu0 %988
      %v993 = vunpack.c.l.b16 %v976
      %v994 = vunpack.c.l.b16 %v977
      %v995 = vpack.c.b16 %v994, %v993
      %v997 = vunpack.c.l.b16 %v978
      %v998 = vunpack.c.h.b16 %v978
      %v999 = vpack.c.b16 %v997, %v997
      %v1000 = vpack.c.b16 %v998, %v998
      %v1002 = vsel %vm802, %v995, 0
      %v1005 = vsel %vm809, %v999, 0
      %v1008 = vsel %vm809, %v1000, 0
      %1010 = vmatpush.bf16.msra.mxu0 0
      %1011 = vmatpush.bf16.msra.mxu0 0
      %1012 = vmatpush.bf16.msra.mxu0 0
      %1013 = vmatpush.bf16.msra.mxu0 0
      %1014 = vmatpush.bf16.msra.mxu0 0
      %1015 = vmatpush.bf16.msra.mxu0 0
      %1016 = vmatpush.bf16.msra.mxu0 0
      %1017 = vmatpush.bf16.msra.mxu0 %v1005
      %1018 = vmatmul.bf16.gmra.mxu0 %v1002
      %v1019 = vpop.f32.mrf.mxu0
      %v1020 = vadd.f32 %v984, %v1019
      %v1021 = vpop.f32.mrf.mxu0
      %v1022 = vadd.f32 %v989, %v1021
      %1023 = vdwg.mxu0
      %1024 = vmatpush.bf16.msra.mxu0 0
      %1025 = vmatpush.bf16.msra.mxu0 0
      %1026 = vmatpush.bf16.msra.mxu0 0
      %1027 = vmatpush.bf16.msra.mxu0 0
      %1028 = vmatpush.bf16.msra.mxu0 0
      %1029 = vmatpush.bf16.msra.mxu0 0
      %1030 = vmatpush.bf16.msra.mxu0 0
      %1031 = vmatpush.bf16.msra.mxu0 %v1008
      %1032 = vmatmul.bf16.gmra.mxu0 %v1002
      %v1033 = vpop.f32.mrf.mxu0
      %v1034 = vadd.f32 %v984, %v1033
      %v1035 = vpop.f32.mrf.mxu0
      %v1036 = vadd.f32 %v989, %v1035
      %1037 = vdwg.mxu0
      %vm1038 = vcmask 1041408
      %v1039 = vsel %vm1038, %v1022, -inf
      %v1040 = vmax.f32 %v1020, %v1039
      %v1041 = vrot.slane %v1040, 4
      %v1042 = vmax.f32 %v1040, %v1041
      %v1043 = vrot.slane %v1042, 2
      %v1044 = vmax.f32 %v1042, %v1043
      %v1045 = vrot.slane %v1044, 1
      %v1046 = vmax.f32 %v1044, %v1045
      %v1047 = vsel %vm1038, %v1036, -inf
      %v1048 = vmax.f32 %v1034, %v1047
      %v1049 = vrot.slane %v1048, 4
      %v1050 = vmax.f32 %v1048, %v1049
      %v1051 = vrot.slane %v1050, 2
      %v1052 = vmax.f32 %v1050, %v1051
      %v1053 = vrot.slane %v1052, 1
      %v1054 = vmax.f32 %v1052, %v1053
      %v1055 = vsub.f32 %v1020, %v1046
      %v1056 = vsub.f32 %v1034, %v1054
      %v1057 = vsub.f32 %v1022, %v1046
      %v1058 = vsub.f32 %v1036, %v1054
      %v1059 = vmul.f32 %v1055, 1.442695
      %v1060 = vpow.pop %v1059
      %v1061 = vmul.f32 %v1056, 1.442695
      %v1062 = vpow.pop %v1061
      %v1063 = vmul.f32 %v1057, 1.442695
      %v1064 = vpow.pop %v1063
      %v1065 = vmul.f32 %v1058, 1.442695
      %v1066 = vpow.pop %v1065
      %v1067 = vsel %vm1038, %v1064, 0.0
      %v1068 = vadd.f32 %v1060, %v1067
      %v1069 = vrot.slane %v1068, 4
      %v1070 = vadd.f32 %v1068, %v1069
      %v1071 = vrot.slane %v1070, 2
      %v1072 = vadd.f32 %v1070, %v1071
      %v1073 = vrot.slane %v1072, 1
      %v1074 = vadd.f32 %v1072, %v1073
      %v1075 = vsel %vm1038, %v1066, 0.0
      %v1076 = vadd.f32 %v1062, %v1075
      %v1077 = vrot.slane %v1076, 4
      %v1078 = vadd.f32 %v1076, %v1077
      %v1079 = vrot.slane %v1078, 2
      %v1080 = vadd.f32 %v1078, %v1079
      %v1081 = vrot.slane %v1080, 1
      %v1082 = vadd.f32 %v1080, %v1081
      %v1083 = vrcp.pop %v1074
      %v1084 = vmul.f32 %v1074, %v1083
      %v1085 = vsub.f32 1.0, %v1084
      %v1086 = vmul.f32 %v1083, %v1085
      %v1087 = vadd.f32 %v1083, %v1086
      %vm1088 = vweird.f32 %v1074
      %vm1089 = vweird.f32 %v1083
      %vm1090 = vmor %vm1088, %vm1089
      %v1091 = vsel %vm1090, %v1083, %v1087
      %v1092 = vand.u32 2147483647, %v1074
      %vm1093 = vcmp.eq.f32.partialorder %v1092, 8.507059e+37
      %v1094 = vand.u32 %v1074, 2147483648
      %v1095 = vor.u32 1.1754944e-38, %v1094
      %v1096 = vsel %vm1093, %v1095, %v1091
      %v1097 = vmul.f32 %v1060, %v1096
      %v1098 = vrcp.pop %v1082
      %v1099 = vmul.f32 %v1082, %v1098
      %v1100 = vsub.f32 1.0, %v1099
      %v1101 = vmul.f32 %v1098, %v1100
      %v1102 = vadd.f32 %v1098, %v1101
      %vm1103 = vweird.f32 %v1082
      %vm1104 = vweird.f32 %v1098
      %vm1105 = vmor %vm1103, %vm1104
      %v1106 = vsel %vm1105, %v1098, %v1102
      %v1107 = vand.u32 2147483647, %v1082
      %vm1108 = vcmp.eq.f32.partialorder %v1107, 8.507059e+37
      %v1109 = vand.u32 %v1082, 2147483648
      %v1110 = vor.u32 1.1754944e-38, %v1109
      %v1111 = vsel %vm1108, %v1110, %v1106
      %v1112 = vmul.f32 %v1062, %v1111
      %v1113 = vmul.f32 %v1064, %v1096
      %v1114 = vmul.f32 %v1066, %v1111
      %v1115 = vld [vmem:[%s416] sm:$0x77]
      %v1116 = vperm.slane %v1113, 1
      %v1117 = vperm.slane %v1114, 1
      %v1120 = vrot.slane %v1117, 4
      %v1121 = vsel %vm809, %v1116, %v1120
      %v1123 = vmul.f32 %v1115, %v1121
      %s1124 = scalar_lea.vmem %s426, 72
      %1125 = vst [vmem:[%s1124] sm:$0x77] %v1123
      %s1126 = scalar_lea.vmem %s431, 72
      %1127 = vst [vmem:[%s1126] sm:$0x77] %v1121
      %v1128 = vperm.slane %v1097, 0
      %v1129 = vperm.slane %v1112, 0
      %v1130 = vmul.f32 %v968, %v1128
      %v1131 = vmul.f32 %v969, %v1129
      %v1134 = vrot.slane %v1131, 4
      %v1135 = vsel %vm809, %v1130, %v1134
      %1137 = vst [vmem:[%s426] sm:$0x77] %v1135
      %v1140 = vrot.slane %v1129, 4
      %v1141 = vsel %vm809, %v1128, %v1140
      %1143 = vst [vmem:[%s431] sm:$0x77] %v1141
      %v1144 = vadd.f32 %v1123, %v1135
      %v1145 = vperm.slane %v1097, 1
      %v1146 = vperm.slane %v1112, 1
      %v1147 = vmul.f32 %v968, %v1145
      %v1148 = vmul.f32 %v969, %v1146
      %v1151 = vrot.slane %v1148, 4
      %v1152 = vsel %vm809, %v1147, %v1151
      %v1153 = vsel %vm809, %v1151, %v1147
      %v1154 = vrot.slane %v1153, 4
      %vm1155 = vcmask 1040384
      %vm1156 = vcmask 1044484
      %vm1157 = vmor %vm1155, %vm1156
      %v1158 = vrot.slane %v1152, 7
      %v1159 = vrot.slane %v1158, 4
      %v1160 = vrot.slane %v1154, 7
      %v1161 = vsel %vm1157, %v1159, %v1160
      %s1163 = scalar_lea.vmem %s426, 8
      %1164 = vst [vmem:[%s1163] sm:$0x77] %v1161
      %v1167 = vrot.slane %v1146, 4
      %v1168 = vsel %vm809, %v1145, %v1167
      %s1170 = scalar_lea.vmem %s431, 8
      %1171 = vst [vmem:[%s1170] sm:$0x77] %v1168
      %v1172 = vadd.f32 %v1144, %v1161
      %v1173 = vperm.slane %v1097, 2
      %v1174 = vperm.slane %v1112, 2
      %v1175 = vmul.f32 %v968, %v1173
      %v1176 = vmul.f32 %v969, %v1174
      %v1177 = vmul.f32 %v970, %v1173
      %v1178 = vmul.f32 %v971, %v1174
      %1183 = vst.sshfl [vmem:[#allocation1] sm:$0xff pattern:$0x75316420] %v1175
      %1184 = vst.sshfl [vmem:[#allocation1 + $0x8] sm:$0xff pattern:$0x75316420] %v1176
      %1185 = vst.sshfl [vmem:[#allocation1 + $0x10] sm:$0xff pattern:$0x75316420] %v1177
      %1186 = vst.sshfl [vmem:[#allocation1 + $0x18] sm:$0xff pattern:$0x75316420] %v1178
      %s1187 = scalar_lea.vmem [#allocation1], 1
      %v1188 = vld [vmem:[%s1187] ss:$2 sm:$0xff]
      %s1189 = scalar_lea.vmem [#allocation1], 16
      %v1190 = vld [vmem:[%s1189] ss:$2 sm:$0xff]
      %vm1191 = vcmask 1045508
      %vm1192 = vmor %vm1038, %vm1191
      %v1193 = vrot.slane %v1188, 6
      %v1194 = vrot.slane %v1193, 4
      %v1195 = vrot.slane %v1190, 6
      %v1196 = vsel %vm1192, %v1194, %v1195
      %s1198 = scalar_lea.vmem %s426, 16
      %1199 = vst [vmem:[%s1198] sm:$0x77] %v1196
      %v1202 = vrot.slane %v1174, 4
      %v1203 = vsel %vm809, %v1173, %v1202
      %s1205 = scalar_lea.vmem %s431, 16
      %1206 = vst [vmem:[%s1205] sm:$0x77] %v1203
      %1207 = vst.sshfl [vmem:[#allocation1] sm:$0xff pattern:$0x75316420] %v1175
      %1208 = vst.sshfl [vmem:[#allocation1 + $0x8] sm:$0xff pattern:$0x75316420] %v1176
      %1209 = vst.sshfl [vmem:[#allocation1 + $0x10] sm:$0xff pattern:$0x75316420] %v1177
      %1210 = vst.sshfl [vmem:[#allocation1 + $0x18] sm:$0xff pattern:$0x75316420] %v1178
      %s1211 = scalar_lea.vmem [#allocation1], 1
      %v1212 = vld [vmem:[%s1211] ss:$2 sm:$0xff]
      %s1213 = scalar_lea.vmem [#allocation1], 16
      %v1214 = vld [vmem:[%s1213] ss:$2 sm:$0xff]
      %v1215 = vrot.slane %v1212, 6
      %v1216 = vrot.slane %v1215, 4
      %v1217 = vrot.slane %v1214, 6
      %v1218 = vsel %vm1192, %v1216, %v1217
      %v1220 = vadd.f32 %v1172, %v1218
      %v1221 = vperm.slane %v1097, 3
      %v1222 = vperm.slane %v1112, 3
      %v1223 = vmul.f32 %v970, %v1221
      %v1224 = vmul.f32 %v971, %v1222
      %v1227 = vrot.slane %v1224, 4
      %v1228 = vsel %vm809, %v1223, %v1227
      %v1229 = vrot.slane %v1228, 5
      %v1230 = vrot.slane %v1229, 4
      %s1232 = scalar_lea.vmem %s426, 24
      %1233 = vst [vmem:[%s1232] sm:$0x77] %v1230
      %v1236 = vrot.slane %v1222, 4
      %v1237 = vsel %vm809, %v1221, %v1236
      %s1239 = scalar_lea.vmem %s431, 24
      %1240 = vst [vmem:[%s1239] sm:$0x77] %v1237
      %v1241 = vadd.f32 %v1220, %v1230
      %v1242 = vperm.slane %v1097, 4
      %v1243 = vperm.slane %v1112, 4
      %v1244 = vmul.f32 %v970, %v1242
      %v1245 = vmul.f32 %v971, %v1243
      %1248 = vst.sshfl [vmem:[#allocation1] sm:$0xff pattern:$0x75316420] %v1244
      %1249 = vst.sshfl [vmem:[#allocation1 + $0x8] sm:$0xff pattern:$0x75316420] %v1245
      %s1250 = scalar_lea.vmem [#allocation1], 1
      %v1251 = vld [vmem:[%s1250] ss:$2 sm:$0xff]
      %s1253 = scalar_lea.vmem %s426, 32
      %1254 = vst [vmem:[%s1253] sm:$0x77] %v1251
      %v1257 = vrot.slane %v1243, 4
      %v1258 = vsel %vm809, %v1242, %v1257
      %s1260 = scalar_lea.vmem %s431, 32
      %1261 = vst [vmem:[%s1260] sm:$0x77] %v1258
      %1262 = vst.sshfl [vmem:[#allocation1] sm:$0xff pattern:$0x75316420] %v1244
      %1263 = vst.sshfl [vmem:[#allocation1 + $0x8] sm:$0xff pattern:$0x75316420] %v1245
      %s1264 = scalar_lea.vmem [#allocation1], 1
      %v1265 = vld [vmem:[%s1264] ss:$2 sm:$0xff]
      %v1267 = vadd.f32 %v1241, %v1265
      %v1268 = vperm.slane %v1097, 5
      %v1269 = vperm.slane %v1112, 5
      %v1270 = vmul.f32 %v970, %v1268
      %v1271 = vmul.f32 %v971, %v1269
      %v1272 = vmul.f32 %v972, %v1268
      %v1273 = vmul.f32 %v973, %v1269
      %1278 = vst.sshfl [vmem:[#allocation1] sm:$0xff pattern:$0x75316420] %v1270
      %1279 = vst.sshfl [vmem:[#allocation1 + $0x8] sm:$0xff pattern:$0x75316420] %v1271
      %1280 = vst.sshfl [vmem:[#allocation1 + $0x10] sm:$0xff pattern:$0x75316420] %v1272
      %1281 = vst.sshfl [vmem:[#allocation1 + $0x18] sm:$0xff pattern:$0x75316420] %v1273
      %s1282 = scalar_lea.vmem [#allocation1], 1
      %v1283 = vld [vmem:[%s1282] ss:$2 sm:$0xff]
      %s1284 = scalar_lea.vmem [#allocation1], 16
      %v1285 = vld [vmem:[%s1284] ss:$2 sm:$0xff]
      %v1286 = vrot.slane %v1283, 7
      %v1287 = vrot.slane %v1286, 4
      %v1288 = vrot.slane %v1285, 7
      %v1289 = vsel %vm1157, %v1287, %v1288
      %s1291 = scalar_lea.vmem %s426, 40
      %1292 = vst [vmem:[%s1291] sm:$0x77] %v1289
      %v1295 = vrot.slane %v1269, 4
      %v1296 = vsel %vm809, %v1268, %v1295
      %s1298 = scalar_lea.vmem %s431, 40
      %1299 = vst [vmem:[%s1298] sm:$0x77] %v1296
      %1300 = vst.sshfl [vmem:[#allocation1] sm:$0xff pattern:$0x75316420] %v1270
      %1301 = vst.sshfl [vmem:[#allocation1 + $0x8] sm:$0xff pattern:$0x75316420] %v1271
      %1302 = vst.sshfl [vmem:[#allocation1 + $0x10] sm:$0xff pattern:$0x75316420] %v1272
      %1303 = vst.sshfl [vmem:[#allocation1 + $0x18] sm:$0xff pattern:$0x75316420] %v1273
      %s1304 = scalar_lea.vmem [#allocation1], 1
      %v1305 = vld [vmem:[%s1304] ss:$2 sm:$0xff]
      %s1306 = scalar_lea.vmem [#allocation1], 16
      %v1307 = vld [vmem:[%s1306] ss:$2 sm:$0xff]
      %v1308 = vrot.slane %v1305, 7
      %v1309 = vrot.slane %v1308, 4
      %v1310 = vrot.slane %v1307, 7
      %v1311 = vsel %vm1157, %v1309, %v1310
      %v1313 = vadd.f32 %v1267, %v1311
      %v1314 = vperm.slane %v1097, 6
      %v1315 = vperm.slane %v1112, 6
      %v1316 = vmul.f32 %v972, %v1314
      %v1317 = vmul.f32 %v973, %v1315
      %v1320 = vrot.slane %v1317, 4
      %v1321 = vsel %vm809, %v1316, %v1320
      %v1322 = vsel %vm809, %v1320, %v1316
      %v1323 = vrot.slane %v1322, 4
      %v1324 = vrot.slane %v1321, 6
      %v1325 = vrot.slane %v1324, 4
      %v1326 = vrot.slane %v1323, 6
      %v1327 = vsel %vm1192, %v1325, %v1326
      %s1329 = scalar_lea.vmem %s426, 48
      %1330 = vst [vmem:[%s1329] sm:$0x77] %v1327
      %v1333 = vrot.slane %v1315, 4
      %v1334 = vsel %vm809, %v1314, %v1333
      %s1336 = scalar_lea.vmem %s431, 48
      %1337 = vst [vmem:[%s1336] sm:$0x77] %v1334
      %v1338 = vadd.f32 %v1313, %v1327
      %v1339 = vperm.slane %v1097, 7
      %v1340 = vperm.slane %v1112, 7
      %v1341 = vmul.f32 %v972, %v1339
      %v1342 = vmul.f32 %v973, %v1340
      %1345 = vst.sshfl [vmem:[#allocation1] sm:$0xff pattern:$0x75316420] %v1341
      %1346 = vst.sshfl [vmem:[#allocation1 + $0x8] sm:$0xff pattern:$0x75316420] %v1342
      %s1347 = scalar_lea.vmem [#allocation1], 1
      %v1348 = vld [vmem:[%s1347] ss:$2 sm:$0xff]
      %v1349 = vrot.slane %v1348, 5
      %v1350 = vrot.slane %v1349, 4
      %s1352 = scalar_lea.vmem %s426, 56
      %1353 = vst [vmem:[%s1352] sm:$0x77] %v1350
      %v1356 = vrot.slane %v1340, 4
      %v1357 = vsel %vm809, %v1339, %v1356
      %s1359 = scalar_lea.vmem %s431, 56
      %1360 = vst [vmem:[%s1359] sm:$0x77] %v1357
      %1361 = vst.sshfl [vmem:[#allocation1] sm:$0xff pattern:$0x75316420] %v1341
      %1362 = vst.sshfl [vmem:[#allocation1 + $0x8] sm:$0xff pattern:$0x75316420] %v1342
      %s1363 = scalar_lea.vmem [#allocation1], 1
      %v1364 = vld [vmem:[%s1363] ss:$2 sm:$0xff]
      %v1365 = vrot.slane %v1364, 5
      %v1366 = vrot.slane %v1365, 4
      %v1368 = vadd.f32 %v1338, %v1366
      %v1369 = vperm.slane %v1113, 0
      %v1370 = vperm.slane %v1114, 0
      %v1371 = vmul.f32 %v974, %v1369
      %v1372 = vmul.f32 %v975, %v1370
      %v1375 = vrot.slane %v1372, 4
      %v1376 = vsel %vm809, %v1371, %v1375
      %s1378 = scalar_lea.vmem %s426, 64
      %1379 = vst [vmem:[%s1378] sm:$0x77] %v1376
      %v1382 = vrot.slane %v1370, 4
      %v1383 = vsel %vm809, %v1369, %v1382
      %s1385 = scalar_lea.vmem %s431, 64
      %1386 = vst [vmem:[%s1385] sm:$0x77] %v1383
      %v1387 = vadd.f32 %v1368, %v1376
      %1388 = vst [vmem:[%s421] sm:$0x77] %v1387
      %1389 = vst [vmem:[%s436] sm:$0xff] %v968
      %1390 = vst [vmem:[%s436 + $0x8] sm:$0xff] %v969
      %1391 = vst [vmem:[%s436 + $0x10] sm:$0xff] %v970
      %1392 = vst [vmem:[%s436 + $0x18] sm:$0xff] %v971
      %1393 = vst [vmem:[%s436 + $0x20] sm:$0xff] %v972
      %1394 = vst [vmem:[%s436 + $0x28] sm:$0xff] %v973
      %1395 = vst [vmem:[%s436 + $0x30] sm:$0x7] %v974
      %1396 = vst [vmem:[%s436 + $0x38] sm:$0x7] %v975
      %p1397 = scmp.lt.s32.totalorder %s22, 1
      %s1398 = scalar_select %p1397, %s22, 1
      %s1399 = smul.addr %s1398, 2
      %s1400 = smul.addr %s1399, 4
      %s1401 = scalar_lea.vmem %s7, %s1400
      %p1402 = scmp.lt.s32.totalorder %s22, 1
      %s1403 = scalar_select %p1402, %s22, 1
      %s1404 = smul.addr %s1403, 20
      %s1405 = smul.addr %s1404, 4
      %s1406 = scalar_lea.vmem %s8, %s1405
      %p1407 = scmp.lt.s32.totalorder %s22, 1
      %s1408 = scalar_select %p1407, %s22, 1
      %s1409 = smul.addr %s1408, 20
      %s1410 = smul.addr %s1409, 4
      %s1411 = scalar_lea.vmem %s9, %s1410
      %p1412 = scmp.lt.s32.totalorder %s22, 1
      %s1413 = scalar_select %p1412, %s22, 1
      %s1414 = smul.addr %s1413, 8
      %s1415 = smul.addr %s1414, 8
      %s1416 = scalar_lea.vmem %s10, %s1415
      // Predicated region
      $region49: #{forward.19} parent=47 // pred_check
        %p1417 = pneg %p202
      $region50: #{forward.19} parent=47 // pred_check_branch
        %1419 = sbr.rel (%p1417) target = $region52
      $region51: #{forward.19} parent=47 // pred_region
        _
      $region52: #{forward.19} parent=47 // pred_fallthru
        _
      // Predicated region
      $region53: #{forward.19} parent=47 // pred_check
        %p1420 = pneg %p228
      $region54: #{forward.19} parent=47 // pred_check_branch
        %1422 = sbr.rel (%p1420) target = $region56
      $region55: #{forward.19} parent=47 // pred_region
        _
      $region56: #{forward.19} parent=47 // pred_fallthru
        _
      // Predicated region
      $region57: #{forward.19} parent=47 // pred_check
        %p1423 = pneg %p254
      $region58: #{forward.19} parent=47 // pred_check_branch
        %1425 = sbr.rel (%p1423) target = $region60
      $region59: #{forward.19} parent=47 // pred_region
        _
      $region60: #{forward.19} parent=47 // pred_fallthru
        _
      // Predicated region
      $region61: #{forward.19} parent=47 // pred_check
        %p1426 = pneg %p280
      $region62: #{forward.19} parent=47 // pred_check_branch
        %1428 = sbr.rel (%p1426) target = $region64
      $region63: #{forward.19} parent=47 // pred_region
        _
      $region64: #{forward.19} parent=47 // pred_fallthru
        _
    $region48: #{forward.19} parent=5 // pred_fallthru
      _
    %p1429 = scmp.le.s32.totalorder 2, %s17
    // Predicated region
    $region65: #{forward.19} parent=5 // pred_check
      %p1430 = pneg %p1429
    $region66: #{forward.19} parent=5 // pred_check_branch
      %1432 = sbr.rel (%p1430) target = $region68
    $region67: #{forward.19} parent=5 // pred_region
      %s1433 = ssub.s32 %s17, 2
      // Predicated region
      $region69: #{forward.19} parent=67 // pred_check
        %p1434 = pneg %p208
      $region70: #{forward.19} parent=67 // pred_check_branch
        %1436 = sbr.rel (%p1434) target = $region72
      $region71: #{forward.19} parent=67 // pred_region
        %p1437 = scmp.lt.s32.totalorder %s23, 1
        %s1438 = scalar_select %p1437, %s23, 1
        %s1439 = smul.addr %s1438, 2
        %s1440 = smul.addr %s1439, 4
        %s1441 = scalar_lea.vmem %s7, %s1440
      $region72: #{forward.19} parent=67 // pred_fallthru
        _
      // Predicated region
      $region73: #{forward.19} parent=67 // pred_check
        %p1442 = pneg %p234
      $region74: #{forward.19} parent=67 // pred_check_branch
        %1444 = sbr.rel (%p1442) target = $region76
      $region75: #{forward.19} parent=67 // pred_region
        %p1445 = scmp.lt.s32.totalorder %s23, 1
        %s1446 = scalar_select %p1445, %s23, 1
        %s1447 = smul.addr %s1446, 20
        %s1448 = smul.addr %s1447, 4
        %s1449 = scalar_lea.vmem %s8, %s1448
      $region76: #{forward.19} parent=67 // pred_fallthru
        _
      // Predicated region
      $region77: #{forward.19} parent=67 // pred_check
        %p1450 = pneg %p260
      $region78: #{forward.19} parent=67 // pred_check_branch
        %1452 = sbr.rel (%p1450) target = $region80
      $region79: #{forward.19} parent=67 // pred_region
        %p1453 = scmp.lt.s32.totalorder %s23, 1
        %s1454 = scalar_select %p1453, %s23, 1
        %s1455 = smul.addr %s1454, 20
        %s1456 = smul.addr %s1455, 4
        %s1457 = scalar_lea.vmem %s9, %s1456
      $region80: #{forward.19} parent=67 // pred_fallthru
        _
      // Predicated region
      $region81: #{forward.19} parent=67 // pred_check
        %p1458 = pneg %p286
      $region82: #{forward.19} parent=67 // pred_check_branch
        %1460 = sbr.rel (%p1458) target = $region84
      $region83: #{forward.19} parent=67 // pred_region
        %p1461 = scmp.lt.s32.totalorder %s23, 1
        %s1462 = scalar_select %p1461, %s23, 1
        %s1463 = smul.addr %s1462, 8
        %s1464 = smul.addr %s1463, 8
        %s1465 = scalar_lea.vmem %s10, %s1464
      $region84: #{forward.19} parent=67 // pred_fallthru
        _
    $region68: #{forward.19} parent=5 // pred_fallthru
      _
  $region6: #{forward.19} parent=0 // loop_footer
    %s21 = sadd.s32 1, %s17
  $region7: #{forward.19} parent=0 // loop_footer_branch
    %16 = sbr.rel target = $region3
  $region8: #{forward.19} parent=0 // loop_exit
    _

</llo_original>
